<compile_context>
chip_gen: v7x
topology: tpu7x:2x2x1
jax: 0.10.0
libtpu: 0.0.40
codegen_flags: <defaults>
</compile_context>

<pallas_src>
import math

import jax
import jax.numpy as jnp
from jax.experimental import pallas as pl
from jax.experimental.pallas import tpu as pltpu  # kept for parity; no TPU-specific scratch/DMA is needed

# ----------------------------- configuration -------------------------------
B = 2             # batch
T = 4             # n_frames (kept small)
C_IN = 3          # video channels
IMG = 16          # spatial H = W
K = 3             # conv kernel size
C_CONV = 16       # backbone conv channels
DIM_EMB = 32      # dim_embedding (attention embed_dim, backbone fc out)
DIM_MOVENET = 8   # movenet feature dim per frame
DIM_LSTM_IN = DIM_EMB + DIM_MOVENET
DIM_HID = 32      # dim_hidden (== DIM_EMB, required by attention kdim / fc input)
NUM_LAYERS = 1    # num_lstm_layers
F1 = 16           # dim_fc_layer_1
F2 = 16           # dim_fc_layer_2
N_CLASSES = 3
BN_EPS = 1e-5
LEAKY_SLOPE = 0.01

# ------------------------- packed-parameter layout ---------------------------
# Two bf16 buffers, each block starting at an 8-aligned row:
#   wide   (WIDE_ROWS, 256)  : fused BiLSTM weights (only these need 256 lanes)
#   narrow (NARROW_ROWS, 128): all other weights + one consolidated bias block
WIDE_W = 8 * DIM_HID          # 256
NARROW_W = 128

WIDE_SHAPES = [
    ("wih", DIM_LSTM_IN, 8 * DIM_HID),    # fused fwd+rev input projection
    ("whh", 2 * DIM_HID, 8 * DIM_HID),    # block-diagonal fused hh projection
    ("blstm", 1, 8 * DIM_HID),
]
NARROW_W_SHAPES = [
    ("wconv", K * K * C_IN, C_CONV),      # im2col conv weight
    ("wbfc", C_CONV, DIM_EMB),            # backbone fc
    ("wq", DIM_EMB, DIM_EMB),
    ("wk", DIM_HID, DIM_EMB),
    ("wv", DIM_HID, DIM_EMB),
    ("wo", DIM_EMB, DIM_EMB),
    ("w1", DIM_HID, F1),
    ("w2", F1, F2),
    ("w3f", F2, N_CLASSES),               # BatchNorm folded into w3/b3
]
BIAS_SHAPES = [                           # one row each inside a single 16-row block
    ("bconv", C_CONV), ("bbfc", DIM_EMB),
    ("bq", DIM_EMB), ("bk", DIM_EMB), ("bv", DIM_EMB), ("bo", DIM_EMB),
    ("b1", F1), ("b2", F2), ("b3f", N_CLASSES),
]


def _layout(shapes):
    offs, r = {}, 0
    for name, h, w in shapes:
        offs[name] = (r, h, w)
        r += ((h + 7) // 8) * 8            # 8-sublane-aligned blocks
    return offs, r


WIDE_OFFS, WIDE_ROWS = _layout(WIDE_SHAPES)            # 112 rows
NARROW_OFFS, _NW_ROWS = _layout(NARROW_W_SHAPES)       # 240 rows of weights
BIAS_ROW0 = _NW_ROWS                                   # bias block starts 8-aligned
BIAS_ROWS = 16
BIAS_ROW = {name: i for i, (name, _) in enumerate(BIAS_SHAPES)}
BIAS_WID = dict(BIAS_SHAPES)
NARROW_ROWS = BIAS_ROW0 + BIAS_ROWS                    # 256 rows


def pack_params(d):
    """Pack all parameters into (wide bf16, narrow bf16) buffers."""
    wide = jnp.zeros((WIDE_ROWS, WIDE_W), jnp.float32)
    for name, h, w in WIDE_SHAPES:
        r = WIDE_OFFS[name][0]
        wide = wide.at[r:r + h, 0:w].set(jnp.asarray(d[name], jnp.float32).reshape(h, w))
    narrow = jnp.zeros((NARROW_ROWS, NARROW_W), jnp.float32)
    for name, h, w in NARROW_W_SHAPES:
        r = NARROW_OFFS[name][0]
        narrow = narrow.at[r:r + h, 0:w].set(jnp.asarray(d[name], jnp.float32).reshape(h, w))
    for name, w in BIAS_SHAPES:
        r = BIAS_ROW0 + BIAS_ROW[name]
        narrow = narrow.at[r, 0:w].set(jnp.asarray(d[name], jnp.float32).reshape(w))
    return wide.astype(jnp.bfloat16), narrow.astype(jnp.bfloat16)


# ------------------------------ fused kernel ---------------------------------
def fused_kernel(patches_ref, mov_ref, pw_ref, pn_ref, out_ref):
    def PW(name):                                   # wide bf16 weight
        r, h, w = WIDE_OFFS[name]
        return pw_ref[r:r + h, 0:w]

    def PN(name):                                   # narrow bf16 weight
        r, h, w = NARROW_OFFS[name]
        return pn_ref[r:r + h, 0:w]

    # Bias block: single aligned load + f32 cast, then value slices (cheap).
    bias_blk = pn_ref[BIAS_ROW0:BIAS_ROW0 + BIAS_ROWS, :].astype(jnp.float32)

    def BIAS(name):
        r = BIAS_ROW[name]
        return bias_blk[r:r + 1, 0:BIAS_WID[name]]

    # ---------------- backbone: all B*T frames in ONE bf16 MXU matmul ----------------
    pat = patches_ref[...]                                            # (T*B*H*W, K*K*C) bf16
    conv = jnp.dot(pat, PN("wconv"), preferred_element_type=jnp.float32) + BIAS("bconv")
    conv = jnp.maximum(conv, 0.0)                                     # ReLU, (2048, 16) f32

    # Global average pool per frame: major-dim reshape + sublane reduction
    # (no iota / select / pool matmul).
    hw = IMG * IMG
    feat = jnp.sum(conv.reshape(T * B, hw, C_CONV), axis=1) * (1.0 / hw)   # (T*B, C_CONV) f32

    emb = (jnp.dot(feat.astype(jnp.bfloat16), PN("wbfc"),
                   preferred_element_type=jnp.float32) + BIAS("bbfc"))     # (T*B, E) f32

    # ---------------- bidirectional LSTM ----------------
    # Input projection hoisted out of the recurrence: one (T*B, D)x(D, 8H) pass
    # covers every timestep and both directions (movenet features folded in by
    # splitting the weight rows instead of concatenating activations).
    wih = PW("wih")                                                   # (40, 256) bf16
    xproj = (jnp.dot(emb.astype(jnp.bfloat16), wih[0:DIM_EMB, :],
                     preferred_element_type=jnp.float32)
             + jnp.dot(mov_ref[...], wih[DIM_EMB:DIM_LSTM_IN, :],
                       preferred_element_type=jnp.float32)
             + PW("blstm").astype(jnp.float32))                       # (T*B, 256) f32

    whh = PW("whh")                                                   # (64, 256) bf16 block-diag
    G = 2 * DIM_HID                                                   # 64 = [fwd | rev]
    h = jnp.zeros((B, G), jnp.float32)                                # [h_fwd | h_rev]
    c = jnp.zeros((B, G), jnp.float32)

    # NOTE: matches the reference forward(): the LSTM is called with seq_len == 1
    # per frame while carrying `hidden`, so BOTH directions advance forward over
    # frames.  Only this h-recurrence is serial; T=4 is fully unrolled.  whh is
    # loop-invariant (RHS reuse across the unrolled steps); gate math stays f32.
    for t in range(T):
        gates = (xproj[t * B:(t + 1) * B, :]
                 + jnp.dot(h.astype(jnp.bfloat16), whh,
                           preferred_element_type=jnp.float32))       # (B, 256) f32
        i_g = jax.nn.sigmoid(gates[:, 0 * G:1 * G])
        f_g = jax.nn.sigmoid(gates[:, 1 * G:2 * G])
        g_g = jnp.tanh(gates[:, 2 * G:3 * G])
        o_g = jax.nn.sigmoid(gates[:, 3 * G:4 * G])
        c = f_g * c + i_g * g_g
        h = o_g * jnp.tanh(c)

    h_f, h_r = h[:, 0:DIM_HID], h[:, DIM_HID:G]                       # h_n rows (fwd, rev)
    c_f, c_r = c[:, 0:DIM_HID], c[:, DIM_HID:G]                       # c_n rows

    # ---------------- single-head attention ----------------
    # q = out[-1][:, :dim_embedding] = h_fwd ; keys = h_n ; values = c_n (src len 2)
    wk, bk = PN("wk"), BIAS("bk")
    wv, bv = PN("wv"), BIAS("bv")
    h_f16, h_r16 = h_f.astype(jnp.bfloat16), h_r.astype(jnp.bfloat16)
    qp = jnp.dot(h_f16, PN("wq"), preferred_element_type=jnp.float32) + BIAS("bq")
    k0 = jnp.dot(h_f16, wk, preferred_element_type=jnp.float32) + bk
    k1 = jnp.dot(h_r16, wk, preferred_element_type=jnp.float32) + bk
    v0 = jnp.dot(c_f.astype(jnp.bfloat16), wv, preferred_element_type=jnp.float32) + bv
    v1 = jnp.dot(c_r.astype(jnp.bfloat16), wv, preferred_element_type=jnp.float32) + bv
    scale = 1.0 / math.sqrt(DIM_EMB)
    s0 = jnp.sum(qp * k0, axis=-1, keepdims=True) * scale             # (B, 1) f32
    s1 = jnp.sum(qp * k1, axis=-1, keepdims=True) * scale
    m = jnp.maximum(s0, s1)
    e0 = jnp.exp(s0 - m)
    e1 = jnp.exp(s1 - m)
    inv = 1.0 / (e0 + e1)
    attn = (e0 * inv) * v0 + (e1 * inv) * v1                          # (B, E) f32
    ao = jnp.dot(attn.astype(jnp.bfloat16), PN("wo"),
                 preferred_element_type=jnp.float32) + BIAS("bo")

    # ------------- FC head (eval: dropout = identity, BN folded into w3/b3) -------
    x1 = jnp.dot(ao.astype(jnp.bfloat16), PN("w1"),
                 preferred_element_type=jnp.float32) + BIAS("b1")
    x1 = jnp.where(x1 > 0, x1, LEAKY_SLOPE * x1)
    x2 = jnp.dot(x1.astype(jnp.bfloat16), PN("w2"),
                 preferred_element_type=jnp.float32) + BIAS("b2")
    x2 = jnp.where(x2 > 0, x2, LEAKY_SLOPE * x2)
    logits = jnp.dot(x2.astype(jnp.bfloat16), PN("w3f"),
                     preferred_element_type=jnp.float32) + BIAS("b3f")

    # nn.Softmax(dim=0): softmax over the *batch* dimension (as in the reference)
    mm = jnp.max(logits, axis=0, keepdims=True)
    ee = jnp.exp(logits - mm)
    out_ref[...] = ee / jnp.sum(ee, axis=0, keepdims=True)


# ------------------------------- glue (plain JAX) ----------------------------
def im2col(vid):
    """(B, T, C, H, W) -> (T*B*H*W, K*K*C) patch rows, t-major frame order,
    patch columns ordered (kh, kw, cin), 'same' zero padding."""
    x = vid.transpose(1, 0, 2, 3, 4).reshape(T * B, C_IN, IMG, IMG)
    x = x.transpose(0, 2, 3, 1)                                       # NHWC
    pad = K // 2
    xp = jnp.pad(x, ((0, 0), (pad, pad), (pad, pad), (0, 0)))
    cols = [xp[:, kh:kh + IMG, kw:kw + IMG, :] for kh in range(K) for kw in range(K)]
    patches = jnp.stack(cols, axis=3)                                 # (TB, H, W, K*K, C)
    return patches.reshape(T * B * IMG * IMG, K * K * C_IN)


@jax.jit
def model_forward(vid, movenet_x, prm_wide, prm_narrow):
    patches = im2col(vid.astype(jnp.float32)).astype(jnp.bfloat16)    # bf16 MXU operand
    mov = (movenet_x.astype(jnp.float32).transpose(1, 0, 2)
           .reshape(T * B, DIM_MOVENET).astype(jnp.bfloat16))         # bf16 MXU operand
    return pl.pallas_call(
        fused_kernel,
        out_shape=jax.ShapeDtypeStruct((B, N_CLASSES), jnp.float32),
    )(patches, mov, prm_wide, prm_narrow)


# ------------------------------ parameter init --------------------------------
def fuse_bilstm_weights(wih_f, whh_f, b_f, wih_r, whh_r, b_r):
    """Fuse both LSTM directions into MXU-friendly N=256 gate matmuls.

    Column layout (width 8H): [ i | f | g | o ], each gate group 2H wide =
    [forward(H) | reverse(H)].  whh is block-diagonal against the stacked state
    [h_fwd | h_rev] so one (B, 2H)x(2H, 8H) matmul advances both directions.
    Keeping the 64-lane [gate x direction] grouping keeps each gate slice inside
    one 128-lane half on v5e's 4x128^2 MXU.
    """
    H = DIM_HID
    ih_cols, hh_cols, b_cols = [], [], []
    for g in range(4):                       # torch gate order: i, f, g, o
        ih_cols += [wih_f[g * H:(g + 1) * H, :].T, wih_r[g * H:(g + 1) * H, :].T]
        blk_f = jnp.zeros((2 * H, H), jnp.float32).at[0:H, :].set(whh_f[g * H:(g + 1) * H, :].T)
        blk_r = jnp.zeros((2 * H, H), jnp.float32).at[H:2 * H, :].set(whh_r[g * H:(g + 1) * H, :].T)
        hh_cols += [blk_f, blk_r]
        b_cols += [b_f[g * H:(g + 1) * H], b_r[g * H:(g + 1) * H]]
    wih = jnp.concatenate(ih_cols, axis=1)   # (D_in, 8H)
    whh = jnp.concatenate(hh_cols, axis=1)   # (2H, 8H)
    b = jnp.concatenate(b_cols)[None, :]     # (1, 8H)
    return wih, whh, b


def init_params(key):
    ks = jax.random.split(key, 26)
    s = 0.1
    d = {}
    # backbone: conv(3x3, C_IN->C_CONV) + fc(C_CONV -> DIM_EMB)
    wconv = jax.random.normal(ks[0], (C_CONV, C_IN, K, K), jnp.float32) * s
    d["wconv"] = wconv.transpose(2, 3, 1, 0).reshape(K * K * C_IN, C_CONV)
    d["bconv"] = jax.random.normal(ks[1], (1, C_CONV), jnp.float32) * s
    d["wbfc"] = (jax.random.normal(ks[2], (DIM_EMB, C_CONV), jnp.float32) * s).T
    d["bbfc"] = jax.random.normal(ks[3], (1, DIM_EMB), jnp.float32) * s
    # bidirectional LSTM, torch layout (gate order i, f, g, o; biases ih+hh fused)
    wih_f = jax.random.normal(ks[4], (4 * DIM_HID, DIM_LSTM_IN), jnp.float32) * s
    whh_f = jax.random.normal(ks[5], (4 * DIM_HID, DIM_HID), jnp.float32) * s
    b_f = (jax.random.normal(ks[6], (4 * DIM_HID,), jnp.float32)
           + jax.random.normal(ks[7], (4 * DIM_HID,), jnp.float32)) * s
    wih_r = jax.random.normal(ks[8], (4 * DIM_HID, DIM_LSTM_IN), jnp.float32) * s
    whh_r = jax.random.normal(ks[9], (4 * DIM_HID, DIM_HID), jnp.float32) * s
    b_r = (jax.random.normal(ks[10], (4 * DIM_HID,), jnp.float32)
           + jax.random.normal(ks[11], (4 * DIM_HID,), jnp.float32)) * s
    d["wih"], d["whh"], d["blstm"] = fuse_bilstm_weights(wih_f, whh_f, b_f, wih_r, whh_r, b_r)
    # single-head attention (in_proj split q/k/v + out_proj)
    in_proj = jax.random.normal(ks[12], (3 * DIM_EMB, DIM_EMB), jnp.float32) * s
    in_b = jax.random.normal(ks[13], (3 * DIM_EMB,), jnp.float32) * s
    d["wq"] = in_proj[:DIM_EMB].T
    d["bq"] = in_b[:DIM_EMB][None]
    d["wk"] = in_proj[DIM_EMB:2 * DIM_EMB].T
    d["bk"] = in_b[DIM_EMB:2 * DIM_EMB][None]
    d["wv"] = in_proj[2 * DIM_EMB:].T
    d["bv"] = in_b[2 * DIM_EMB:][None]
    d["wo"] = (jax.random.normal(ks[14], (DIM_EMB, DIM_EMB), jnp.float32) * s).T
    d["bo"] = jax.random.normal(ks[15], (1, DIM_EMB), jnp.float32) * s
    # FC head
    d["w1"] = (jax.random.normal(ks[16], (F1, DIM_HID), jnp.float32) * s).T
    d["b1"] = jax.random.normal(ks[17], (1, F1), jnp.float32) * s
    d["w2"] = (jax.random.normal(ks[18], (F2, F1), jnp.float32) * s).T
    d["b2"] = jax.random.normal(ks[19], (1, F2), jnp.float32) * s
    # BatchNorm1d (eval mode) folded into the final Linear:
    #   w3' = diag(gamma * rsqrt(var+eps)) @ w3 ; b3' = (beta - mean*s) @ w3 + b3
    bn_g = 1.0 + jax.random.normal(ks[20], (F2,), jnp.float32) * 0.01
    bn_b = jax.random.normal(ks[21], (F2,), jnp.float32) * 0.01
    bn_m = jax.random.normal(ks[22], (F2,), jnp.float32) * 0.01
    bn_v = 1.0 + jnp.abs(jax.random.normal(ks[23], (F2,), jnp.float32)) * 0.01
    w3 = (jax.random.normal(ks[24], (N_CLASSES, F2), jnp.float32) * s).T    # (F2, 3)
    b3 = jax.random.normal(ks[25], (1, N_CLASSES), jnp.float32) * s
    bn_s = bn_g * jax.lax.rsqrt(bn_v + BN_EPS)
    d["w3f"] = bn_s[:, None] * w3
    d["b3f"] = (bn_b - bn_m * bn_s)[None, :] @ w3 + b3
    return pack_params(d)


# ----------------------------------- main -------------------------------------
if __name__ == "__main__":
    key = jax.random.PRNGKey(0)
    k_vid, k_mov, k_par = jax.random.split(key, 3)

    vid = jax.random.normal(k_vid, (B, T, C_IN, IMG, IMG), jnp.float32)   # (B, T, C, H, W)
    movenet_x = jax.random.normal(k_mov, (B, T, DIM_MOVENET), jnp.float32)
    prm_wide, prm_narrow = init_params(k_par)

    probs = model_forward(vid, movenet_x, prm_wide, prm_narrow)
    probs = jax.block_until_ready(probs)

    assert probs.shape == (B, N_CLASSES)
    assert bool(jnp.all(jnp.isfinite(probs)))
    # Softmax(dim=0) => each class column sums to 1 over the batch dimension.
    assert bool(jnp.allclose(jnp.sum(probs, axis=0), 1.0, atol=1e-5))
    print("KERNEL_OK")
</pallas_src>

<mosaic_0001>
module attributes {stable_mosaic.version = 11 : i64} {
  func.func @fused_kernel(%arg0: memref<2048x27xbf16, #tpu.memory_space<vmem>>, %arg1: memref<8x8xbf16, #tpu.memory_space<vmem>>, %arg2: memref<112x256xbf16, #tpu.memory_space<vmem>>, %arg3: memref<256x128xbf16, #tpu.memory_space<vmem>>, %arg4: memref<2x3xf32, #tpu.memory_space<vmem>>) attributes {dimension_semantics = [], scalar_prefetch = 0 : i64, scratch_operands = 0 : i64, tpu.core_type = #tpu.core_type<tc>} {
    %c240 = arith.constant 240 : index
    %c0 = arith.constant 0 : index
    %0 = vector.load %arg3[%c240, %c0] : memref<256x128xbf16, #tpu.memory_space<vmem>>, vector<16x128xbf16>
    %1 = arith.extf %0 : vector<16x128xbf16> to vector<16x128xf32>
    %c0_0 = arith.constant 0 : index
    %c0_1 = arith.constant 0 : index
    %2 = vector.load %arg0[%c0_0, %c0_1] : memref<2048x27xbf16, #tpu.memory_space<vmem>>, vector<2048x27xbf16>
    %c0_2 = arith.constant 0 : index
    %c0_3 = arith.constant 0 : index
    %3 = vector.load %arg3[%c0_2, %c0_3] : memref<256x128xbf16, #tpu.memory_space<vmem>>, vector<27x16xbf16>
    %cst = arith.constant dense<0.000000e+00> : vector<2048x16xf32>
    %4 = tpu.matmul %2, %3, %cst {dimension_numbers = #tpu.dot_dimension_numbers<[1], [0], [0], [1], [0, 0, 1, 1], [], []>} : vector<2048x27xbf16>, vector<27x16xbf16>, vector<2048x16xf32> -> vector<2048x16xf32>
    %5 = vector.extract_strided_slice %1 {offsets = [0, 0], sizes = [1, 16], strides = [1, 1]} : vector<16x128xf32> to vector<1x16xf32>
    %6 = vector.broadcast %5 : vector<1x16xf32> to vector<2048x16xf32>
    %7 = arith.addf %4, %6 : vector<2048x16xf32>
    %cst_4 = arith.constant 0.000000e+00 : f32
    %8 = vector.broadcast %cst_4 : f32 to vector<2048x16xf32>
    %9 = arith.maximumf %7, %8 : vector<2048x16xf32>
    %10 = vector.shape_cast %9 : vector<2048x16xf32> to vector<8x256x16xf32>
    %cst_5 = arith.constant dense<0.000000e+00> : vector<8x16xf32>
    %11 = vector.multi_reduction <add>, %10, %cst_5 [1] : vector<8x256x16xf32> to vector<8x16xf32>
    %cst_6 = arith.constant 3.906250e-03 : f32
    %12 = vector.broadcast %cst_6 : f32 to vector<8x16xf32>
    %13 = arith.mulf %11, %12 : vector<8x16xf32>
    %14 = arith.truncf %13 : vector<8x16xf32> to vector<8x16xbf16>
    %c32 = arith.constant 32 : index
    %c0_7 = arith.constant 0 : index
    %15 = vector.load %arg3[%c32, %c0_7] : memref<256x128xbf16, #tpu.memory_space<vmem>>, vector<16x32xbf16>
    %cst_8 = arith.constant dense<0.000000e+00> : vector<8x32xf32>
    %16 = tpu.matmul %14, %15, %cst_8 {dimension_numbers = #tpu.dot_dimension_numbers<[1], [0], [0], [1], [0, 0, 1, 1], [], []>} : vector<8x16xbf16>, vector<16x32xbf16>, vector<8x32xf32> -> vector<8x32xf32>
    %17 = vector.extract_strided_slice %1 {offsets = [1, 0], sizes = [1, 32], strides = [1, 1]} : vector<16x128xf32> to vector<1x32xf32>
    %18 = vector.broadcast %17 : vector<1x32xf32> to vector<8x32xf32>
    %19 = arith.addf %16, %18 : vector<8x32xf32>
    %c0_9 = arith.constant 0 : index
    %c0_10 = arith.constant 0 : index
    %20 = vector.load %arg2[%c0_9, %c0_10] : memref<112x256xbf16, #tpu.memory_space<vmem>>, vector<40x256xbf16>
    %21 = arith.truncf %19 : vector<8x32xf32> to vector<8x32xbf16>
    %22 = vector.extract_strided_slice %20 {offsets = [0, 0], sizes = [32, 256], strides = [1, 1]} : vector<40x256xbf16> to vector<32x256xbf16>
    %cst_11 = arith.constant dense<0.000000e+00> : vector<8x256xf32>
    %23 = tpu.matmul %21, %22, %cst_11 {dimension_numbers = #tpu.dot_dimension_numbers<[1], [0], [0], [1], [0, 0, 1, 1], [], []>} : vector<8x32xbf16>, vector<32x256xbf16>, vector<8x256xf32> -> vector<8x256xf32>
    %c0_12 = arith.constant 0 : index
    %c0_13 = arith.constant 0 : index
    %24 = vector.load %arg1[%c0_12, %c0_13] : memref<8x8xbf16, #tpu.memory_space<vmem>>, vector<8x8xbf16>
    %25 = vector.extract_strided_slice %20 {offsets = [32, 0], sizes = [8, 256], strides = [1, 1]} : vector<40x256xbf16> to vector<8x256xbf16>
    %cst_14 = arith.constant dense<0.000000e+00> : vector<8x256xf32>
    %26 = tpu.matmul %24, %25, %cst_14 {dimension_numbers = #tpu.dot_dimension_numbers<[1], [0], [0], [1], [0, 0, 1, 1], [], []>} : vector<8x8xbf16>, vector<8x256xbf16>, vector<8x256xf32> -> vector<8x256xf32>
    %27 = arith.addf %23, %26 : vector<8x256xf32>
    %c104 = arith.constant 104 : index
    %c0_15 = arith.constant 0 : index
    %28 = vector.load %arg2[%c104, %c0_15] : memref<112x256xbf16, #tpu.memory_space<vmem>>, vector<1x256xbf16>
    %29 = arith.extf %28 : vector<1x256xbf16> to vector<1x256xf32>
    %30 = vector.broadcast %29 : vector<1x256xf32> to vector<8x256xf32>
    %31 = arith.addf %27, %30 : vector<8x256xf32>
    %c40 = arith.constant 40 : index
    %c0_16 = arith.constant 0 : index
    %32 = vector.load %arg2[%c40, %c0_16] : memref<112x256xbf16, #tpu.memory_space<vmem>>, vector<64x256xbf16>
    %cst_17 = arith.constant 0.000000e+00 : f32
    %33 = vector.broadcast %cst_17 : f32 to vector<2x64xf32>
    %cst_18 = arith.constant 0.000000e+00 : f32
    %34 = vector.broadcast %cst_18 : f32 to vector<2x64xf32>
    %35 = vector.extract_strided_slice %31 {offsets = [0, 0], sizes = [2, 256], strides = [1, 1]} : vector<8x256xf32> to vector<2x256xf32>
    %36 = arith.truncf %33 : vector<2x64xf32> to vector<2x64xbf16>
    %cst_19 = arith.constant dense<0.000000e+00> : vector<2x256xf32>
    %37 = tpu.matmul %36, %32, %cst_19 {dimension_numbers = #tpu.dot_dimension_numbers<[1], [0], [0], [1], [0, 0, 1, 1], [], []>} : vector<2x64xbf16>, vector<64x256xbf16>, vector<2x256xf32> -> vector<2x256xf32>
    %38 = arith.addf %35, %37 : vector<2x256xf32>
    %39 = vector.extract_strided_slice %38 {offsets = [0, 0], sizes = [2, 64], strides = [1, 1]} : vector<2x256xf32> to vector<2x64xf32>
    %40 = arith.negf %39 : vector<2x64xf32>
    %41 = math.exp %40 : vector<2x64xf32>
    %cst_20 = arith.constant 1.000000e+00 : f32
    %42 = vector.broadcast %cst_20 : f32 to vector<2x64xf32>
    %43 = arith.addf %42, %41 : vector<2x64xf32>
    %44 = arith.divf %42, %43 : vector<2x64xf32>
    %45 = vector.extract_strided_slice %38 {offsets = [0, 64], sizes = [2, 64], strides = [1, 1]} : vector<2x256xf32> to vector<2x64xf32>
    %46 = arith.negf %45 : vector<2x64xf32>
    %47 = math.exp %46 : vector<2x64xf32>
    %cst_21 = arith.constant 1.000000e+00 : f32
    %48 = vector.broadcast %cst_21 : f32 to vector<2x64xf32>
    %49 = arith.addf %48, %47 : vector<2x64xf32>
    %50 = arith.divf %48, %49 : vector<2x64xf32>
    %51 = vector.extract_strided_slice %38 {offsets = [0, 128], sizes = [2, 64], strides = [1, 1]} : vector<2x256xf32> to vector<2x64xf32>
    %52 = math.tanh %51 : vector<2x64xf32>
    %53 = vector.extract_strided_slice %38 {offsets = [0, 192], sizes = [2, 64], strides = [1, 1]} : vector<2x256xf32> to vector<2x64xf32>
    %54 = arith.negf %53 : vector<2x64xf32>
    %55 = math.exp %54 : vector<2x64xf32>
    %cst_22 = arith.constant 1.000000e+00 : f32
    %56 = vector.broadcast %cst_22 : f32 to vector<2x64xf32>
    %57 = arith.addf %56, %55 : vector<2x64xf32>
    %58 = arith.divf %56, %57 : vector<2x64xf32>
    %59 = arith.mulf %50, %34 : vector<2x64xf32>
    %60 = arith.mulf %44, %52 : vector<2x64xf32>
    %61 = arith.addf %59, %60 : vector<2x64xf32>
    %62 = math.tanh %61 : vector<2x64xf32>
    %63 = arith.mulf %58, %62 : vector<2x64xf32>
    %64 = vector.extract_strided_slice %31 {offsets = [2, 0], sizes = [2, 256], strides = [1, 1]} : vector<8x256xf32> to vector<2x256xf32>
    %65 = arith.truncf %63 : vector<2x64xf32> to vector<2x64xbf16>
    %cst_23 = arith.constant dense<0.000000e+00> : vector<2x256xf32>
    %66 = tpu.matmul %65, %32, %cst_23 {dimension_numbers = #tpu.dot_dimension_numbers<[1], [0], [0], [1], [0, 0, 1, 1], [], []>} : vector<2x64xbf16>, vector<64x256xbf16>, vector<2x256xf32> -> vector<2x256xf32>
    %67 = arith.addf %64, %66 : vector<2x256xf32>
    %68 = vector.extract_strided_slice %67 {offsets = [0, 0], sizes = [2, 64], strides = [1, 1]} : vector<2x256xf32> to vector<2x64xf32>
    %69 = arith.negf %68 : vector<2x64xf32>
    %70 = math.exp %69 : vector<2x64xf32>
    %cst_24 = arith.constant 1.000000e+00 : f32
    %71 = vector.broadcast %cst_24 : f32 to vector<2x64xf32>
    %72 = arith.addf %71, %70 : vector<2x64xf32>
    %73 = arith.divf %71, %72 : vector<2x64xf32>
    %74 = vector.extract_strided_slice %67 {offsets = [0, 64], sizes = [2, 64], strides = [1, 1]} : vector<2x256xf32> to vector<2x64xf32>
    %75 = arith.negf %74 : vector<2x64xf32>
    %76 = math.exp %75 : vector<2x64xf32>
    %cst_25 = arith.constant 1.000000e+00 : f32
    %77 = vector.broadcast %cst_25 : f32 to vector<2x64xf32>
    %78 = arith.addf %77, %76 : vector<2x64xf32>
    %79 = arith.divf %77, %78 : vector<2x64xf32>
    %80 = vector.extract_strided_slice %67 {offsets = [0, 128], sizes = [2, 64], strides = [1, 1]} : vector<2x256xf32> to vector<2x64xf32>
    %81 = math.tanh %80 : vector<2x64xf32>
    %82 = vector.extract_strided_slice %67 {offsets = [0, 192], sizes = [2, 64], strides = [1, 1]} : vector<2x256xf32> to vector<2x64xf32>
    %83 = arith.negf %82 : vector<2x64xf32>
    %84 = math.exp %83 : vector<2x64xf32>
    %cst_26 = arith.constant 1.000000e+00 : f32
    %85 = vector.broadcast %cst_26 : f32 to vector<2x64xf32>
    %86 = arith.addf %85, %84 : vector<2x64xf32>
    %87 = arith.divf %85, %86 : vector<2x64xf32>
    %88 = arith.mulf %79, %61 : vector<2x64xf32>
    %89 = arith.mulf %73, %81 : vector<2x64xf32>
    %90 = arith.addf %88, %89 : vector<2x64xf32>
    %91 = math.tanh %90 : vector<2x64xf32>
    %92 = arith.mulf %87, %91 : vector<2x64xf32>
    %93 = vector.extract_strided_slice %31 {offsets = [4, 0], sizes = [2, 256], strides = [1, 1]} : vector<8x256xf32> to vector<2x256xf32>
    %94 = arith.truncf %92 : vector<2x64xf32> to vector<2x64xbf16>
    %cst_27 = arith.constant dense<0.000000e+00> : vector<2x256xf32>
    %95 = tpu.matmul %94, %32, %cst_27 {dimension_numbers = #tpu.dot_dimension_numbers<[1], [0], [0], [1], [0, 0, 1, 1], [], []>} : vector<2x64xbf16>, vector<64x256xbf16>, vector<2x256xf32> -> vector<2x256xf32>
    %96 = arith.addf %93, %95 : vector<2x256xf32>
    %97 = vector.extract_strided_slice %96 {offsets = [0, 0], sizes = [2, 64], strides = [1, 1]} : vector<2x256xf32> to vector<2x64xf32>
    %98 = arith.negf %97 : vector<2x64xf32>
    %99 = math.exp %98 : vector<2x64xf32>
    %cst_28 = arith.constant 1.000000e+00 : f32
    %100 = vector.broadcast %cst_28 : f32 to vector<2x64xf32>
    %101 = arith.addf %100, %99 : vector<2x64xf32>
    %102 = arith.divf %100, %101 : vector<2x64xf32>
    %103 = vector.extract_strided_slice %96 {offsets = [0, 64], sizes = [2, 64], strides = [1, 1]} : vector<2x256xf32> to vector<2x64xf32>
    %104 = arith.negf %103 : vector<2x64xf32>
    %105 = math.exp %104 : vector<2x64xf32>
    %cst_29 = arith.constant 1.000000e+00 : f32
    %106 = vector.broadcast %cst_29 : f32 to vector<2x64xf32>
    %107 = arith.addf %106, %105 : vector<2x64xf32>
    %108 = arith.divf %106, %107 : vector<2x64xf32>
    %109 = vector.extract_strided_slice %96 {offsets = [0, 128], sizes = [2, 64], strides = [1, 1]} : vector<2x256xf32> to vector<2x64xf32>
    %110 = math.tanh %109 : vector<2x64xf32>
    %111 = vector.extract_strided_slice %96 {offsets = [0, 192], sizes = [2, 64], strides = [1, 1]} : vector<2x256xf32> to vector<2x64xf32>
    %112 = arith.negf %111 : vector<2x64xf32>
    %113 = math.exp %112 : vector<2x64xf32>
    %cst_30 = arith.constant 1.000000e+00 : f32
    %114 = vector.broadcast %cst_30 : f32 to vector<2x64xf32>
    %115 = arith.addf %114, %113 : vector<2x64xf32>
    %116 = arith.divf %114, %115 : vector<2x64xf32>
    %117 = arith.mulf %108, %90 : vector<2x64xf32>
    %118 = arith.mulf %102, %110 : vector<2x64xf32>
    %119 = arith.addf %117, %118 : vector<2x64xf32>
    %120 = math.tanh %119 : vector<2x64xf32>
    %121 = arith.mulf %116, %120 : vector<2x64xf32>
    %122 = vector.extract_strided_slice %31 {offsets = [6, 0], sizes = [2, 256], strides = [1, 1]} : vector<8x256xf32> to vector<2x256xf32>
    %123 = arith.truncf %121 : vector<2x64xf32> to vector<2x64xbf16>
    %cst_31 = arith.constant dense<0.000000e+00> : vector<2x256xf32>
    %124 = tpu.matmul %123, %32, %cst_31 {dimension_numbers = #tpu.dot_dimension_numbers<[1], [0], [0], [1], [0, 0, 1, 1], [], []>} : vector<2x64xbf16>, vector<64x256xbf16>, vector<2x256xf32> -> vector<2x256xf32>
    %125 = arith.addf %122, %124 : vector<2x256xf32>
    %126 = vector.extract_strided_slice %125 {offsets = [0, 0], sizes = [2, 64], strides = [1, 1]} : vector<2x256xf32> to vector<2x64xf32>
    %127 = arith.negf %126 : vector<2x64xf32>
    %128 = math.exp %127 : vector<2x64xf32>
    %cst_32 = arith.constant 1.000000e+00 : f32
    %129 = vector.broadcast %cst_32 : f32 to vector<2x64xf32>
    %130 = arith.addf %129, %128 : vector<2x64xf32>
    %131 = arith.divf %129, %130 : vector<2x64xf32>
    %132 = vector.extract_strided_slice %125 {offsets = [0, 64], sizes = [2, 64], strides = [1, 1]} : vector<2x256xf32> to vector<2x64xf32>
    %133 = arith.negf %132 : vector<2x64xf32>
    %134 = math.exp %133 : vector<2x64xf32>
    %cst_33 = arith.constant 1.000000e+00 : f32
    %135 = vector.broadcast %cst_33 : f32 to vector<2x64xf32>
    %136 = arith.addf %135, %134 : vector<2x64xf32>
    %137 = arith.divf %135, %136 : vector<2x64xf32>
    %138 = vector.extract_strided_slice %125 {offsets = [0, 128], sizes = [2, 64], strides = [1, 1]} : vector<2x256xf32> to vector<2x64xf32>
    %139 = math.tanh %138 : vector<2x64xf32>
    %140 = vector.extract_strided_slice %125 {offsets = [0, 192], sizes = [2, 64], strides = [1, 1]} : vector<2x256xf32> to vector<2x64xf32>
    %141 = arith.negf %140 : vector<2x64xf32>
    %142 = math.exp %141 : vector<2x64xf32>
    %cst_34 = arith.constant 1.000000e+00 : f32
    %143 = vector.broadcast %cst_34 : f32 to vector<2x64xf32>
    %144 = arith.addf %143, %142 : vector<2x64xf32>
    %145 = arith.divf %143, %144 : vector<2x64xf32>
    %146 = arith.mulf %137, %119 : vector<2x64xf32>
    %147 = arith.mulf %131, %139 : vector<2x64xf32>
    %148 = arith.addf %146, %147 : vector<2x64xf32>
    %149 = math.tanh %148 : vector<2x64xf32>
    %150 = arith.mulf %145, %149 : vector<2x64xf32>
    %151 = vector.extract_strided_slice %150 {offsets = [0, 0], sizes = [2, 32], strides = [1, 1]} : vector<2x64xf32> to vector<2x32xf32>
    %152 = vector.extract_strided_slice %150 {offsets = [0, 32], sizes = [2, 32], strides = [1, 1]} : vector<2x64xf32> to vector<2x32xf32>
    %153 = vector.extract_strided_slice %148 {offsets = [0, 0], sizes = [2, 32], strides = [1, 1]} : vector<2x64xf32> to vector<2x32xf32>
    %154 = vector.extract_strided_slice %148 {offsets = [0, 32], sizes = [2, 32], strides = [1, 1]} : vector<2x64xf32> to vector<2x32xf32>
    %c80 = arith.constant 80 : index
    %c0_35 = arith.constant 0 : index
    %155 = vector.load %arg3[%c80, %c0_35] : memref<256x128xbf16, #tpu.memory_space<vmem>>, vector<32x32xbf16>
    %156 = vector.extract_strided_slice %1 {offsets = [3, 0], sizes = [1, 32], strides = [1, 1]} : vector<16x128xf32> to vector<1x32xf32>
    %c112 = arith.constant 112 : index
    %c0_36 = arith.constant 0 : index
    %157 = vector.load %arg3[%c112, %c0_36] : memref<256x128xbf16, #tpu.memory_space<vmem>>, vector<32x32xbf16>
    %158 = vector.extract_strided_slice %1 {offsets = [4, 0], sizes = [1, 32], strides = [1, 1]} : vector<16x128xf32> to vector<1x32xf32>
    %159 = arith.truncf %151 : vector<2x32xf32> to vector<2x32xbf16>
    %160 = arith.truncf %152 : vector<2x32xf32> to vector<2x32xbf16>
    %c48 = arith.constant 48 : index
    %c0_37 = arith.constant 0 : index
    %161 = vector.load %arg3[%c48, %c0_37] : memref<256x128xbf16, #tpu.memory_space<vmem>>, vector<32x32xbf16>
    %cst_38 = arith.constant dense<0.000000e+00> : vector<2x32xf32>
    %162 = tpu.matmul %159, %161, %cst_38 {dimension_numbers = #tpu.dot_dimension_numbers<[1], [0], [0], [1], [0, 0, 1, 1], [], []>} : vector<2x32xbf16>, vector<32x32xbf16>, vector<2x32xf32> -> vector<2x32xf32>
    %163 = vector.extract_strided_slice %1 {offsets = [2, 0], sizes = [1, 32], strides = [1, 1]} : vector<16x128xf32> to vector<1x32xf32>
    %164 = vector.broadcast %163 : vector<1x32xf32> to vector<2x32xf32>
    %165 = arith.addf %162, %164 : vector<2x32xf32>
    %cst_39 = arith.constant dense<0.000000e+00> : vector<2x32xf32>
    %166 = tpu.matmul %159, %155, %cst_39 {dimension_numbers = #tpu.dot_dimension_numbers<[1], [0], [0], [1], [0, 0, 1, 1], [], []>} : vector<2x32xbf16>, vector<32x32xbf16>, vector<2x32xf32> -> vector<2x32xf32>
    %167 = vector.broadcast %156 : vector<1x32xf32> to vector<2x32xf32>
    %168 = arith.addf %166, %167 : vector<2x32xf32>
    %cst_40 = arith.constant dense<0.000000e+00> : vector<2x32xf32>
    %169 = tpu.matmul %160, %155, %cst_40 {dimension_numbers = #tpu.dot_dimension_numbers<[1], [0], [0], [1], [0, 0, 1, 1], [], []>} : vector<2x32xbf16>, vector<32x32xbf16>, vector<2x32xf32> -> vector<2x32xf32>
    %170 = vector.broadcast %156 : vector<1x32xf32> to vector<2x32xf32>
    %171 = arith.addf %169, %170 : vector<2x32xf32>
    %172 = arith.truncf %153 : vector<2x32xf32> to vector<2x32xbf16>
    %cst_41 = arith.constant dense<0.000000e+00> : vector<2x32xf32>
    %173 = tpu.matmul %172, %157, %cst_41 {dimension_numbers = #tpu.dot_dimension_numbers<[1], [0], [0], [1], [0, 0, 1, 1], [], []>} : vector<2x32xbf16>, vector<32x32xbf16>, vector<2x32xf32> -> vector<2x32xf32>
    %174 = vector.broadcast %158 : vector<1x32xf32> to vector<2x32xf32>
    %175 = arith.addf %173, %174 : vector<2x32xf32>
    %176 = arith.truncf %154 : vector<2x32xf32> to vector<2x32xbf16>
    %cst_42 = arith.constant dense<0.000000e+00> : vector<2x32xf32>
    %177 = tpu.matmul %176, %157, %cst_42 {dimension_numbers = #tpu.dot_dimension_numbers<[1], [0], [0], [1], [0, 0, 1, 1], [], []>} : vector<2x32xbf16>, vector<32x32xbf16>, vector<2x32xf32> -> vector<2x32xf32>
    %178 = vector.broadcast %158 : vector<1x32xf32> to vector<2x32xf32>
    %179 = arith.addf %177, %178 : vector<2x32xf32>
    %180 = arith.mulf %165, %168 : vector<2x32xf32>
    %cst_43 = arith.constant dense<0.000000e+00> : vector<2xf32>
    %181 = vector.multi_reduction <add>, %180, %cst_43 [1] : vector<2x32xf32> to vector<2xf32>
    %182 = vector.shape_cast %181 : vector<2xf32> to vector<2x1xf32>
    %cst_44 = arith.constant 0.176776692 : f32
    %183 = vector.broadcast %cst_44 : f32 to vector<2x1xf32>
    %184 = arith.mulf %182, %183 : vector<2x1xf32>
    %185 = arith.mulf %165, %171 : vector<2x32xf32>
    %cst_45 = arith.constant dense<0.000000e+00> : vector<2xf32>
    %186 = vector.multi_reduction <add>, %185, %cst_45 [1] : vector<2x32xf32> to vector<2xf32>
    %187 = vector.shape_cast %186 : vector<2xf32> to vector<2x1xf32>
    %cst_46 = arith.constant 0.176776692 : f32
    %188 = vector.broadcast %cst_46 : f32 to vector<2x1xf32>
    %189 = arith.mulf %187, %188 : vector<2x1xf32>
    %190 = arith.maximumf %184, %189 : vector<2x1xf32>
    %191 = arith.subf %184, %190 : vector<2x1xf32>
    %192 = math.exp %191 : vector<2x1xf32>
    %193 = arith.subf %189, %190 : vector<2x1xf32>
    %194 = math.exp %193 : vector<2x1xf32>
    %195 = arith.addf %192, %194 : vector<2x1xf32>
    %cst_47 = arith.constant 1.000000e+00 : f32
    %196 = vector.broadcast %cst_47 : f32 to vector<2x1xf32>
    %197 = arith.divf %196, %195 : vector<2x1xf32>
    %198 = arith.mulf %192, %197 : vector<2x1xf32>
    %199 = vector.broadcast %198 : vector<2x1xf32> to vector<2x32xf32>
    %200 = arith.mulf %199, %175 : vector<2x32xf32>
    %201 = arith.mulf %194, %197 : vector<2x1xf32>
    %202 = vector.broadcast %201 : vector<2x1xf32> to vector<2x32xf32>
    %203 = arith.mulf %202, %179 : vector<2x32xf32>
    %204 = arith.addf %200, %203 : vector<2x32xf32>
    %205 = arith.truncf %204 : vector<2x32xf32> to vector<2x32xbf16>
    %c144 = arith.constant 144 : index
    %c0_48 = arith.constant 0 : index
    %206 = vector.load %arg3[%c144, %c0_48] : memref<256x128xbf16, #tpu.memory_space<vmem>>, vector<32x32xbf16>
    %cst_49 = arith.constant dense<0.000000e+00> : vector<2x32xf32>
    %207 = tpu.matmul %205, %206, %cst_49 {dimension_numbers = #tpu.dot_dimension_numbers<[1], [0], [0], [1], [0, 0, 1, 1], [], []>} : vector<2x32xbf16>, vector<32x32xbf16>, vector<2x32xf32> -> vector<2x32xf32>
    %208 = vector.extract_strided_slice %1 {offsets = [5, 0], sizes = [1, 32], strides = [1, 1]} : vector<16x128xf32> to vector<1x32xf32>
    %209 = vector.broadcast %208 : vector<1x32xf32> to vector<2x32xf32>
    %210 = arith.addf %207, %209 : vector<2x32xf32>
    %211 = arith.truncf %210 : vector<2x32xf32> to vector<2x32xbf16>
    %c176 = arith.constant 176 : index
    %c0_50 = arith.constant 0 : index
    %212 = vector.load %arg3[%c176, %c0_50] : memref<256x128xbf16, #tpu.memory_space<vmem>>, vector<32x16xbf16>
    %cst_51 = arith.constant dense<0.000000e+00> : vector<2x16xf32>
    %213 = tpu.matmul %211, %212, %cst_51 {dimension_numbers = #tpu.dot_dimension_numbers<[1], [0], [0], [1], [0, 0, 1, 1], [], []>} : vector<2x32xbf16>, vector<32x16xbf16>, vector<2x16xf32> -> vector<2x16xf32>
    %214 = vector.extract_strided_slice %1 {offsets = [6, 0], sizes = [1, 16], strides = [1, 1]} : vector<16x128xf32> to vector<1x16xf32>
    %215 = vector.broadcast %214 : vector<1x16xf32> to vector<2x16xf32>
    %216 = arith.addf %213, %215 : vector<2x16xf32>
    %cst_52 = arith.constant 0.000000e+00 : f32
    %217 = vector.broadcast %cst_52 : f32 to vector<2x16xf32>
    %218 = arith.cmpf ogt, %216, %217 : vector<2x16xf32>
    %cst_53 = arith.constant 0.00999999977 : f32
    %219 = vector.broadcast %cst_53 : f32 to vector<2x16xf32>
    %220 = arith.mulf %219, %216 : vector<2x16xf32>
    %221 = arith.select %218, %216, %220 : vector<2x16xi1>, vector<2x16xf32>
    %222 = arith.truncf %221 : vector<2x16xf32> to vector<2x16xbf16>
    %c208 = arith.constant 208 : index
    %c0_54 = arith.constant 0 : index
    %223 = vector.load %arg3[%c208, %c0_54] : memref<256x128xbf16, #tpu.memory_space<vmem>>, vector<16x16xbf16>
    %cst_55 = arith.constant dense<0.000000e+00> : vector<2x16xf32>
    %224 = tpu.matmul %222, %223, %cst_55 {dimension_numbers = #tpu.dot_dimension_numbers<[1], [0], [0], [1], [0, 0, 1, 1], [], []>} : vector<2x16xbf16>, vector<16x16xbf16>, vector<2x16xf32> -> vector<2x16xf32>
    %225 = vector.extract_strided_slice %1 {offsets = [7, 0], sizes = [1, 16], strides = [1, 1]} : vector<16x128xf32> to vector<1x16xf32>
    %226 = vector.broadcast %225 : vector<1x16xf32> to vector<2x16xf32>
    %227 = arith.addf %224, %226 : vector<2x16xf32>
    %cst_56 = arith.constant 0.000000e+00 : f32
    %228 = vector.broadcast %cst_56 : f32 to vector<2x16xf32>
    %229 = arith.cmpf ogt, %227, %228 : vector<2x16xf32>
    %cst_57 = arith.constant 0.00999999977 : f32
    %230 = vector.broadcast %cst_57 : f32 to vector<2x16xf32>
    %231 = arith.mulf %230, %227 : vector<2x16xf32>
    %232 = arith.select %229, %227, %231 : vector<2x16xi1>, vector<2x16xf32>
    %233 = arith.truncf %232 : vector<2x16xf32> to vector<2x16xbf16>
    %c224 = arith.constant 224 : index
    %c0_58 = arith.constant 0 : index
    %234 = vector.load %arg3[%c224, %c0_58] : memref<256x128xbf16, #tpu.memory_space<vmem>>, vector<16x3xbf16>
    %cst_59 = arith.constant dense<0.000000e+00> : vector<2x3xf32>
    %235 = tpu.matmul %233, %234, %cst_59 {dimension_numbers = #tpu.dot_dimension_numbers<[1], [0], [0], [1], [0, 0, 1, 1], [], []>} : vector<2x16xbf16>, vector<16x3xbf16>, vector<2x3xf32> -> vector<2x3xf32>
    %236 = vector.extract_strided_slice %1 {offsets = [8, 0], sizes = [1, 3], strides = [1, 1]} : vector<16x128xf32> to vector<1x3xf32>
    %237 = vector.broadcast %236 : vector<1x3xf32> to vector<2x3xf32>
    %238 = arith.addf %235, %237 : vector<2x3xf32>
    %cst_60 = arith.constant dense<0xFF800000> : vector<3xf32>
    %239 = vector.multi_reduction <maximumf>, %238, %cst_60 [0] : vector<2x3xf32> to vector<3xf32>
    %240 = vector.shape_cast %239 : vector<3xf32> to vector<1x3xf32>
    %241 = vector.broadcast %240 : vector<1x3xf32> to vector<2x3xf32>
    %242 = arith.subf %238, %241 : vector<2x3xf32>
    %243 = math.exp %242 : vector<2x3xf32>
    %cst_61 = arith.constant dense<0.000000e+00> : vector<3xf32>
    %244 = vector.multi_reduction <add>, %243, %cst_61 [0] : vector<2x3xf32> to vector<3xf32>
    %245 = vector.shape_cast %244 : vector<3xf32> to vector<1x3xf32>
    %246 = vector.broadcast %245 : vector<1x3xf32> to vector<2x3xf32>
    %247 = arith.divf %243, %246 : vector<2x3xf32>
    %c0_62 = arith.constant 0 : index
    %c0_63 = arith.constant 0 : index
    %248 = vector.load %arg4[%c0_62, %c0_63] : memref<2x3xf32, #tpu.memory_space<vmem>>, vector<2x3xf32>
    tpu.vector_store %arg4[%c0_62, %c0_63], %247 {strides = array<i32>} : memref<2x3xf32, #tpu.memory_space<vmem>>, vector<2x3xf32>,
    return
  }
}

</mosaic_0001>

<llo_original>
// kernel: model_forward.1
$region0: #{model_forward.1}
  #allocation0 [shape = 'u32[]', space=smem, size = 0x4, offset = 0x4, fixed_abs, tag = 'smem constant byte address 0x4 - core index']
  #allocation1 [shape = 'u32[144,128]{1,0:T(1,128)}', space=vmem, size = 0x12000, scoped, tag = 'internal scratch']
  %s0 = inlined_call_operand.vmem [shape: bf16[2048,27], index: 0, kind: input, shape index: {}]
  %s1 = inlined_call_operand.vmem [shape: bf16[8,8], index: 1, kind: input, shape index: {}]
  %s2 = inlined_call_operand.vmem [shape: bf16[112,256], index: 2, kind: input, shape index: {}]
  %s3 = inlined_call_operand.vmem [shape: bf16[256,128], index: 3, kind: input, shape index: {}]
  %s4 = inlined_call_operand.hbm [shape: f32[2,3], index: 4, kind: output, shape index: {}]
  %s5 = sld [smem:[#allocation0]]
  $region26: #{model_forward.1} parent=0
    _
  %s7 = ssub.s32 1, %s5
  %s8 = scalar_select 0, %s7, %s5
  $region1: #{model_forward.1} parent=0
    #allocation2 [shape = 'u8[1024]{0}', space=vmem, size = 0x400, scoped, tag = 'output window, operand 0, single buffered']
    #allocation3 [shape = 's32[1]{0}', space=sflag, size = 0x4, scoped, tag = 'scoped memory for model_forward.1']
    %9 = vsyncpa [#allocation3], 0
    // Predicated region
    $region2: #{model_forward.1} parent=1 // pred_check
      _
    $region3: #{model_forward.1} parent=1 // pred_check_branch
      %11 = sbr.rel (0) target = $region5
    $region4: #{model_forward.1} parent=1 // pred_region
      _
    $region5: #{model_forward.1} parent=1 // pred_fallthru
      _
    // Predicated region
    $region6: #{model_forward.1} parent=1 // pred_check
      _
    $region7: #{model_forward.1} parent=1 // pred_check_branch
      %13 = sbr.rel (0) target = $region9
    $region8: #{model_forward.1} parent=1 // pred_region
      _
    $region9: #{model_forward.1} parent=1 // pred_fallthru
      _
    // Predicated region
    $region10: #{model_forward.1} parent=1 // pred_check
      _
    $region11: #{model_forward.1} parent=1 // pred_check_branch
      %15 = sbr.rel (0) target = $region13
    $region12: #{model_forward.1} parent=1 // pred_region
      _
    $region13: #{model_forward.1} parent=1 // pred_fallthru
      _
    // Predicated region
    $region14: #{model_forward.1} parent=1 // pred_check
      _
    $region15: #{model_forward.1} parent=1 // pred_check_branch
      %17 = sbr.rel (0) target = $region17
    $region16: #{model_forward.1} parent=1 // pred_region
      _
    $region17: #{model_forward.1} parent=1 // pred_fallthru
      _
    %v19 = vld [vmem:[%s3 + $0x78] sm:$0xf]
    %v20 = vld [vmem:[%s3 + $0x7c] sm:$0xf]
    %v21 = vunpack.c.l.bf16 %v19
    %v22 = vunpack.c.l.bf16 %v20
    %v23 = vld [vmem:[%s0] sm:$0xf]
    %v24 = vld [vmem:[%s0 + $0x4] sm:$0xf]
    %v25 = vld [vmem:[%s0 + $0x8] sm:$0xf]
    %v26 = vld [vmem:[%s0 + $0xc] sm:$0xf]
    %v27 = vld [vmem:[%s0 + $0x10] sm:$0xf]
    %v28 = vld [vmem:[%s0 + $0x14] sm:$0xf]
    %v29 = vld [vmem:[%s0 + $0x18] sm:$0xf]
    %v30 = vld [vmem:[%s0 + $0x1c] sm:$0xf]
    %v31 = vld [vmem:[%s0 + $0x20] sm:$0xf]
    %v32 = vld [vmem:[%s0 + $0x24] sm:$0xf]
    %v33 = vld [vmem:[%s0 + $0x28] sm:$0xf]
    %v34 = vld [vmem:[%s0 + $0x2c] sm:$0xf]
    %v35 = vld [vmem:[%s0 + $0x30] sm:$0xf]
    %v36 = vld [vmem:[%s0 + $0x34] sm:$0xf]
    %v37 = vld [vmem:[%s0 + $0x38] sm:$0xf]
    %v38 = vld [vmem:[%s0 + $0x3c] sm:$0xf]
    %v39 = vld [vmem:[%s0 + $0x40] sm:$0xf]
    %v40 = vld [vmem:[%s0 + $0x44] sm:$0xf]
    %v41 = vld [vmem:[%s0 + $0x48] sm:$0xf]
    %v42 = vld [vmem:[%s0 + $0x4c] sm:$0xf]
    %v43 = vld [vmem:[%s0 + $0x50] sm:$0xf]
    %v44 = vld [vmem:[%s0 + $0x54] sm:$0xf]
    %v45 = vld [vmem:[%s0 + $0x58] sm:$0xf]
    %v46 = vld [vmem:[%s0 + $0x5c] sm:$0xf]
    %v47 = vld [vmem:[%s0 + $0x60] sm:$0xf]
    %v48 = vld [vmem:[%s0 + $0x64] sm:$0xf]
    %v49 = vld [vmem:[%s0 + $0x68] sm:$0xf]
    %v50 = vld [vmem:[%s0 + $0x6c] sm:$0xf]
    %v51 = vld [vmem:[%s0 + $0x70] sm:$0xf]
    %v52 = vld [vmem:[%s0 + $0x74] sm:$0xf]
    %v53 = vld [vmem:[%s0 + $0x78] sm:$0xf]
    %v54 = vld [vmem:[%s0 + $0x7c] sm:$0xf]
    %v55 = vld [vmem:[%s0 + $0x80] sm:$0xf]
    %v56 = vld [vmem:[%s0 + $0x84] sm:$0xf]
    %v57 = vld [vmem:[%s0 + $0x88] sm:$0xf]
    %v58 = vld [vmem:[%s0 + $0x8c] sm:$0xf]
    %v59 = vld [vmem:[%s0 + $0x90] sm:$0xf]
    %v60 = vld [vmem:[%s0 + $0x94] sm:$0xf]
    %v61 = vld [vmem:[%s0 + $0x98] sm:$0xf]
    %v62 = vld [vmem:[%s0 + $0x9c] sm:$0xf]
    %v63 = vld [vmem:[%s0 + $0xa0] sm:$0xf]
    %v64 = vld [vmem:[%s0 + $0xa4] sm:$0xf]
    %v65 = vld [vmem:[%s0 + $0xa8] sm:$0xf]
    %v66 = vld [vmem:[%s0 + $0xac] sm:$0xf]
    %v67 = vld [vmem:[%s0 + $0xb0] sm:$0xf]
    %v68 = vld [vmem:[%s0 + $0xb4] sm:$0xf]
    %v69 = vld [vmem:[%s0 + $0xb8] sm:$0xf]
    %v70 = vld [vmem:[%s0 + $0xbc] sm:$0xf]
    %v71 = vld [vmem:[%s0 + $0xc0] sm:$0xf]
    %v72 = vld [vmem:[%s0 + $0xc4] sm:$0xf]
    %v73 = vld [vmem:[%s0 + $0xc8] sm:$0xf]
    %v74 = vld [vmem:[%s0 + $0xcc] sm:$0xf]
    %v75 = vld [vmem:[%s0 + $0xd0] sm:$0xf]
    %v76 = vld [vmem:[%s0 + $0xd4] sm:$0xf]
    %v77 = vld [vmem:[%s0 + $0xd8] sm:$0xf]
    %v78 = vld [vmem:[%s0 + $0xdc] sm:$0xf]
    %v79 = vld [vmem:[%s0 + $0xe0] sm:$0xf]
    %v80 = vld [vmem:[%s0 + $0xe4] sm:$0xf]
    %v81 = vld [vmem:[%s0 + $0xe8] sm:$0xf]
    %v82 = vld [vmem:[%s0 + $0xec] sm:$0xf]
    %v83 = vld [vmem:[%s0 + $0xf0] sm:$0xf]
    %v84 = vld [vmem:[%s0 + $0xf4] sm:$0xf]
    %v85 = vld [vmem:[%s0 + $0xf8] sm:$0xf]
    %v86 = vld [vmem:[%s0 + $0xfc] sm:$0xf]
    %v87 = vld [vmem:[%s0 + $0x100] sm:$0xf]
    %v88 = vld [vmem:[%s0 + $0x104] sm:$0xf]
    %v89 = vld [vmem:[%s0 + $0x108] sm:$0xf]
    %v90 = vld [vmem:[%s0 + $0x10c] sm:$0xf]
    %v91 = vld [vmem:[%s0 + $0x110] sm:$0xf]
    %v92 = vld [vmem:[%s0 + $0x114] sm:$0xf]
    %v93 = vld [vmem:[%s0 + $0x118] sm:$0xf]
    %v94 = vld [vmem:[%s0 + $0x11c] sm:$0xf]
    %v95 = vld [vmem:[%s0 + $0x120] sm:$0xf]
    %v96 = vld [vmem:[%s0 + $0x124] sm:$0xf]
    %v97 = vld [vmem:[%s0 + $0x128] sm:$0xf]
    %v98 = vld [vmem:[%s0 + $0x12c] sm:$0xf]
    %v99 = vld [vmem:[%s0 + $0x130] sm:$0xf]
    %v100 = vld [vmem:[%s0 + $0x134] sm:$0xf]
    %v101 = vld [vmem:[%s0 + $0x138] sm:$0xf]
    %v102 = vld [vmem:[%s0 + $0x13c] sm:$0xf]
    %v103 = vld [vmem:[%s0 + $0x140] sm:$0xf]
    %v104 = vld [vmem:[%s0 + $0x144] sm:$0xf]
    %v105 = vld [vmem:[%s0 + $0x148] sm:$0xf]
    %v106 = vld [vmem:[%s0 + $0x14c] sm:$0xf]
    %v107 = vld [vmem:[%s0 + $0x150] sm:$0xf]
    %v108 = vld [vmem:[%s0 + $0x154] sm:$0xf]
    %v109 = vld [vmem:[%s0 + $0x158] sm:$0xf]
    %v110 = vld [vmem:[%s0 + $0x15c] sm:$0xf]
    %v111 = vld [vmem:[%s0 + $0x160] sm:$0xf]
    %v112 = vld [vmem:[%s0 + $0x164] sm:$0xf]
    %v113 = vld [vmem:[%s0 + $0x168] sm:$0xf]
    %v114 = vld [vmem:[%s0 + $0x16c] sm:$0xf]
    %v115 = vld [vmem:[%s0 + $0x170] sm:$0xf]
    %v116 = vld [vmem:[%s0 + $0x174] sm:$0xf]
    %v117 = vld [vmem:[%s0 + $0x178] sm:$0xf]
    %v118 = vld [vmem:[%s0 + $0x17c] sm:$0xf]
    %v119 = vld [vmem:[%s0 + $0x180] sm:$0xf]
    %v120 = vld [vmem:[%s0 + $0x184] sm:$0xf]
    %v121 = vld [vmem:[%s0 + $0x188] sm:$0xf]
    %v122 = vld [vmem:[%s0 + $0x18c] sm:$0xf]
    %v123 = vld [vmem:[%s0 + $0x190] sm:$0xf]
    %v124 = vld [vmem:[%s0 + $0x194] sm:$0xf]
    %v125 = vld [vmem:[%s0 + $0x198] sm:$0xf]
    %v126 = vld [vmem:[%s0 + $0x19c] sm:$0xf]
    %v127 = vld [vmem:[%s0 + $0x1a0] sm:$0xf]
    %v128 = vld [vmem:[%s0 + $0x1a4] sm:$0xf]
    %v129 = vld [vmem:[%s0 + $0x1a8] sm:$0xf]
    %v130 = vld [vmem:[%s0 + $0x1ac] sm:$0xf]
    %v131 = vld [vmem:[%s0 + $0x1b0] sm:$0xf]
    %v132 = vld [vmem:[%s0 + $0x1b4] sm:$0xf]
    %v133 = vld [vmem:[%s0 + $0x1b8] sm:$0xf]
    %v134 = vld [vmem:[%s0 + $0x1bc] sm:$0xf]
    %v135 = vld [vmem:[%s0 + $0x1c0] sm:$0xf]
    %v136 = vld [vmem:[%s0 + $0x1c4] sm:$0xf]
    %v137 = vld [vmem:[%s0 + $0x1c8] sm:$0xf]
    %v138 = vld [vmem:[%s0 + $0x1cc] sm:$0xf]
    %v139 = vld [vmem:[%s0 + $0x1d0] sm:$0xf]
    %v140 = vld [vmem:[%s0 + $0x1d4] sm:$0xf]
    %v141 = vld [vmem:[%s0 + $0x1d8] sm:$0xf]
    %v142 = vld [vmem:[%s0 + $0x1dc] sm:$0xf]
    %v143 = vld [vmem:[%s0 + $0x1e0] sm:$0xf]
    %v144 = vld [vmem:[%s0 + $0x1e4] sm:$0xf]
    %v145 = vld [vmem:[%s0 + $0x1e8] sm:$0xf]
    %v146 = vld [vmem:[%s0 + $0x1ec] sm:$0xf]
    %v147 = vld [vmem:[%s0 + $0x1f0] sm:$0xf]
    %v148 = vld [vmem:[%s0 + $0x1f4] sm:$0xf]
    %v149 = vld [vmem:[%s0 + $0x1f8] sm:$0xf]
    %v150 = vld [vmem:[%s0 + $0x1fc] sm:$0xf]
    %v151 = vld [vmem:[%s0 + $0x200] sm:$0xf]
    %v152 = vld [vmem:[%s0 + $0x204] sm:$0xf]
    %v153 = vld [vmem:[%s0 + $0x208] sm:$0xf]
    %v154 = vld [vmem:[%s0 + $0x20c] sm:$0xf]
    %v155 = vld [vmem:[%s0 + $0x210] sm:$0xf]
    %v156 = vld [vmem:[%s0 + $0x214] sm:$0xf]
    %v157 = vld [vmem:[%s0 + $0x218] sm:$0xf]
    %v158 = vld [vmem:[%s0 + $0x21c] sm:$0xf]
    %v159 = vld [vmem:[%s0 + $0x220] sm:$0xf]
    %v160 = vld [vmem:[%s0 + $0x224] sm:$0xf]
    %v161 = vld [vmem:[%s0 + $0x228] sm:$0xf]
    %v162 = vld [vmem:[%s0 + $0x22c] sm:$0xf]
    %v163 = vld [vmem:[%s0 + $0x230] sm:$0xf]
    %v164 = vld [vmem:[%s0 + $0x234] sm:$0xf]
    %v165 = vld [vmem:[%s0 + $0x238] sm:$0xf]
    %v166 = vld [vmem:[%s0 + $0x23c] sm:$0xf]
    %v167 = vld [vmem:[%s0 + $0x240] sm:$0xf]
    %v168 = vld [vmem:[%s0 + $0x244] sm:$0xf]
    %v169 = vld [vmem:[%s0 + $0x248] sm:$0xf]
    %v170 = vld [vmem:[%s0 + $0x24c] sm:$0xf]
    %v171 = vld [vmem:[%s0 + $0x250] sm:$0xf]
    %v172 = vld [vmem:[%s0 + $0x254] sm:$0xf]
    %v173 = vld [vmem:[%s0 + $0x258] sm:$0xf]
    %v174 = vld [vmem:[%s0 + $0x25c] sm:$0xf]
    %v175 = vld [vmem:[%s0 + $0x260] sm:$0xf]
    %v176 = vld [vmem:[%s0 + $0x264] sm:$0xf]
    %v177 = vld [vmem:[%s0 + $0x268] sm:$0xf]
    %v178 = vld [vmem:[%s0 + $0x26c] sm:$0xf]
    %v179 = vld [vmem:[%s0 + $0x270] sm:$0xf]
    %v180 = vld [vmem:[%s0 + $0x274] sm:$0xf]
    %v181 = vld [vmem:[%s0 + $0x278] sm:$0xf]
    %v182 = vld [vmem:[%s0 + $0x27c] sm:$0xf]
    %v183 = vld [vmem:[%s0 + $0x280] sm:$0xf]
    %v184 = vld [vmem:[%s0 + $0x284] sm:$0xf]
    %v185 = vld [vmem:[%s0 + $0x288] sm:$0xf]
    %v186 = vld [vmem:[%s0 + $0x28c] sm:$0xf]
    %v187 = vld [vmem:[%s0 + $0x290] sm:$0xf]
    %v188 = vld [vmem:[%s0 + $0x294] sm:$0xf]
    %v189 = vld [vmem:[%s0 + $0x298] sm:$0xf]
    %v190 = vld [vmem:[%s0 + $0x29c] sm:$0xf]
    %v191 = vld [vmem:[%s0 + $0x2a0] sm:$0xf]
    %v192 = vld [vmem:[%s0 + $0x2a4] sm:$0xf]
    %v193 = vld [vmem:[%s0 + $0x2a8] sm:$0xf]
    %v194 = vld [vmem:[%s0 + $0x2ac] sm:$0xf]
    %v195 = vld [vmem:[%s0 + $0x2b0] sm:$0xf]
    %v196 = vld [vmem:[%s0 + $0x2b4] sm:$0xf]
    %v197 = vld [vmem:[%s0 + $0x2b8] sm:$0xf]
    %v198 = vld [vmem:[%s0 + $0x2bc] sm:$0xf]
    %v199 = vld [vmem:[%s0 + $0x2c0] sm:$0xf]
    %v200 = vld [vmem:[%s0 + $0x2c4] sm:$0xf]
    %v201 = vld [vmem:[%s0 + $0x2c8] sm:$0xf]
    %v202 = vld [vmem:[%s0 + $0x2cc] sm:$0xf]
    %v203 = vld [vmem:[%s0 + $0x2d0] sm:$0xf]
    %v204 = vld [vmem:[%s0 + $0x2d4] sm:$0xf]
    %v205 = vld [vmem:[%s0 + $0x2d8] sm:$0xf]
    %v206 = vld [vmem:[%s0 + $0x2dc] sm:$0xf]
    %v207 = vld [vmem:[%s0 + $0x2e0] sm:$0xf]
    %v208 = vld [vmem:[%s0 + $0x2e4] sm:$0xf]
    %v209 = vld [vmem:[%s0 + $0x2e8] sm:$0xf]
    %v210 = vld [vmem:[%s0 + $0x2ec] sm:$0xf]
    %v211 = vld [vmem:[%s0 + $0x2f0] sm:$0xf]
    %v212 = vld [vmem:[%s0 + $0x2f4] sm:$0xf]
    %v213 = vld [vmem:[%s0 + $0x2f8] sm:$0xf]
    %v214 = vld [vmem:[%s0 + $0x2fc] sm:$0xf]
    %v215 = vld [vmem:[%s0 + $0x300] sm:$0xf]
    %v216 = vld [vmem:[%s0 + $0x304] sm:$0xf]
    %v217 = vld [vmem:[%s0 + $0x308] sm:$0xf]
    %v218 = vld [vmem:[%s0 + $0x30c] sm:$0xf]
    %v219 = vld [vmem:[%s0 + $0x310] sm:$0xf]
    %v220 = vld [vmem:[%s0 + $0x314] sm:$0xf]
    %v221 = vld [vmem:[%s0 + $0x318] sm:$0xf]
    %v222 = vld [vmem:[%s0 + $0x31c] sm:$0xf]
    %v223 = vld [vmem:[%s0 + $0x320] sm:$0xf]
    %v224 = vld [vmem:[%s0 + $0x324] sm:$0xf]
    %v225 = vld [vmem:[%s0 + $0x328] sm:$0xf]
    %v226 = vld [vmem:[%s0 + $0x32c] sm:$0xf]
    %v227 = vld [vmem:[%s0 + $0x330] sm:$0xf]
    %v228 = vld [vmem:[%s0 + $0x334] sm:$0xf]
    %v229 = vld [vmem:[%s0 + $0x338] sm:$0xf]
    %v230 = vld [vmem:[%s0 + $0x33c] sm:$0xf]
    %v231 = vld [vmem:[%s0 + $0x340] sm:$0xf]
    %v232 = vld [vmem:[%s0 + $0x344] sm:$0xf]
    %v233 = vld [vmem:[%s0 + $0x348] sm:$0xf]
    %v234 = vld [vmem:[%s0 + $0x34c] sm:$0xf]
    %v235 = vld [vmem:[%s0 + $0x350] sm:$0xf]
    %v236 = vld [vmem:[%s0 + $0x354] sm:$0xf]
    %v237 = vld [vmem:[%s0 + $0x358] sm:$0xf]
    %v238 = vld [vmem:[%s0 + $0x35c] sm:$0xf]
    %v239 = vld [vmem:[%s0 + $0x360] sm:$0xf]
    %v240 = vld [vmem:[%s0 + $0x364] sm:$0xf]
    %v241 = vld [vmem:[%s0 + $0x368] sm:$0xf]
    %v242 = vld [vmem:[%s0 + $0x36c] sm:$0xf]
    %v243 = vld [vmem:[%s0 + $0x370] sm:$0xf]
    %v244 = vld [vmem:[%s0 + $0x374] sm:$0xf]
    %v245 = vld [vmem:[%s0 + $0x378] sm:$0xf]
    %v246 = vld [vmem:[%s0 + $0x37c] sm:$0xf]
    %v247 = vld [vmem:[%s0 + $0x380] sm:$0xf]
    %v248 = vld [vmem:[%s0 + $0x384] sm:$0xf]
    %v249 = vld [vmem:[%s0 + $0x388] sm:$0xf]
    %v250 = vld [vmem:[%s0 + $0x38c] sm:$0xf]
    %v251 = vld [vmem:[%s0 + $0x390] sm:$0xf]
    %v252 = vld [vmem:[%s0 + $0x394] sm:$0xf]
    %v253 = vld [vmem:[%s0 + $0x398] sm:$0xf]
    %v254 = vld [vmem:[%s0 + $0x39c] sm:$0xf]
    %v255 = vld [vmem:[%s0 + $0x3a0] sm:$0xf]
    %v256 = vld [vmem:[%s0 + $0x3a4] sm:$0xf]
    %v257 = vld [vmem:[%s0 + $0x3a8] sm:$0xf]
    %v258 = vld [vmem:[%s0 + $0x3ac] sm:$0xf]
    %v259 = vld [vmem:[%s0 + $0x3b0] sm:$0xf]
    %v260 = vld [vmem:[%s0 + $0x3b4] sm:$0xf]
    %v261 = vld [vmem:[%s0 + $0x3b8] sm:$0xf]
    %v262 = vld [vmem:[%s0 + $0x3bc] sm:$0xf]
    %v263 = vld [vmem:[%s0 + $0x3c0] sm:$0xf]
    %v264 = vld [vmem:[%s0 + $0x3c4] sm:$0xf]
    %v265 = vld [vmem:[%s0 + $0x3c8] sm:$0xf]
    %v266 = vld [vmem:[%s0 + $0x3cc] sm:$0xf]
    %v267 = vld [vmem:[%s0 + $0x3d0] sm:$0xf]
    %v268 = vld [vmem:[%s0 + $0x3d4] sm:$0xf]
    %v269 = vld [vmem:[%s0 + $0x3d8] sm:$0xf]
    %v270 = vld [vmem:[%s0 + $0x3dc] sm:$0xf]
    %v271 = vld [vmem:[%s0 + $0x3e0] sm:$0xf]
    %v272 = vld [vmem:[%s0 + $0x3e4] sm:$0xf]
    %v273 = vld [vmem:[%s0 + $0x3e8] sm:$0xf]
    %v274 = vld [vmem:[%s0 + $0x3ec] sm:$0xf]
    %v275 = vld [vmem:[%s0 + $0x3f0] sm:$0xf]
    %v276 = vld [vmem:[%s0 + $0x3f4] sm:$0xf]
    %v277 = vld [vmem:[%s0 + $0x3f8] sm:$0xf]
    %v278 = vld [vmem:[%s0 + $0x3fc] sm:$0xf]
    %v279 = vld [vmem:[%s3] sm:$0xf]
    %v280 = vld [vmem:[%s3 + $0x4] sm:$0xf]
    %v281 = vld [vmem:[%s3 + $0x8] sm:$0xf]
    %v282 = vld [vmem:[%s3 + $0xc] sm:$0x3]
    %v283 = vlaneseq
    %v284 = vshrl.u32 %v283, 7
    %v285 = vsub.s32 0, %v284
    %v286 = vrot.slane %v21, %v285
    %v543 = vunpack.c.l.b16 %v23
    %v544 = vunpack.c.l.b16 %v24
    %v545 = vunpack.c.l.b16 %v25
    %v546 = vunpack.c.l.b16 %v26
    %v547 = vunpack.c.l.b16 %v27
    %v548 = vunpack.c.l.b16 %v28
    %v549 = vunpack.c.l.b16 %v29
    %v550 = vunpack.c.l.b16 %v30
    %v551 = vunpack.c.l.b16 %v31
    %v552 = vunpack.c.l.b16 %v32
    %v553 = vunpack.c.l.b16 %v33
    %v554 = vunpack.c.l.b16 %v34
    %v555 = vunpack.c.l.b16 %v35
    %v556 = vunpack.c.l.b16 %v36
    %v557 = vunpack.c.l.b16 %v37
    %v558 = vunpack.c.l.b16 %v38
    %v559 = vunpack.c.l.b16 %v39
    %v560 = vunpack.c.l.b16 %v40
    %v561 = vunpack.c.l.b16 %v41
    %v562 = vunpack.c.l.b16 %v42
    %v563 = vunpack.c.l.b16 %v43
    %v564 = vunpack.c.l.b16 %v44
    %v565 = vunpack.c.l.b16 %v45
    %v566 = vunpack.c.l.b16 %v46
    %v567 = vunpack.c.l.b16 %v47
    %v568 = vunpack.c.l.b16 %v48
    %v569 = vunpack.c.l.b16 %v49
    %v570 = vunpack.c.l.b16 %v50
    %v571 = vunpack.c.l.b16 %v51
    %v572 = vunpack.c.l.b16 %v52
    %v573 = vunpack.c.l.b16 %v53
    %v574 = vunpack.c.l.b16 %v54
    %v575 = vunpack.c.l.b16 %v55
    %v576 = vunpack.c.l.b16 %v56
    %v577 = vunpack.c.l.b16 %v57
    %v578 = vunpack.c.l.b16 %v58
    %v579 = vunpack.c.l.b16 %v59
    %v580 = vunpack.c.l.b16 %v60
    %v581 = vunpack.c.l.b16 %v61
    %v582 = vunpack.c.l.b16 %v62
    %v583 = vunpack.c.l.b16 %v63
    %v584 = vunpack.c.l.b16 %v64
    %v585 = vunpack.c.l.b16 %v65
    %v586 = vunpack.c.l.b16 %v66
    %v587 = vunpack.c.l.b16 %v67
    %v588 = vunpack.c.l.b16 %v68
    %v589 = vunpack.c.l.b16 %v69
    %v590 = vunpack.c.l.b16 %v70
    %v591 = vunpack.c.l.b16 %v71
    %v592 = vunpack.c.l.b16 %v72
    %v593 = vunpack.c.l.b16 %v73
    %v594 = vunpack.c.l.b16 %v74
    %v595 = vunpack.c.l.b16 %v75
    %v596 = vunpack.c.l.b16 %v76
    %v597 = vunpack.c.l.b16 %v77
    %v598 = vunpack.c.l.b16 %v78
    %v599 = vunpack.c.l.b16 %v79
    %v600 = vunpack.c.l.b16 %v80
    %v601 = vunpack.c.l.b16 %v81
    %v602 = vunpack.c.l.b16 %v82
    %v603 = vunpack.c.l.b16 %v83
    %v604 = vunpack.c.l.b16 %v84
    %v605 = vunpack.c.l.b16 %v85
    %v606 = vunpack.c.l.b16 %v86
    %v607 = vunpack.c.l.b16 %v87
    %v608 = vunpack.c.l.b16 %v88
    %v609 = vunpack.c.l.b16 %v89
    %v610 = vunpack.c.l.b16 %v90
    %v611 = vunpack.c.l.b16 %v91
    %v612 = vunpack.c.l.b16 %v92
    %v613 = vunpack.c.l.b16 %v93
    %v614 = vunpack.c.l.b16 %v94
    %v615 = vunpack.c.l.b16 %v95
    %v616 = vunpack.c.l.b16 %v96
    %v617 = vunpack.c.l.b16 %v97
    %v618 = vunpack.c.l.b16 %v98
    %v619 = vunpack.c.l.b16 %v99
    %v620 = vunpack.c.l.b16 %v100
    %v621 = vunpack.c.l.b16 %v101
    %v622 = vunpack.c.l.b16 %v102
    %v623 = vunpack.c.l.b16 %v103
    %v624 = vunpack.c.l.b16 %v104
    %v625 = vunpack.c.l.b16 %v105
    %v626 = vunpack.c.l.b16 %v106
    %v627 = vunpack.c.l.b16 %v107
    %v628 = vunpack.c.l.b16 %v108
    %v629 = vunpack.c.l.b16 %v109
    %v630 = vunpack.c.l.b16 %v110
    %v631 = vunpack.c.l.b16 %v111
    %v632 = vunpack.c.l.b16 %v112
    %v633 = vunpack.c.l.b16 %v113
    %v634 = vunpack.c.l.b16 %v114
    %v635 = vunpack.c.l.b16 %v115
    %v636 = vunpack.c.l.b16 %v116
    %v637 = vunpack.c.l.b16 %v117
    %v638 = vunpack.c.l.b16 %v118
    %v639 = vunpack.c.l.b16 %v119
    %v640 = vunpack.c.l.b16 %v120
    %v641 = vunpack.c.l.b16 %v121
    %v642 = vunpack.c.l.b16 %v122
    %v643 = vunpack.c.l.b16 %v123
    %v644 = vunpack.c.l.b16 %v124
    %v645 = vunpack.c.l.b16 %v125
    %v646 = vunpack.c.l.b16 %v126
    %v647 = vunpack.c.l.b16 %v127
    %v648 = vunpack.c.l.b16 %v128
    %v649 = vunpack.c.l.b16 %v129
    %v650 = vunpack.c.l.b16 %v130
    %v651 = vunpack.c.l.b16 %v131
    %v652 = vunpack.c.l.b16 %v132
    %v653 = vunpack.c.l.b16 %v133
    %v654 = vunpack.c.l.b16 %v134
    %v655 = vunpack.c.l.b16 %v135
    %v656 = vunpack.c.l.b16 %v136
    %v657 = vunpack.c.l.b16 %v137
    %v658 = vunpack.c.l.b16 %v138
    %v659 = vunpack.c.l.b16 %v139
    %v660 = vunpack.c.l.b16 %v140
    %v661 = vunpack.c.l.b16 %v141
    %v662 = vunpack.c.l.b16 %v142
    %v663 = vunpack.c.l.b16 %v143
    %v664 = vunpack.c.l.b16 %v144
    %v665 = vunpack.c.l.b16 %v145
    %v666 = vunpack.c.l.b16 %v146
    %v667 = vunpack.c.l.b16 %v147
    %v668 = vunpack.c.l.b16 %v148
    %v669 = vunpack.c.l.b16 %v149
    %v670 = vunpack.c.l.b16 %v150
    %v671 = vunpack.c.l.b16 %v151
    %v672 = vunpack.c.l.b16 %v152
    %v673 = vunpack.c.l.b16 %v153
    %v674 = vunpack.c.l.b16 %v154
    %v675 = vunpack.c.l.b16 %v155
    %v676 = vunpack.c.l.b16 %v156
    %v677 = vunpack.c.l.b16 %v157
    %v678 = vunpack.c.l.b16 %v158
    %v679 = vunpack.c.l.b16 %v159
    %v680 = vunpack.c.l.b16 %v160
    %v681 = vunpack.c.l.b16 %v161
    %v682 = vunpack.c.l.b16 %v162
    %v683 = vunpack.c.l.b16 %v163
    %v684 = vunpack.c.l.b16 %v164
    %v685 = vunpack.c.l.b16 %v165
    %v686 = vunpack.c.l.b16 %v166
    %v687 = vunpack.c.l.b16 %v167
    %v688 = vunpack.c.l.b16 %v168
    %v689 = vunpack.c.l.b16 %v169
    %v690 = vunpack.c.l.b16 %v170
    %v691 = vunpack.c.l.b16 %v171
    %v692 = vunpack.c.l.b16 %v172
    %v693 = vunpack.c.l.b16 %v173
    %v694 = vunpack.c.l.b16 %v174
    %v695 = vunpack.c.l.b16 %v175
    %v696 = vunpack.c.l.b16 %v176
    %v697 = vunpack.c.l.b16 %v177
    %v698 = vunpack.c.l.b16 %v178
    %v699 = vunpack.c.l.b16 %v179
    %v700 = vunpack.c.l.b16 %v180
    %v701 = vunpack.c.l.b16 %v181
    %v702 = vunpack.c.l.b16 %v182
    %v703 = vunpack.c.l.b16 %v183
    %v704 = vunpack.c.l.b16 %v184
    %v705 = vunpack.c.l.b16 %v185
    %v706 = vunpack.c.l.b16 %v186
    %v707 = vunpack.c.l.b16 %v187
    %v708 = vunpack.c.l.b16 %v188
    %v709 = vunpack.c.l.b16 %v189
    %v710 = vunpack.c.l.b16 %v190
    %v711 = vunpack.c.l.b16 %v191
    %v712 = vunpack.c.l.b16 %v192
    %v713 = vunpack.c.l.b16 %v193
    %v714 = vunpack.c.l.b16 %v194
    %v715 = vunpack.c.l.b16 %v195
    %v716 = vunpack.c.l.b16 %v196
    %v717 = vunpack.c.l.b16 %v197
    %v718 = vunpack.c.l.b16 %v198
    %v719 = vunpack.c.l.b16 %v199
    %v720 = vunpack.c.l.b16 %v200
    %v721 = vunpack.c.l.b16 %v201
    %v722 = vunpack.c.l.b16 %v202
    %v723 = vunpack.c.l.b16 %v203
    %v724 = vunpack.c.l.b16 %v204
    %v725 = vunpack.c.l.b16 %v205
    %v726 = vunpack.c.l.b16 %v206
    %v727 = vunpack.c.l.b16 %v207
    %v728 = vunpack.c.l.b16 %v208
    %v729 = vunpack.c.l.b16 %v209
    %v730 = vunpack.c.l.b16 %v210
    %v731 = vunpack.c.l.b16 %v211
    %v732 = vunpack.c.l.b16 %v212
    %v733 = vunpack.c.l.b16 %v213
    %v734 = vunpack.c.l.b16 %v214
    %v735 = vunpack.c.l.b16 %v215
    %v736 = vunpack.c.l.b16 %v216
    %v737 = vunpack.c.l.b16 %v217
    %v738 = vunpack.c.l.b16 %v218
    %v739 = vunpack.c.l.b16 %v219
    %v740 = vunpack.c.l.b16 %v220
    %v741 = vunpack.c.l.b16 %v221
    %v742 = vunpack.c.l.b16 %v222
    %v743 = vunpack.c.l.b16 %v223
    %v744 = vunpack.c.l.b16 %v224
    %v745 = vunpack.c.l.b16 %v225
    %v746 = vunpack.c.l.b16 %v226
    %v747 = vunpack.c.l.b16 %v227
    %v748 = vunpack.c.l.b16 %v228
    %v749 = vunpack.c.l.b16 %v229
    %v750 = vunpack.c.l.b16 %v230
    %v751 = vunpack.c.l.b16 %v231
    %v752 = vunpack.c.l.b16 %v232
    %v753 = vunpack.c.l.b16 %v233
    %v754 = vunpack.c.l.b16 %v234
    %v755 = vunpack.c.l.b16 %v235
    %v756 = vunpack.c.l.b16 %v236
    %v757 = vunpack.c.l.b16 %v237
    %v758 = vunpack.c.l.b16 %v238
    %v759 = vunpack.c.l.b16 %v239
    %v760 = vunpack.c.l.b16 %v240
    %v761 = vunpack.c.l.b16 %v241
    %v762 = vunpack.c.l.b16 %v242
    %v763 = vunpack.c.l.b16 %v243
    %v764 = vunpack.c.l.b16 %v244
    %v765 = vunpack.c.l.b16 %v245
    %v766 = vunpack.c.l.b16 %v246
    %v767 = vunpack.c.l.b16 %v247
    %v768 = vunpack.c.l.b16 %v248
    %v769 = vunpack.c.l.b16 %v249
    %v770 = vunpack.c.l.b16 %v250
    %v771 = vunpack.c.l.b16 %v251
    %v772 = vunpack.c.l.b16 %v252
    %v773 = vunpack.c.l.b16 %v253
    %v774 = vunpack.c.l.b16 %v254
    %v775 = vunpack.c.l.b16 %v255
    %v776 = vunpack.c.l.b16 %v256
    %v777 = vunpack.c.l.b16 %v257
    %v778 = vunpack.c.l.b16 %v258
    %v779 = vunpack.c.l.b16 %v259
    %v780 = vunpack.c.l.b16 %v260
    %v781 = vunpack.c.l.b16 %v261
    %v782 = vunpack.c.l.b16 %v262
    %v783 = vunpack.c.l.b16 %v263
    %v784 = vunpack.c.l.b16 %v264
    %v785 = vunpack.c.l.b16 %v265
    %v786 = vunpack.c.l.b16 %v266
    %v787 = vunpack.c.l.b16 %v267
    %v788 = vunpack.c.l.b16 %v268
    %v789 = vunpack.c.l.b16 %v269
    %v790 = vunpack.c.l.b16 %v270
    %v791 = vunpack.c.l.b16 %v271
    %v792 = vunpack.c.l.b16 %v272
    %v793 = vunpack.c.l.b16 %v273
    %v794 = vunpack.c.l.b16 %v274
    %v795 = vunpack.c.l.b16 %v275
    %v796 = vunpack.c.l.b16 %v276
    %v797 = vunpack.c.l.b16 %v277
    %v798 = vunpack.c.l.b16 %v278
    %v799 = vpack.c.b16 %v544, %v543
    %v800 = vpack.c.b16 %v546, %v545
    %v801 = vpack.c.b16 %v548, %v547
    %v802 = vpack.c.b16 %v550, %v549
    %v803 = vpack.c.b16 %v552, %v551
    %v804 = vpack.c.b16 %v554, %v553
    %v805 = vpack.c.b16 %v556, %v555
    %v806 = vpack.c.b16 %v558, %v557
    %v807 = vpack.c.b16 %v560, %v559
    %v808 = vpack.c.b16 %v562, %v561
    %v809 = vpack.c.b16 %v564, %v563
    %v810 = vpack.c.b16 %v566, %v565
    %v811 = vpack.c.b16 %v568, %v567
    %v812 = vpack.c.b16 %v570, %v569
    %v813 = vpack.c.b16 %v572, %v571
    %v814 = vpack.c.b16 %v574, %v573
    %v815 = vpack.c.b16 %v576, %v575
    %v816 = vpack.c.b16 %v578, %v577
    %v817 = vpack.c.b16 %v580, %v579
    %v818 = vpack.c.b16 %v582, %v581
    %v819 = vpack.c.b16 %v584, %v583
    %v820 = vpack.c.b16 %v586, %v585
    %v821 = vpack.c.b16 %v588, %v587
    %v822 = vpack.c.b16 %v590, %v589
    %v823 = vpack.c.b16 %v592, %v591
    %v824 = vpack.c.b16 %v594, %v593
    %v825 = vpack.c.b16 %v596, %v595
    %v826 = vpack.c.b16 %v598, %v597
    %v827 = vpack.c.b16 %v600, %v599
    %v828 = vpack.c.b16 %v602, %v601
    %v829 = vpack.c.b16 %v604, %v603
    %v830 = vpack.c.b16 %v606, %v605
    %v831 = vpack.c.b16 %v608, %v607
    %v832 = vpack.c.b16 %v610, %v609
    %v833 = vpack.c.b16 %v612, %v611
    %v834 = vpack.c.b16 %v614, %v613
    %v835 = vpack.c.b16 %v616, %v615
    %v836 = vpack.c.b16 %v618, %v617
    %v837 = vpack.c.b16 %v620, %v619
    %v838 = vpack.c.b16 %v622, %v621
    %v839 = vpack.c.b16 %v624, %v623
    %v840 = vpack.c.b16 %v626, %v625
    %v841 = vpack.c.b16 %v628, %v627
    %v842 = vpack.c.b16 %v630, %v629
    %v843 = vpack.c.b16 %v632, %v631
    %v844 = vpack.c.b16 %v634, %v633
    %v845 = vpack.c.b16 %v636, %v635
    %v846 = vpack.c.b16 %v638, %v637
    %v847 = vpack.c.b16 %v640, %v639
    %v848 = vpack.c.b16 %v642, %v641
    %v849 = vpack.c.b16 %v644, %v643
    %v850 = vpack.c.b16 %v646, %v645
    %v851 = vpack.c.b16 %v648, %v647
    %v852 = vpack.c.b16 %v650, %v649
    %v853 = vpack.c.b16 %v652, %v651
    %v854 = vpack.c.b16 %v654, %v653
    %v855 = vpack.c.b16 %v656, %v655
    %v856 = vpack.c.b16 %v658, %v657
    %v857 = vpack.c.b16 %v660, %v659
    %v858 = vpack.c.b16 %v662, %v661
    %v859 = vpack.c.b16 %v664, %v663
    %v860 = vpack.c.b16 %v666, %v665
    %v861 = vpack.c.b16 %v668, %v667
    %v862 = vpack.c.b16 %v670, %v669
    %v863 = vpack.c.b16 %v672, %v671
    %v864 = vpack.c.b16 %v674, %v673
    %v865 = vpack.c.b16 %v676, %v675
    %v866 = vpack.c.b16 %v678, %v677
    %v867 = vpack.c.b16 %v680, %v679
    %v868 = vpack.c.b16 %v682, %v681
    %v869 = vpack.c.b16 %v684, %v683
    %v870 = vpack.c.b16 %v686, %v685
    %v871 = vpack.c.b16 %v688, %v687
    %v872 = vpack.c.b16 %v690, %v689
    %v873 = vpack.c.b16 %v692, %v691
    %v874 = vpack.c.b16 %v694, %v693
    %v875 = vpack.c.b16 %v696, %v695
    %v876 = vpack.c.b16 %v698, %v697
    %v877 = vpack.c.b16 %v700, %v699
    %v878 = vpack.c.b16 %v702, %v701
    %v879 = vpack.c.b16 %v704, %v703
    %v880 = vpack.c.b16 %v706, %v705
    %v881 = vpack.c.b16 %v708, %v707
    %v882 = vpack.c.b16 %v710, %v709
    %v883 = vpack.c.b16 %v712, %v711
    %v884 = vpack.c.b16 %v714, %v713
    %v885 = vpack.c.b16 %v716, %v715
    %v886 = vpack.c.b16 %v718, %v717
    %v887 = vpack.c.b16 %v720, %v719
    %v888 = vpack.c.b16 %v722, %v721
    %v889 = vpack.c.b16 %v724, %v723
    %v890 = vpack.c.b16 %v726, %v725
    %v891 = vpack.c.b16 %v728, %v727
    %v892 = vpack.c.b16 %v730, %v729
    %v893 = vpack.c.b16 %v732, %v731
    %v894 = vpack.c.b16 %v734, %v733
    %v895 = vpack.c.b16 %v736, %v735
    %v896 = vpack.c.b16 %v738, %v737
    %v897 = vpack.c.b16 %v740, %v739
    %v898 = vpack.c.b16 %v742, %v741
    %v899 = vpack.c.b16 %v744, %v743
    %v900 = vpack.c.b16 %v746, %v745
    %v901 = vpack.c.b16 %v748, %v747
    %v902 = vpack.c.b16 %v750, %v749
    %v903 = vpack.c.b16 %v752, %v751
    %v904 = vpack.c.b16 %v754, %v753
    %v905 = vpack.c.b16 %v756, %v755
    %v906 = vpack.c.b16 %v758, %v757
    %v907 = vpack.c.b16 %v760, %v759
    %v908 = vpack.c.b16 %v762, %v761
    %v909 = vpack.c.b16 %v764, %v763
    %v910 = vpack.c.b16 %v766, %v765
    %v911 = vpack.c.b16 %v768, %v767
    %v912 = vpack.c.b16 %v770, %v769
    %v913 = vpack.c.b16 %v772, %v771
    %v914 = vpack.c.b16 %v774, %v773
    %v915 = vpack.c.b16 %v776, %v775
    %v916 = vpack.c.b16 %v778, %v777
    %v917 = vpack.c.b16 %v780, %v779
    %v918 = vpack.c.b16 %v782, %v781
    %v919 = vpack.c.b16 %v784, %v783
    %v920 = vpack.c.b16 %v786, %v785
    %v921 = vpack.c.b16 %v788, %v787
    %v922 = vpack.c.b16 %v790, %v789
    %v923 = vpack.c.b16 %v792, %v791
    %v924 = vpack.c.b16 %v794, %v793
    %v925 = vpack.c.b16 %v796, %v795
    %v926 = vpack.c.b16 %v798, %v797
    %v931 = vunpack.c.l.b16 %v279
    %v932 = vunpack.c.l.b16 %v280
    %v933 = vunpack.c.l.b16 %v281
    %v934 = vunpack.c.l.b16 %v282
    %v935 = vpack.c.b16 %v932, %v931
    %v936 = vpack.c.b16 %v934, %v933
    %vm938 = vcmask 220160
    %v940 = vsel %vm938, %v799, 0
    %v943 = vsel %vm938, %v800, 0
    %v946 = vsel %vm938, %v801, 0
    %v949 = vsel %vm938, %v802, 0
    %v952 = vsel %vm938, %v803, 0
    %v955 = vsel %vm938, %v804, 0
    %v958 = vsel %vm938, %v805, 0
    %v961 = vsel %vm938, %v806, 0
    %v964 = vsel %vm938, %v807, 0
    %v967 = vsel %vm938, %v808, 0
    %v970 = vsel %vm938, %v809, 0
    %v973 = vsel %vm938, %v810, 0
    %v976 = vsel %vm938, %v811, 0
    %v979 = vsel %vm938, %v812, 0
    %v982 = vsel %vm938, %v813, 0
    %v985 = vsel %vm938, %v814, 0
    %v988 = vsel %vm938, %v815, 0
    %v991 = vsel %vm938, %v816, 0
    %v994 = vsel %vm938, %v817, 0
    %v997 = vsel %vm938, %v818, 0
    %v1000 = vsel %vm938, %v819, 0
    %v1003 = vsel %vm938, %v820, 0
    %v1006 = vsel %vm938, %v821, 0
    %v1009 = vsel %vm938, %v822, 0
    %v1012 = vsel %vm938, %v823, 0
    %v1015 = vsel %vm938, %v824, 0
    %v1018 = vsel %vm938, %v825, 0
    %v1021 = vsel %vm938, %v826, 0
    %v1024 = vsel %vm938, %v827, 0
    %v1027 = vsel %vm938, %v828, 0
    %v1030 = vsel %vm938, %v829, 0
    %v1033 = vsel %vm938, %v830, 0
    %v1036 = vsel %vm938, %v831, 0
    %v1039 = vsel %vm938, %v832, 0
    %v1042 = vsel %vm938, %v833, 0
    %v1045 = vsel %vm938, %v834, 0
    %v1048 = vsel %vm938, %v835, 0
    %v1051 = vsel %vm938, %v836, 0
    %v1054 = vsel %vm938, %v837, 0
    %v1057 = vsel %vm938, %v838, 0
    %v1060 = vsel %vm938, %v839, 0
    %v1063 = vsel %vm938, %v840, 0
    %v1066 = vsel %vm938, %v841, 0
    %v1069 = vsel %vm938, %v842, 0
    %v1072 = vsel %vm938, %v843, 0
    %v1075 = vsel %vm938, %v844, 0
    %v1078 = vsel %vm938, %v845, 0
    %v1081 = vsel %vm938, %v846, 0
    %v1084 = vsel %vm938, %v847, 0
    %v1087 = vsel %vm938, %v848, 0
    %v1090 = vsel %vm938, %v849, 0
    %v1093 = vsel %vm938, %v850, 0
    %v1096 = vsel %vm938, %v851, 0
    %v1099 = vsel %vm938, %v852, 0
    %v1102 = vsel %vm938, %v853, 0
    %v1105 = vsel %vm938, %v854, 0
    %v1108 = vsel %vm938, %v855, 0
    %v1111 = vsel %vm938, %v856, 0
    %v1114 = vsel %vm938, %v857, 0
    %v1117 = vsel %vm938, %v858, 0
    %v1120 = vsel %vm938, %v859, 0
    %v1123 = vsel %vm938, %v860, 0
    %v1126 = vsel %vm938, %v861, 0
    %v1129 = vsel %vm938, %v862, 0
    %v1132 = vsel %vm938, %v863, 0
    %v1135 = vsel %vm938, %v864, 0
    %v1138 = vsel %vm938, %v865, 0
    %v1141 = vsel %vm938, %v866, 0
    %v1144 = vsel %vm938, %v867, 0
    %v1147 = vsel %vm938, %v868, 0
    %v1150 = vsel %vm938, %v869, 0
    %v1153 = vsel %vm938, %v870, 0
    %v1156 = vsel %vm938, %v871, 0
    %v1159 = vsel %vm938, %v872, 0
    %v1162 = vsel %vm938, %v873, 0
    %v1165 = vsel %vm938, %v874, 0
    %v1168 = vsel %vm938, %v875, 0
    %v1171 = vsel %vm938, %v876, 0
    %v1174 = vsel %vm938, %v877, 0
    %v1177 = vsel %vm938, %v878, 0
    %v1180 = vsel %vm938, %v879, 0
    %v1183 = vsel %vm938, %v880, 0
    %v1186 = vsel %vm938, %v881, 0
    %v1189 = vsel %vm938, %v882, 0
    %v1192 = vsel %vm938, %v883, 0
    %v1195 = vsel %vm938, %v884, 0
    %v1198 = vsel %vm938, %v885, 0
    %v1201 = vsel %vm938, %v886, 0
    %v1204 = vsel %vm938, %v887, 0
    %v1207 = vsel %vm938, %v888, 0
    %v1210 = vsel %vm938, %v889, 0
    %v1213 = vsel %vm938, %v890, 0
    %v1216 = vsel %vm938, %v891, 0
    %v1219 = vsel %vm938, %v892, 0
    %v1222 = vsel %vm938, %v893, 0
    %v1225 = vsel %vm938, %v894, 0
    %v1228 = vsel %vm938, %v895, 0
    %v1231 = vsel %vm938, %v896, 0
    %v1234 = vsel %vm938, %v897, 0
    %v1237 = vsel %vm938, %v898, 0
    %v1240 = vsel %vm938, %v899, 0
    %v1243 = vsel %vm938, %v900, 0
    %v1246 = vsel %vm938, %v901, 0
    %v1249 = vsel %vm938, %v902, 0
    %v1252 = vsel %vm938, %v903, 0
    %v1255 = vsel %vm938, %v904, 0
    %v1258 = vsel %vm938, %v905, 0
    %v1261 = vsel %vm938, %v906, 0
    %v1264 = vsel %vm938, %v907, 0
    %v1267 = vsel %vm938, %v908, 0
    %v1270 = vsel %vm938, %v909, 0
    %v1273 = vsel %vm938, %v910, 0
    %v1276 = vsel %vm938, %v911, 0
    %v1279 = vsel %vm938, %v912, 0
    %v1282 = vsel %vm938, %v913, 0
    %v1285 = vsel %vm938, %v914, 0
    %v1288 = vsel %vm938, %v915, 0
    %v1291 = vsel %vm938, %v916, 0
    %v1294 = vsel %vm938, %v917, 0
    %v1297 = vsel %vm938, %v918, 0
    %v1300 = vsel %vm938, %v919, 0
    %v1303 = vsel %vm938, %v920, 0
    %v1306 = vsel %vm938, %v921, 0
    %v1309 = vsel %vm938, %v922, 0
    %v1312 = vsel %vm938, %v923, 0
    %v1315 = vsel %vm938, %v924, 0
    %v1318 = vsel %vm938, %v925, 0
    %v1321 = vsel %vm938, %v926, 0
    %vm1323 = vcmask 1044480
    %vm1324 = vcmask 1045504
    %v1325 = vsel %vm1323, 4294967295, 65535
    %v1326 = vsel %vm1324, %v1325, 0
    %v1328 = vand.u32 %v936, %v1326
    %1330 = vmatprep.subr.bf16.mxu0 0
    %1331 = vmatpush1.bf16.msra.mxu0 %v935
    %1332 = vmatprep.subr.bf16.mxu0 0
    %1333 = vmatpush1.bf16.msra.mxu0 %v1328
    %1334 = vmatprep.subr.bf16.mxu0 0
    %1335 = vmatpush1.bf16.msra.mxu0 0
    %1336 = vmatprep.subr.bf16.mxu0 0
    %1337 = vmatpush1.bf16.msra.mxu0 0
    %1338 = vmatprep.subr.bf16.mxu0 0
    %1339 = vmatpush1.bf16.msra.mxu0 0
    %1340 = vmatprep.subr.bf16.mxu0 0
    %1341 = vmatpush1.bf16.msra.mxu0 0
    %1342 = vmatprep.subr.bf16.mxu0 0
    %1343 = vmatpush1.bf16.msra.mxu0 0
    %1344 = vmatprep.subr.bf16.mxu0 0
    %1345 = vmatpush1.bf16.msra.mxu0 0
    %1346 = vmatprep.subr.bf16.mxu0 0
    %1347 = vmatpush1.bf16.msra.mxu0 0
    %1348 = vmatprep.subr.bf16.mxu0 0
    %1349 = vmatpush1.bf16.msra.mxu0 0
    %1350 = vmatprep.subr.bf16.mxu0 0
    %1351 = vmatpush1.bf16.msra.mxu0 0
    %1352 = vmatprep.subr.bf16.mxu0 0
    %1353 = vmatpush1.bf16.msra.mxu0 0
    %1354 = vmatprep.subr.bf16.mxu0 0
    %1355 = vmatpush1.bf16.msra.mxu0 0
    %1356 = vmatprep.subr.bf16.mxu0 0
    %1357 = vmatpush1.bf16.msra.mxu0 0
    %1358 = vmatprep.subr.bf16.mxu0 0
    %1359 = vmatpush1.bf16.msra.mxu0 0
    %1360 = vmatprep.subr.bf16.mxu0 0
    %1361 = vmatpush1.bf16.msra.mxu0 0
    %1362 = vmatprep.mubr.bf16.mxu0 0
    %1363 = vmatmul.mubr.bf16.gmra.mrb[0].mxu0 %v940
    %v1364 = vpop.f32.mrb[0].mxu0
    %v1365 = vadd.f32 %v286, %v1364
    %v1366 = vpop.f32.mrb[0].mxu0
    %v1367 = vpop.f32.mrb[0].mxu0
    %v1368 = vadd.f32 %v286, %v1367
    %v1369 = vpop.f32.mrb[0].mxu0
    %1370 = vmatprep.mubr.bf16.mxu0 0
    %1371 = vmatmul.mubr.bf16.gmra.mrb[0].mxu0 %v943
    %v1372 = vpop.f32.mrb[0].mxu0
    %v1373 = vadd.f32 %v286, %v1372
    %v1374 = vpop.f32.mrb[0].mxu0
    %v1375 = vpop.f32.mrb[0].mxu0
    %v1376 = vadd.f32 %v286, %v1375
    %v1377 = vpop.f32.mrb[0].mxu0
    %1378 = vmatprep.mubr.bf16.mxu0 0
    %1379 = vmatmul.mubr.bf16.gmra.mrb[0].mxu0 %v946
    %v1380 = vpop.f32.mrb[0].mxu0
    %v1381 = vadd.f32 %v286, %v1380
    %v1382 = vpop.f32.mrb[0].mxu0
    %v1383 = vpop.f32.mrb[0].mxu0
    %v1384 = vadd.f32 %v286, %v1383
    %v1385 = vpop.f32.mrb[0].mxu0
    %1386 = vmatprep.mubr.bf16.mxu0 0
    %1387 = vmatmul.mubr.bf16.gmra.mrb[0].mxu0 %v949
    %v1388 = vpop.f32.mrb[0].mxu0
    %v1389 = vadd.f32 %v286, %v1388
    %v1390 = vpop.f32.mrb[0].mxu0
    %v1391 = vpop.f32.mrb[0].mxu0
    %v1392 = vadd.f32 %v286, %v1391
    %v1393 = vpop.f32.mrb[0].mxu0
    %1394 = vmatprep.mubr.bf16.mxu0 0
    %1395 = vmatmul.mubr.bf16.gmra.mrb[0].mxu0 %v952
    %v1396 = vpop.f32.mrb[0].mxu0
    %v1397 = vadd.f32 %v286, %v1396
    %v1398 = vpop.f32.mrb[0].mxu0
    %v1399 = vpop.f32.mrb[0].mxu0
    %v1400 = vadd.f32 %v286, %v1399
    %v1401 = vpop.f32.mrb[0].mxu0
    %1402 = vmatprep.mubr.bf16.mxu0 0
    %1403 = vmatmul.mubr.bf16.gmra.mrb[0].mxu0 %v955
    %v1404 = vpop.f32.mrb[0].mxu0
    %v1405 = vadd.f32 %v286, %v1404
    %v1406 = vpop.f32.mrb[0].mxu0
    %v1407 = vpop.f32.mrb[0].mxu0
    %v1408 = vadd.f32 %v286, %v1407
    %v1409 = vpop.f32.mrb[0].mxu0
    %1410 = vmatprep.mubr.bf16.mxu0 0
    %1411 = vmatmul.mubr.bf16.gmra.mrb[0].mxu0 %v958
    %v1412 = vpop.f32.mrb[0].mxu0
    %v1413 = vadd.f32 %v286, %v1412
    %v1414 = vpop.f32.mrb[0].mxu0
    %v1415 = vpop.f32.mrb[0].mxu0
    %v1416 = vadd.f32 %v286, %v1415
    %v1417 = vpop.f32.mrb[0].mxu0
    %1418 = vmatprep.mubr.bf16.mxu0 0
    %1419 = vmatmul.mubr.bf16.gmra.mrb[0].mxu0 %v961
    %v1420 = vpop.f32.mrb[0].mxu0
    %v1421 = vadd.f32 %v286, %v1420
    %v1422 = vpop.f32.mrb[0].mxu0
    %v1423 = vpop.f32.mrb[0].mxu0
    %v1424 = vadd.f32 %v286, %v1423
    %v1425 = vpop.f32.mrb[0].mxu0
    %1426 = vmatprep.mubr.bf16.mxu0 0
    %1427 = vmatmul.mubr.bf16.gmra.mrb[0].mxu0 %v964
    %v1428 = vpop.f32.mrb[0].mxu0
    %v1429 = vadd.f32 %v286, %v1428
    %v1430 = vpop.f32.mrb[0].mxu0
    %v1431 = vpop.f32.mrb[0].mxu0
    %v1432 = vadd.f32 %v286, %v1431
    %v1433 = vpop.f32.mrb[0].mxu0
    %1434 = vmatprep.mubr.bf16.mxu0 0
    %1435 = vmatmul.mubr.bf16.gmra.mrb[0].mxu0 %v967
    %v1436 = vpop.f32.mrb[0].mxu0
    %v1437 = vadd.f32 %v286, %v1436
    %v1438 = vpop.f32.mrb[0].mxu0
    %v1439 = vpop.f32.mrb[0].mxu0
    %v1440 = vadd.f32 %v286, %v1439
    %v1441 = vpop.f32.mrb[0].mxu0
    %1442 = vmatprep.mubr.bf16.mxu0 0
    %1443 = vmatmul.mubr.bf16.gmra.mrb[0].mxu0 %v970
    %v1444 = vpop.f32.mrb[0].mxu0
    %v1445 = vadd.f32 %v286, %v1444
    %v1446 = vpop.f32.mrb[0].mxu0
    %v1447 = vpop.f32.mrb[0].mxu0
    %v1448 = vadd.f32 %v286, %v1447
    %v1449 = vpop.f32.mrb[0].mxu0
    %1450 = vmatprep.mubr.bf16.mxu0 0
    %1451 = vmatmul.mubr.bf16.gmra.mrb[0].mxu0 %v973
    %v1452 = vpop.f32.mrb[0].mxu0
    %v1453 = vadd.f32 %v286, %v1452
    %v1454 = vpop.f32.mrb[0].mxu0
    %v1455 = vpop.f32.mrb[0].mxu0
    %v1456 = vadd.f32 %v286, %v1455
    %v1457 = vpop.f32.mrb[0].mxu0
    %1458 = vmatprep.mubr.bf16.mxu0 0
    %1459 = vmatmul.mubr.bf16.gmra.mrb[0].mxu0 %v976
    %v1460 = vpop.f32.mrb[0].mxu0
    %v1461 = vadd.f32 %v286, %v1460
    %v1462 = vpop.f32.mrb[0].mxu0
    %v1463 = vpop.f32.mrb[0].mxu0
    %v1464 = vadd.f32 %v286, %v1463
    %v1465 = vpop.f32.mrb[0].mxu0
    %1466 = vmatprep.mubr.bf16.mxu0 0
    %1467 = vmatmul.mubr.bf16.gmra.mrb[0].mxu0 %v979
    %v1468 = vpop.f32.mrb[0].mxu0
    %v1469 = vadd.f32 %v286, %v1468
    %v1470 = vpop.f32.mrb[0].mxu0
    %v1471 = vpop.f32.mrb[0].mxu0
    %v1472 = vadd.f32 %v286, %v1471
    %v1473 = vpop.f32.mrb[0].mxu0
    %1474 = vmatprep.mubr.bf16.mxu0 0
    %1475 = vmatmul.mubr.bf16.gmra.mrb[0].mxu0 %v982
    %v1476 = vpop.f32.mrb[0].mxu0
    %v1477 = vadd.f32 %v286, %v1476
    %v1478 = vpop.f32.mrb[0].mxu0
    %v1479 = vpop.f32.mrb[0].mxu0
    %v1480 = vadd.f32 %v286, %v1479
    %v1481 = vpop.f32.mrb[0].mxu0
    %1482 = vmatprep.mubr.bf16.mxu0 0
    %1483 = vmatmul.mubr.bf16.gmra.mrb[0].mxu0 %v985
    %v1484 = vpop.f32.mrb[0].mxu0
    %v1485 = vadd.f32 %v286, %v1484
    %v1486 = vpop.f32.mrb[0].mxu0
    %v1487 = vpop.f32.mrb[0].mxu0
    %v1488 = vadd.f32 %v286, %v1487
    %v1489 = vpop.f32.mrb[0].mxu0
    %1490 = vmatprep.mubr.bf16.mxu0 0
    %1491 = vmatmul.mubr.bf16.gmra.mrb[0].mxu0 %v988
    %v1492 = vpop.f32.mrb[0].mxu0
    %v1493 = vadd.f32 %v286, %v1492
    %v1494 = vpop.f32.mrb[0].mxu0
    %v1495 = vpop.f32.mrb[0].mxu0
    %v1496 = vadd.f32 %v286, %v1495
    %v1497 = vpop.f32.mrb[0].mxu0
    %1498 = vmatprep.mubr.bf16.mxu0 0
    %1499 = vmatmul.mubr.bf16.gmra.mrb[0].mxu0 %v991
    %v1500 = vpop.f32.mrb[0].mxu0
    %v1501 = vadd.f32 %v286, %v1500
    %v1502 = vpop.f32.mrb[0].mxu0
    %v1503 = vpop.f32.mrb[0].mxu0
    %v1504 = vadd.f32 %v286, %v1503
    %v1505 = vpop.f32.mrb[0].mxu0
    %1506 = vmatprep.mubr.bf16.mxu0 0
    %1507 = vmatmul.mubr.bf16.gmra.mrb[0].mxu0 %v994
    %v1508 = vpop.f32.mrb[0].mxu0
    %v1509 = vadd.f32 %v286, %v1508
    %v1510 = vpop.f32.mrb[0].mxu0
    %v1511 = vpop.f32.mrb[0].mxu0
    %v1512 = vadd.f32 %v286, %v1511
    %v1513 = vpop.f32.mrb[0].mxu0
    %1514 = vmatprep.mubr.bf16.mxu0 0
    %1515 = vmatmul.mubr.bf16.gmra.mrb[0].mxu0 %v997
    %v1516 = vpop.f32.mrb[0].mxu0
    %v1517 = vadd.f32 %v286, %v1516
    %v1518 = vpop.f32.mrb[0].mxu0
    %v1519 = vpop.f32.mrb[0].mxu0
    %v1520 = vadd.f32 %v286, %v1519
    %v1521 = vpop.f32.mrb[0].mxu0
    %1522 = vmatprep.mubr.bf16.mxu0 0
    %1523 = vmatmul.mubr.bf16.gmra.mrb[0].mxu0 %v1000
    %v1524 = vpop.f32.mrb[0].mxu0
    %v1525 = vadd.f32 %v286, %v1524
    %v1526 = vpop.f32.mrb[0].mxu0
    %v1527 = vpop.f32.mrb[0].mxu0
    %v1528 = vadd.f32 %v286, %v1527
    %v1529 = vpop.f32.mrb[0].mxu0
    %1530 = vmatprep.mubr.bf16.mxu0 0
    %1531 = vmatmul.mubr.bf16.gmra.mrb[0].mxu0 %v1003
    %v1532 = vpop.f32.mrb[0].mxu0
    %v1533 = vadd.f32 %v286, %v1532
    %v1534 = vpop.f32.mrb[0].mxu0
    %v1535 = vpop.f32.mrb[0].mxu0
    %v1536 = vadd.f32 %v286, %v1535
    %v1537 = vpop.f32.mrb[0].mxu0
    %1538 = vmatprep.mubr.bf16.mxu0 0
    %1539 = vmatmul.mubr.bf16.gmra.mrb[0].mxu0 %v1006
    %v1540 = vpop.f32.mrb[0].mxu0
    %v1541 = vadd.f32 %v286, %v1540
    %v1542 = vpop.f32.mrb[0].mxu0
    %v1543 = vpop.f32.mrb[0].mxu0
    %v1544 = vadd.f32 %v286, %v1543
    %v1545 = vpop.f32.mrb[0].mxu0
    %1546 = vmatprep.mubr.bf16.mxu0 0
    %1547 = vmatmul.mubr.bf16.gmra.mrb[0].mxu0 %v1009
    %v1548 = vpop.f32.mrb[0].mxu0
    %v1549 = vadd.f32 %v286, %v1548
    %v1550 = vpop.f32.mrb[0].mxu0
    %v1551 = vpop.f32.mrb[0].mxu0
    %v1552 = vadd.f32 %v286, %v1551
    %v1553 = vpop.f32.mrb[0].mxu0
    %1554 = vmatprep.mubr.bf16.mxu0 0
    %1555 = vmatmul.mubr.bf16.gmra.mrb[0].mxu0 %v1012
    %v1556 = vpop.f32.mrb[0].mxu0
    %v1557 = vadd.f32 %v286, %v1556
    %v1558 = vpop.f32.mrb[0].mxu0
    %v1559 = vpop.f32.mrb[0].mxu0
    %v1560 = vadd.f32 %v286, %v1559
    %v1561 = vpop.f32.mrb[0].mxu0
    %1562 = vmatprep.mubr.bf16.mxu0 0
    %1563 = vmatmul.mubr.bf16.gmra.mrb[0].mxu0 %v1015
    %v1564 = vpop.f32.mrb[0].mxu0
    %v1565 = vadd.f32 %v286, %v1564
    %v1566 = vpop.f32.mrb[0].mxu0
    %v1567 = vpop.f32.mrb[0].mxu0
    %v1568 = vadd.f32 %v286, %v1567
    %v1569 = vpop.f32.mrb[0].mxu0
    %1570 = vmatprep.mubr.bf16.mxu0 0
    %1571 = vmatmul.mubr.bf16.gmra.mrb[0].mxu0 %v1018
    %v1572 = vpop.f32.mrb[0].mxu0
    %v1573 = vadd.f32 %v286, %v1572
    %v1574 = vpop.f32.mrb[0].mxu0
    %v1575 = vpop.f32.mrb[0].mxu0
    %v1576 = vadd.f32 %v286, %v1575
    %v1577 = vpop.f32.mrb[0].mxu0
    %1578 = vmatprep.mubr.bf16.mxu0 0
    %1579 = vmatmul.mubr.bf16.gmra.mrb[0].mxu0 %v1021
    %v1580 = vpop.f32.mrb[0].mxu0
    %v1581 = vadd.f32 %v286, %v1580
    %v1582 = vpop.f32.mrb[0].mxu0
    %v1583 = vpop.f32.mrb[0].mxu0
    %v1584 = vadd.f32 %v286, %v1583
    %v1585 = vpop.f32.mrb[0].mxu0
    %1586 = vmatprep.mubr.bf16.mxu0 0
    %1587 = vmatmul.mubr.bf16.gmra.mrb[0].mxu0 %v1024
    %v1588 = vpop.f32.mrb[0].mxu0
    %v1589 = vadd.f32 %v286, %v1588
    %v1590 = vpop.f32.mrb[0].mxu0
    %v1591 = vpop.f32.mrb[0].mxu0
    %v1592 = vadd.f32 %v286, %v1591
    %v1593 = vpop.f32.mrb[0].mxu0
    %1594 = vmatprep.mubr.bf16.mxu0 0
    %1595 = vmatmul.mubr.bf16.gmra.mrb[0].mxu0 %v1027
    %v1596 = vpop.f32.mrb[0].mxu0
    %v1597 = vadd.f32 %v286, %v1596
    %v1598 = vpop.f32.mrb[0].mxu0
    %v1599 = vpop.f32.mrb[0].mxu0
    %v1600 = vadd.f32 %v286, %v1599
    %v1601 = vpop.f32.mrb[0].mxu0
    %1602 = vmatprep.mubr.bf16.mxu0 0
    %1603 = vmatmul.mubr.bf16.gmra.mrb[0].mxu0 %v1030
    %v1604 = vpop.f32.mrb[0].mxu0
    %v1605 = vadd.f32 %v286, %v1604
    %v1606 = vpop.f32.mrb[0].mxu0
    %v1607 = vpop.f32.mrb[0].mxu0
    %v1608 = vadd.f32 %v286, %v1607
    %v1609 = vpop.f32.mrb[0].mxu0
    %1610 = vmatprep.mubr.bf16.mxu0 0
    %1611 = vmatmul.mubr.bf16.gmra.mrb[0].mxu0 %v1033
    %v1612 = vpop.f32.mrb[0].mxu0
    %v1613 = vadd.f32 %v286, %v1612
    %v1614 = vpop.f32.mrb[0].mxu0
    %v1615 = vpop.f32.mrb[0].mxu0
    %v1616 = vadd.f32 %v286, %v1615
    %v1617 = vpop.f32.mrb[0].mxu0
    %1618 = vmatprep.mubr.bf16.mxu0 0
    %1619 = vmatmul.mubr.bf16.gmra.mrb[0].mxu0 %v1036
    %v1620 = vpop.f32.mrb[0].mxu0
    %v1621 = vadd.f32 %v286, %v1620
    %v1622 = vpop.f32.mrb[0].mxu0
    %v1623 = vpop.f32.mrb[0].mxu0
    %v1624 = vadd.f32 %v286, %v1623
    %v1625 = vpop.f32.mrb[0].mxu0
    %1626 = vmatprep.mubr.bf16.mxu0 0
    %1627 = vmatmul.mubr.bf16.gmra.mrb[0].mxu0 %v1039
    %v1628 = vpop.f32.mrb[0].mxu0
    %v1629 = vadd.f32 %v286, %v1628
    %v1630 = vpop.f32.mrb[0].mxu0
    %v1631 = vpop.f32.mrb[0].mxu0
    %v1632 = vadd.f32 %v286, %v1631
    %v1633 = vpop.f32.mrb[0].mxu0
    %1634 = vmatprep.mubr.bf16.mxu0 0
    %1635 = vmatmul.mubr.bf16.gmra.mrb[0].mxu0 %v1042
    %v1636 = vpop.f32.mrb[0].mxu0
    %v1637 = vadd.f32 %v286, %v1636
    %v1638 = vpop.f32.mrb[0].mxu0
    %v1639 = vpop.f32.mrb[0].mxu0
    %v1640 = vadd.f32 %v286, %v1639
    %v1641 = vpop.f32.mrb[0].mxu0
    %1642 = vmatprep.mubr.bf16.mxu0 0
    %1643 = vmatmul.mubr.bf16.gmra.mrb[0].mxu0 %v1045
    %v1644 = vpop.f32.mrb[0].mxu0
    %v1645 = vadd.f32 %v286, %v1644
    %v1646 = vpop.f32.mrb[0].mxu0
    %v1647 = vpop.f32.mrb[0].mxu0
    %v1648 = vadd.f32 %v286, %v1647
    %v1649 = vpop.f32.mrb[0].mxu0
    %1650 = vmatprep.mubr.bf16.mxu0 0
    %1651 = vmatmul.mubr.bf16.gmra.mrb[0].mxu0 %v1048
    %v1652 = vpop.f32.mrb[0].mxu0
    %v1653 = vadd.f32 %v286, %v1652
    %v1654 = vpop.f32.mrb[0].mxu0
    %v1655 = vpop.f32.mrb[0].mxu0
    %v1656 = vadd.f32 %v286, %v1655
    %v1657 = vpop.f32.mrb[0].mxu0
    %1658 = vmatprep.mubr.bf16.mxu0 0
    %1659 = vmatmul.mubr.bf16.gmra.mrb[0].mxu0 %v1051
    %v1660 = vpop.f32.mrb[0].mxu0
    %v1661 = vadd.f32 %v286, %v1660
    %v1662 = vpop.f32.mrb[0].mxu0
    %v1663 = vpop.f32.mrb[0].mxu0
    %v1664 = vadd.f32 %v286, %v1663
    %v1665 = vpop.f32.mrb[0].mxu0
    %1666 = vmatprep.mubr.bf16.mxu0 0
    %1667 = vmatmul.mubr.bf16.gmra.mrb[0].mxu0 %v1054
    %v1668 = vpop.f32.mrb[0].mxu0
    %v1669 = vadd.f32 %v286, %v1668
    %v1670 = vpop.f32.mrb[0].mxu0
    %v1671 = vpop.f32.mrb[0].mxu0
    %v1672 = vadd.f32 %v286, %v1671
    %v1673 = vpop.f32.mrb[0].mxu0
    %1674 = vmatprep.mubr.bf16.mxu0 0
    %1675 = vmatmul.mubr.bf16.gmra.mrb[0].mxu0 %v1057
    %v1676 = vpop.f32.mrb[0].mxu0
    %v1677 = vadd.f32 %v286, %v1676
    %v1678 = vpop.f32.mrb[0].mxu0
    %v1679 = vpop.f32.mrb[0].mxu0
    %v1680 = vadd.f32 %v286, %v1679
    %v1681 = vpop.f32.mrb[0].mxu0
    %1682 = vmatprep.mubr.bf16.mxu0 0
    %1683 = vmatmul.mubr.bf16.gmra.mrb[0].mxu0 %v1060
    %v1684 = vpop.f32.mrb[0].mxu0
    %v1685 = vadd.f32 %v286, %v1684
    %v1686 = vpop.f32.mrb[0].mxu0
    %v1687 = vpop.f32.mrb[0].mxu0
    %v1688 = vadd.f32 %v286, %v1687
    %v1689 = vpop.f32.mrb[0].mxu0
    %1690 = vmatprep.mubr.bf16.mxu0 0
    %1691 = vmatmul.mubr.bf16.gmra.mrb[0].mxu0 %v1063
    %v1692 = vpop.f32.mrb[0].mxu0
    %v1693 = vadd.f32 %v286, %v1692
    %v1694 = vpop.f32.mrb[0].mxu0
    %v1695 = vpop.f32.mrb[0].mxu0
    %v1696 = vadd.f32 %v286, %v1695
    %v1697 = vpop.f32.mrb[0].mxu0
    %1698 = vmatprep.mubr.bf16.mxu0 0
    %1699 = vmatmul.mubr.bf16.gmra.mrb[0].mxu0 %v1066
    %v1700 = vpop.f32.mrb[0].mxu0
    %v1701 = vadd.f32 %v286, %v1700
    %v1702 = vpop.f32.mrb[0].mxu0
    %v1703 = vpop.f32.mrb[0].mxu0
    %v1704 = vadd.f32 %v286, %v1703
    %v1705 = vpop.f32.mrb[0].mxu0
    %1706 = vmatprep.mubr.bf16.mxu0 0
    %1707 = vmatmul.mubr.bf16.gmra.mrb[0].mxu0 %v1069
    %v1708 = vpop.f32.mrb[0].mxu0
    %v1709 = vadd.f32 %v286, %v1708
    %v1710 = vpop.f32.mrb[0].mxu0
    %v1711 = vpop.f32.mrb[0].mxu0
    %v1712 = vadd.f32 %v286, %v1711
    %v1713 = vpop.f32.mrb[0].mxu0
    %1714 = vmatprep.mubr.bf16.mxu0 0
    %1715 = vmatmul.mubr.bf16.gmra.mrb[0].mxu0 %v1072
    %v1716 = vpop.f32.mrb[0].mxu0
    %v1717 = vadd.f32 %v286, %v1716
    %v1718 = vpop.f32.mrb[0].mxu0
    %v1719 = vpop.f32.mrb[0].mxu0
    %v1720 = vadd.f32 %v286, %v1719
    %v1721 = vpop.f32.mrb[0].mxu0
    %1722 = vmatprep.mubr.bf16.mxu0 0
    %1723 = vmatmul.mubr.bf16.gmra.mrb[0].mxu0 %v1075
    %v1724 = vpop.f32.mrb[0].mxu0
    %v1725 = vadd.f32 %v286, %v1724
    %v1726 = vpop.f32.mrb[0].mxu0
    %v1727 = vpop.f32.mrb[0].mxu0
    %v1728 = vadd.f32 %v286, %v1727
    %v1729 = vpop.f32.mrb[0].mxu0
    %1730 = vmatprep.mubr.bf16.mxu0 0
    %1731 = vmatmul.mubr.bf16.gmra.mrb[0].mxu0 %v1078
    %v1732 = vpop.f32.mrb[0].mxu0
    %v1733 = vadd.f32 %v286, %v1732
    %v1734 = vpop.f32.mrb[0].mxu0
    %v1735 = vpop.f32.mrb[0].mxu0
    %v1736 = vadd.f32 %v286, %v1735
    %v1737 = vpop.f32.mrb[0].mxu0
    %1738 = vmatprep.mubr.bf16.mxu0 0
    %1739 = vmatmul.mubr.bf16.gmra.mrb[0].mxu0 %v1081
    %v1740 = vpop.f32.mrb[0].mxu0
    %v1741 = vadd.f32 %v286, %v1740
    %v1742 = vpop.f32.mrb[0].mxu0
    %v1743 = vpop.f32.mrb[0].mxu0
    %v1744 = vadd.f32 %v286, %v1743
    %v1745 = vpop.f32.mrb[0].mxu0
    %1746 = vmatprep.mubr.bf16.mxu0 0
    %1747 = vmatmul.mubr.bf16.gmra.mrb[0].mxu0 %v1084
    %v1748 = vpop.f32.mrb[0].mxu0
    %v1749 = vadd.f32 %v286, %v1748
    %v1750 = vpop.f32.mrb[0].mxu0
    %v1751 = vpop.f32.mrb[0].mxu0
    %v1752 = vadd.f32 %v286, %v1751
    %v1753 = vpop.f32.mrb[0].mxu0
    %1754 = vmatprep.mubr.bf16.mxu0 0
    %1755 = vmatmul.mubr.bf16.gmra.mrb[0].mxu0 %v1087
    %v1756 = vpop.f32.mrb[0].mxu0
    %v1757 = vadd.f32 %v286, %v1756
    %v1758 = vpop.f32.mrb[0].mxu0
    %v1759 = vpop.f32.mrb[0].mxu0
    %v1760 = vadd.f32 %v286, %v1759
    %v1761 = vpop.f32.mrb[0].mxu0
    %1762 = vmatprep.mubr.bf16.mxu0 0
    %1763 = vmatmul.mubr.bf16.gmra.mrb[0].mxu0 %v1090
    %v1764 = vpop.f32.mrb[0].mxu0
    %v1765 = vadd.f32 %v286, %v1764
    %v1766 = vpop.f32.mrb[0].mxu0
    %v1767 = vpop.f32.mrb[0].mxu0
    %v1768 = vadd.f32 %v286, %v1767
    %v1769 = vpop.f32.mrb[0].mxu0
    %1770 = vmatprep.mubr.bf16.mxu0 0
    %1771 = vmatmul.mubr.bf16.gmra.mrb[0].mxu0 %v1093
    %v1772 = vpop.f32.mrb[0].mxu0
    %v1773 = vadd.f32 %v286, %v1772
    %v1774 = vpop.f32.mrb[0].mxu0
    %v1775 = vpop.f32.mrb[0].mxu0
    %v1776 = vadd.f32 %v286, %v1775
    %v1777 = vpop.f32.mrb[0].mxu0
    %1778 = vmatprep.mubr.bf16.mxu0 0
    %1779 = vmatmul.mubr.bf16.gmra.mrb[0].mxu0 %v1096
    %v1780 = vpop.f32.mrb[0].mxu0
    %v1781 = vadd.f32 %v286, %v1780
    %v1782 = vpop.f32.mrb[0].mxu0
    %v1783 = vpop.f32.mrb[0].mxu0
    %v1784 = vadd.f32 %v286, %v1783
    %v1785 = vpop.f32.mrb[0].mxu0
    %1786 = vmatprep.mubr.bf16.mxu0 0
    %1787 = vmatmul.mubr.bf16.gmra.mrb[0].mxu0 %v1099
    %v1788 = vpop.f32.mrb[0].mxu0
    %v1789 = vadd.f32 %v286, %v1788
    %v1790 = vpop.f32.mrb[0].mxu0
    %v1791 = vpop.f32.mrb[0].mxu0
    %v1792 = vadd.f32 %v286, %v1791
    %v1793 = vpop.f32.mrb[0].mxu0
    %1794 = vmatprep.mubr.bf16.mxu0 0
    %1795 = vmatmul.mubr.bf16.gmra.mrb[0].mxu0 %v1102
    %v1796 = vpop.f32.mrb[0].mxu0
    %v1797 = vadd.f32 %v286, %v1796
    %v1798 = vpop.f32.mrb[0].mxu0
    %v1799 = vpop.f32.mrb[0].mxu0
    %v1800 = vadd.f32 %v286, %v1799
    %v1801 = vpop.f32.mrb[0].mxu0
    %1802 = vmatprep.mubr.bf16.mxu0 0
    %1803 = vmatmul.mubr.bf16.gmra.mrb[0].mxu0 %v1105
    %v1804 = vpop.f32.mrb[0].mxu0
    %v1805 = vadd.f32 %v286, %v1804
    %v1806 = vpop.f32.mrb[0].mxu0
    %v1807 = vpop.f32.mrb[0].mxu0
    %v1808 = vadd.f32 %v286, %v1807
    %v1809 = vpop.f32.mrb[0].mxu0
    %1810 = vmatprep.mubr.bf16.mxu0 0
    %1811 = vmatmul.mubr.bf16.gmra.mrb[0].mxu0 %v1108
    %v1812 = vpop.f32.mrb[0].mxu0
    %v1813 = vadd.f32 %v286, %v1812
    %v1814 = vpop.f32.mrb[0].mxu0
    %v1815 = vpop.f32.mrb[0].mxu0
    %v1816 = vadd.f32 %v286, %v1815
    %v1817 = vpop.f32.mrb[0].mxu0
    %1818 = vmatprep.mubr.bf16.mxu0 0
    %1819 = vmatmul.mubr.bf16.gmra.mrb[0].mxu0 %v1111
    %v1820 = vpop.f32.mrb[0].mxu0
    %v1821 = vadd.f32 %v286, %v1820
    %v1822 = vpop.f32.mrb[0].mxu0
    %v1823 = vpop.f32.mrb[0].mxu0
    %v1824 = vadd.f32 %v286, %v1823
    %v1825 = vpop.f32.mrb[0].mxu0
    %1826 = vmatprep.mubr.bf16.mxu0 0
    %1827 = vmatmul.mubr.bf16.gmra.mrb[0].mxu0 %v1114
    %v1828 = vpop.f32.mrb[0].mxu0
    %v1829 = vadd.f32 %v286, %v1828
    %v1830 = vpop.f32.mrb[0].mxu0
    %v1831 = vpop.f32.mrb[0].mxu0
    %v1832 = vadd.f32 %v286, %v1831
    %v1833 = vpop.f32.mrb[0].mxu0
    %1834 = vmatprep.mubr.bf16.mxu0 0
    %1835 = vmatmul.mubr.bf16.gmra.mrb[0].mxu0 %v1117
    %v1836 = vpop.f32.mrb[0].mxu0
    %v1837 = vadd.f32 %v286, %v1836
    %v1838 = vpop.f32.mrb[0].mxu0
    %v1839 = vpop.f32.mrb[0].mxu0
    %v1840 = vadd.f32 %v286, %v1839
    %v1841 = vpop.f32.mrb[0].mxu0
    %1842 = vmatprep.mubr.bf16.mxu0 0
    %1843 = vmatmul.mubr.bf16.gmra.mrb[0].mxu0 %v1120
    %v1844 = vpop.f32.mrb[0].mxu0
    %v1845 = vadd.f32 %v286, %v1844
    %v1846 = vpop.f32.mrb[0].mxu0
    %v1847 = vpop.f32.mrb[0].mxu0
    %v1848 = vadd.f32 %v286, %v1847
    %v1849 = vpop.f32.mrb[0].mxu0
    %1850 = vmatprep.mubr.bf16.mxu0 0
    %1851 = vmatmul.mubr.bf16.gmra.mrb[0].mxu0 %v1123
    %v1852 = vpop.f32.mrb[0].mxu0
    %v1853 = vadd.f32 %v286, %v1852
    %v1854 = vpop.f32.mrb[0].mxu0
    %v1855 = vpop.f32.mrb[0].mxu0
    %v1856 = vadd.f32 %v286, %v1855
    %v1857 = vpop.f32.mrb[0].mxu0
    %1858 = vmatprep.mubr.bf16.mxu0 0
    %1859 = vmatmul.mubr.bf16.gmra.mrb[0].mxu0 %v1126
    %v1860 = vpop.f32.mrb[0].mxu0
    %v1861 = vadd.f32 %v286, %v1860
    %v1862 = vpop.f32.mrb[0].mxu0
    %v1863 = vpop.f32.mrb[0].mxu0
    %v1864 = vadd.f32 %v286, %v1863
    %v1865 = vpop.f32.mrb[0].mxu0
    %1866 = vmatprep.mubr.bf16.mxu0 0
    %1867 = vmatmul.mubr.bf16.gmra.mrb[0].mxu0 %v1129
    %v1868 = vpop.f32.mrb[0].mxu0
    %v1869 = vadd.f32 %v286, %v1868
    %v1870 = vpop.f32.mrb[0].mxu0
    %v1871 = vpop.f32.mrb[0].mxu0
    %v1872 = vadd.f32 %v286, %v1871
    %v1873 = vpop.f32.mrb[0].mxu0
    %1874 = vmatprep.mubr.bf16.mxu0 0
    %1875 = vmatmul.mubr.bf16.gmra.mrb[0].mxu0 %v1132
    %v1876 = vpop.f32.mrb[0].mxu0
    %v1877 = vadd.f32 %v286, %v1876
    %v1878 = vpop.f32.mrb[0].mxu0
    %v1879 = vpop.f32.mrb[0].mxu0
    %v1880 = vadd.f32 %v286, %v1879
    %v1881 = vpop.f32.mrb[0].mxu0
    %1882 = vmatprep.mubr.bf16.mxu0 0
    %1883 = vmatmul.mubr.bf16.gmra.mrb[0].mxu0 %v1135
    %v1884 = vpop.f32.mrb[0].mxu0
    %v1885 = vadd.f32 %v286, %v1884
    %v1886 = vpop.f32.mrb[0].mxu0
    %v1887 = vpop.f32.mrb[0].mxu0
    %v1888 = vadd.f32 %v286, %v1887
    %v1889 = vpop.f32.mrb[0].mxu0
    %1890 = vmatprep.mubr.bf16.mxu0 0
    %1891 = vmatmul.mubr.bf16.gmra.mrb[0].mxu0 %v1138
    %v1892 = vpop.f32.mrb[0].mxu0
    %v1893 = vadd.f32 %v286, %v1892
    %v1894 = vpop.f32.mrb[0].mxu0
    %v1895 = vpop.f32.mrb[0].mxu0
    %v1896 = vadd.f32 %v286, %v1895
    %v1897 = vpop.f32.mrb[0].mxu0
    %1898 = vmatprep.mubr.bf16.mxu0 0
    %1899 = vmatmul.mubr.bf16.gmra.mrb[0].mxu0 %v1141
    %v1900 = vpop.f32.mrb[0].mxu0
    %v1901 = vadd.f32 %v286, %v1900
    %v1902 = vpop.f32.mrb[0].mxu0
    %v1903 = vpop.f32.mrb[0].mxu0
    %v1904 = vadd.f32 %v286, %v1903
    %v1905 = vpop.f32.mrb[0].mxu0
    %1906 = vmatprep.mubr.bf16.mxu0 0
    %1907 = vmatmul.mubr.bf16.gmra.mrb[0].mxu0 %v1144
    %v1908 = vpop.f32.mrb[0].mxu0
    %v1909 = vadd.f32 %v286, %v1908
    %v1910 = vpop.f32.mrb[0].mxu0
    %v1911 = vpop.f32.mrb[0].mxu0
    %v1912 = vadd.f32 %v286, %v1911
    %v1913 = vpop.f32.mrb[0].mxu0
    %1914 = vmatprep.mubr.bf16.mxu0 0
    %1915 = vmatmul.mubr.bf16.gmra.mrb[0].mxu0 %v1147
    %v1916 = vpop.f32.mrb[0].mxu0
    %v1917 = vadd.f32 %v286, %v1916
    %v1918 = vpop.f32.mrb[0].mxu0
    %v1919 = vpop.f32.mrb[0].mxu0
    %v1920 = vadd.f32 %v286, %v1919
    %v1921 = vpop.f32.mrb[0].mxu0
    %1922 = vmatprep.mubr.bf16.mxu0 0
    %1923 = vmatmul.mubr.bf16.gmra.mrb[0].mxu0 %v1150
    %v1924 = vpop.f32.mrb[0].mxu0
    %v1925 = vadd.f32 %v286, %v1924
    %v1926 = vpop.f32.mrb[0].mxu0
    %v1927 = vpop.f32.mrb[0].mxu0
    %v1928 = vadd.f32 %v286, %v1927
    %v1929 = vpop.f32.mrb[0].mxu0
    %1930 = vmatprep.mubr.bf16.mxu0 0
    %1931 = vmatmul.mubr.bf16.gmra.mrb[0].mxu0 %v1153
    %v1932 = vpop.f32.mrb[0].mxu0
    %v1933 = vadd.f32 %v286, %v1932
    %v1934 = vpop.f32.mrb[0].mxu0
    %v1935 = vpop.f32.mrb[0].mxu0
    %v1936 = vadd.f32 %v286, %v1935
    %v1937 = vpop.f32.mrb[0].mxu0
    %1938 = vmatprep.mubr.bf16.mxu0 0
    %1939 = vmatmul.mubr.bf16.gmra.mrb[0].mxu0 %v1156
    %v1940 = vpop.f32.mrb[0].mxu0
    %v1941 = vadd.f32 %v286, %v1940
    %v1942 = vpop.f32.mrb[0].mxu0
    %v1943 = vpop.f32.mrb[0].mxu0
    %v1944 = vadd.f32 %v286, %v1943
    %v1945 = vpop.f32.mrb[0].mxu0
    %1946 = vmatprep.mubr.bf16.mxu0 0
    %1947 = vmatmul.mubr.bf16.gmra.mrb[0].mxu0 %v1159
    %v1948 = vpop.f32.mrb[0].mxu0
    %v1949 = vadd.f32 %v286, %v1948
    %v1950 = vpop.f32.mrb[0].mxu0
    %v1951 = vpop.f32.mrb[0].mxu0
    %v1952 = vadd.f32 %v286, %v1951
    %v1953 = vpop.f32.mrb[0].mxu0
    %1954 = vmatprep.mubr.bf16.mxu0 0
    %1955 = vmatmul.mubr.bf16.gmra.mrb[0].mxu0 %v1162
    %v1956 = vpop.f32.mrb[0].mxu0
    %v1957 = vadd.f32 %v286, %v1956
    %v1958 = vpop.f32.mrb[0].mxu0
    %v1959 = vpop.f32.mrb[0].mxu0
    %v1960 = vadd.f32 %v286, %v1959
    %v1961 = vpop.f32.mrb[0].mxu0
    %1962 = vmatprep.mubr.bf16.mxu0 0
    %1963 = vmatmul.mubr.bf16.gmra.mrb[0].mxu0 %v1165
    %v1964 = vpop.f32.mrb[0].mxu0
    %v1965 = vadd.f32 %v286, %v1964
    %v1966 = vpop.f32.mrb[0].mxu0
    %v1967 = vpop.f32.mrb[0].mxu0
    %v1968 = vadd.f32 %v286, %v1967
    %v1969 = vpop.f32.mrb[0].mxu0
    %1970 = vmatprep.mubr.bf16.mxu0 0
    %1971 = vmatmul.mubr.bf16.gmra.mrb[0].mxu0 %v1168
    %v1972 = vpop.f32.mrb[0].mxu0
    %v1973 = vadd.f32 %v286, %v1972
    %v1974 = vpop.f32.mrb[0].mxu0
    %v1975 = vpop.f32.mrb[0].mxu0
    %v1976 = vadd.f32 %v286, %v1975
    %v1977 = vpop.f32.mrb[0].mxu0
    %1978 = vmatprep.mubr.bf16.mxu0 0
    %1979 = vmatmul.mubr.bf16.gmra.mrb[0].mxu0 %v1171
    %v1980 = vpop.f32.mrb[0].mxu0
    %v1981 = vadd.f32 %v286, %v1980
    %v1982 = vpop.f32.mrb[0].mxu0
    %v1983 = vpop.f32.mrb[0].mxu0
    %v1984 = vadd.f32 %v286, %v1983
    %v1985 = vpop.f32.mrb[0].mxu0
    %1986 = vmatprep.mubr.bf16.mxu0 0
    %1987 = vmatmul.mubr.bf16.gmra.mrb[0].mxu0 %v1174
    %v1988 = vpop.f32.mrb[0].mxu0
    %v1989 = vadd.f32 %v286, %v1988
    %v1990 = vpop.f32.mrb[0].mxu0
    %v1991 = vpop.f32.mrb[0].mxu0
    %v1992 = vadd.f32 %v286, %v1991
    %v1993 = vpop.f32.mrb[0].mxu0
    %1994 = vmatprep.mubr.bf16.mxu0 0
    %1995 = vmatmul.mubr.bf16.gmra.mrb[0].mxu0 %v1177
    %v1996 = vpop.f32.mrb[0].mxu0
    %v1997 = vadd.f32 %v286, %v1996
    %v1998 = vpop.f32.mrb[0].mxu0
    %v1999 = vpop.f32.mrb[0].mxu0
    %v2000 = vadd.f32 %v286, %v1999
    %v2001 = vpop.f32.mrb[0].mxu0
    %2002 = vmatprep.mubr.bf16.mxu0 0
    %2003 = vmatmul.mubr.bf16.gmra.mrb[0].mxu0 %v1180
    %v2004 = vpop.f32.mrb[0].mxu0
    %v2005 = vadd.f32 %v286, %v2004
    %v2006 = vpop.f32.mrb[0].mxu0
    %v2007 = vpop.f32.mrb[0].mxu0
    %v2008 = vadd.f32 %v286, %v2007
    %v2009 = vpop.f32.mrb[0].mxu0
    %2010 = vmatprep.mubr.bf16.mxu0 0
    %2011 = vmatmul.mubr.bf16.gmra.mrb[0].mxu0 %v1183
    %v2012 = vpop.f32.mrb[0].mxu0
    %v2013 = vadd.f32 %v286, %v2012
    %v2014 = vpop.f32.mrb[0].mxu0
    %v2015 = vpop.f32.mrb[0].mxu0
    %v2016 = vadd.f32 %v286, %v2015
    %v2017 = vpop.f32.mrb[0].mxu0
    %2018 = vmatprep.mubr.bf16.mxu0 0
    %2019 = vmatmul.mubr.bf16.gmra.mrb[0].mxu0 %v1186
    %v2020 = vpop.f32.mrb[0].mxu0
    %v2021 = vadd.f32 %v286, %v2020
    %v2022 = vpop.f32.mrb[0].mxu0
    %v2023 = vpop.f32.mrb[0].mxu0
    %v2024 = vadd.f32 %v286, %v2023
    %v2025 = vpop.f32.mrb[0].mxu0
    %2026 = vmatprep.mubr.bf16.mxu0 0
    %2027 = vmatmul.mubr.bf16.gmra.mrb[0].mxu0 %v1189
    %v2028 = vpop.f32.mrb[0].mxu0
    %v2029 = vadd.f32 %v286, %v2028
    %v2030 = vpop.f32.mrb[0].mxu0
    %v2031 = vpop.f32.mrb[0].mxu0
    %v2032 = vadd.f32 %v286, %v2031
    %v2033 = vpop.f32.mrb[0].mxu0
    %2034 = vmatprep.mubr.bf16.mxu0 0
    %2035 = vmatmul.mubr.bf16.gmra.mrb[0].mxu0 %v1192
    %v2036 = vpop.f32.mrb[0].mxu0
    %v2037 = vadd.f32 %v286, %v2036
    %v2038 = vpop.f32.mrb[0].mxu0
    %v2039 = vpop.f32.mrb[0].mxu0
    %v2040 = vadd.f32 %v286, %v2039
    %v2041 = vpop.f32.mrb[0].mxu0
    %2042 = vmatprep.mubr.bf16.mxu0 0
    %2043 = vmatmul.mubr.bf16.gmra.mrb[0].mxu0 %v1195
    %v2044 = vpop.f32.mrb[0].mxu0
    %v2045 = vadd.f32 %v286, %v2044
    %v2046 = vpop.f32.mrb[0].mxu0
    %v2047 = vpop.f32.mrb[0].mxu0
    %v2048 = vadd.f32 %v286, %v2047
    %v2049 = vpop.f32.mrb[0].mxu0
    %2050 = vmatprep.mubr.bf16.mxu0 0
    %2051 = vmatmul.mubr.bf16.gmra.mrb[0].mxu0 %v1198
    %v2052 = vpop.f32.mrb[0].mxu0
    %v2053 = vadd.f32 %v286, %v2052
    %v2054 = vpop.f32.mrb[0].mxu0
    %v2055 = vpop.f32.mrb[0].mxu0
    %v2056 = vadd.f32 %v286, %v2055
    %v2057 = vpop.f32.mrb[0].mxu0
    %2058 = vmatprep.mubr.bf16.mxu0 0
    %2059 = vmatmul.mubr.bf16.gmra.mrb[0].mxu0 %v1201
    %v2060 = vpop.f32.mrb[0].mxu0
    %v2061 = vadd.f32 %v286, %v2060
    %v2062 = vpop.f32.mrb[0].mxu0
    %v2063 = vpop.f32.mrb[0].mxu0
    %v2064 = vadd.f32 %v286, %v2063
    %v2065 = vpop.f32.mrb[0].mxu0
    %2066 = vmatprep.mubr.bf16.mxu0 0
    %2067 = vmatmul.mubr.bf16.gmra.mrb[0].mxu0 %v1204
    %v2068 = vpop.f32.mrb[0].mxu0
    %v2069 = vadd.f32 %v286, %v2068
    %v2070 = vpop.f32.mrb[0].mxu0
    %v2071 = vpop.f32.mrb[0].mxu0
    %v2072 = vadd.f32 %v286, %v2071
    %v2073 = vpop.f32.mrb[0].mxu0
    %2074 = vmatprep.mubr.bf16.mxu0 0
    %2075 = vmatmul.mubr.bf16.gmra.mrb[0].mxu0 %v1207
    %v2076 = vpop.f32.mrb[0].mxu0
    %v2077 = vadd.f32 %v286, %v2076
    %v2078 = vpop.f32.mrb[0].mxu0
    %v2079 = vpop.f32.mrb[0].mxu0
    %v2080 = vadd.f32 %v286, %v2079
    %v2081 = vpop.f32.mrb[0].mxu0
    %2082 = vmatprep.mubr.bf16.mxu0 0
    %2083 = vmatmul.mubr.bf16.gmra.mrb[0].mxu0 %v1210
    %v2084 = vpop.f32.mrb[0].mxu0
    %v2085 = vadd.f32 %v286, %v2084
    %v2086 = vpop.f32.mrb[0].mxu0
    %v2087 = vpop.f32.mrb[0].mxu0
    %v2088 = vadd.f32 %v286, %v2087
    %v2089 = vpop.f32.mrb[0].mxu0
    %2090 = vmatprep.mubr.bf16.mxu0 0
    %2091 = vmatmul.mubr.bf16.gmra.mrb[0].mxu0 %v1213
    %v2092 = vpop.f32.mrb[0].mxu0
    %v2093 = vadd.f32 %v286, %v2092
    %v2094 = vpop.f32.mrb[0].mxu0
    %v2095 = vpop.f32.mrb[0].mxu0
    %v2096 = vadd.f32 %v286, %v2095
    %v2097 = vpop.f32.mrb[0].mxu0
    %2098 = vmatprep.mubr.bf16.mxu0 0
    %2099 = vmatmul.mubr.bf16.gmra.mrb[0].mxu0 %v1216
    %v2100 = vpop.f32.mrb[0].mxu0
    %v2101 = vadd.f32 %v286, %v2100
    %v2102 = vpop.f32.mrb[0].mxu0
    %v2103 = vpop.f32.mrb[0].mxu0
    %v2104 = vadd.f32 %v286, %v2103
    %v2105 = vpop.f32.mrb[0].mxu0
    %2106 = vmatprep.mubr.bf16.mxu0 0
    %2107 = vmatmul.mubr.bf16.gmra.mrb[0].mxu0 %v1219
    %v2108 = vpop.f32.mrb[0].mxu0
    %v2109 = vadd.f32 %v286, %v2108
    %v2110 = vpop.f32.mrb[0].mxu0
    %v2111 = vpop.f32.mrb[0].mxu0
    %v2112 = vadd.f32 %v286, %v2111
    %v2113 = vpop.f32.mrb[0].mxu0
    %2114 = vmatprep.mubr.bf16.mxu0 0
    %2115 = vmatmul.mubr.bf16.gmra.mrb[0].mxu0 %v1222
    %v2116 = vpop.f32.mrb[0].mxu0
    %v2117 = vadd.f32 %v286, %v2116
    %v2118 = vpop.f32.mrb[0].mxu0
    %v2119 = vpop.f32.mrb[0].mxu0
    %v2120 = vadd.f32 %v286, %v2119
    %v2121 = vpop.f32.mrb[0].mxu0
    %2122 = vmatprep.mubr.bf16.mxu0 0
    %2123 = vmatmul.mubr.bf16.gmra.mrb[0].mxu0 %v1225
    %v2124 = vpop.f32.mrb[0].mxu0
    %v2125 = vadd.f32 %v286, %v2124
    %v2126 = vpop.f32.mrb[0].mxu0
    %v2127 = vpop.f32.mrb[0].mxu0
    %v2128 = vadd.f32 %v286, %v2127
    %v2129 = vpop.f32.mrb[0].mxu0
    %2130 = vmatprep.mubr.bf16.mxu0 0
    %2131 = vmatmul.mubr.bf16.gmra.mrb[0].mxu0 %v1228
    %v2132 = vpop.f32.mrb[0].mxu0
    %v2133 = vadd.f32 %v286, %v2132
    %v2134 = vpop.f32.mrb[0].mxu0
    %v2135 = vpop.f32.mrb[0].mxu0
    %v2136 = vadd.f32 %v286, %v2135
    %v2137 = vpop.f32.mrb[0].mxu0
    %2138 = vmatprep.mubr.bf16.mxu0 0
    %2139 = vmatmul.mubr.bf16.gmra.mrb[0].mxu0 %v1231
    %v2140 = vpop.f32.mrb[0].mxu0
    %v2141 = vadd.f32 %v286, %v2140
    %v2142 = vpop.f32.mrb[0].mxu0
    %v2143 = vpop.f32.mrb[0].mxu0
    %v2144 = vadd.f32 %v286, %v2143
    %v2145 = vpop.f32.mrb[0].mxu0
    %2146 = vmatprep.mubr.bf16.mxu0 0
    %2147 = vmatmul.mubr.bf16.gmra.mrb[0].mxu0 %v1234
    %v2148 = vpop.f32.mrb[0].mxu0
    %v2149 = vadd.f32 %v286, %v2148
    %v2150 = vpop.f32.mrb[0].mxu0
    %v2151 = vpop.f32.mrb[0].mxu0
    %v2152 = vadd.f32 %v286, %v2151
    %v2153 = vpop.f32.mrb[0].mxu0
    %2154 = vmatprep.mubr.bf16.mxu0 0
    %2155 = vmatmul.mubr.bf16.gmra.mrb[0].mxu0 %v1237
    %v2156 = vpop.f32.mrb[0].mxu0
    %v2157 = vadd.f32 %v286, %v2156
    %v2158 = vpop.f32.mrb[0].mxu0
    %v2159 = vpop.f32.mrb[0].mxu0
    %v2160 = vadd.f32 %v286, %v2159
    %v2161 = vpop.f32.mrb[0].mxu0
    %2162 = vmatprep.mubr.bf16.mxu0 0
    %2163 = vmatmul.mubr.bf16.gmra.mrb[0].mxu0 %v1240
    %v2164 = vpop.f32.mrb[0].mxu0
    %v2165 = vadd.f32 %v286, %v2164
    %v2166 = vpop.f32.mrb[0].mxu0
    %v2167 = vpop.f32.mrb[0].mxu0
    %v2168 = vadd.f32 %v286, %v2167
    %v2169 = vpop.f32.mrb[0].mxu0
    %2170 = vmatprep.mubr.bf16.mxu0 0
    %2171 = vmatmul.mubr.bf16.gmra.mrb[0].mxu0 %v1243
    %v2172 = vpop.f32.mrb[0].mxu0
    %v2173 = vadd.f32 %v286, %v2172
    %v2174 = vpop.f32.mrb[0].mxu0
    %v2175 = vpop.f32.mrb[0].mxu0
    %v2176 = vadd.f32 %v286, %v2175
    %v2177 = vpop.f32.mrb[0].mxu0
    %2178 = vmatprep.mubr.bf16.mxu0 0
    %2179 = vmatmul.mubr.bf16.gmra.mrb[0].mxu0 %v1246
    %v2180 = vpop.f32.mrb[0].mxu0
    %v2181 = vadd.f32 %v286, %v2180
    %v2182 = vpop.f32.mrb[0].mxu0
    %v2183 = vpop.f32.mrb[0].mxu0
    %v2184 = vadd.f32 %v286, %v2183
    %v2185 = vpop.f32.mrb[0].mxu0
    %2186 = vmatprep.mubr.bf16.mxu0 0
    %2187 = vmatmul.mubr.bf16.gmra.mrb[0].mxu0 %v1249
    %v2188 = vpop.f32.mrb[0].mxu0
    %v2189 = vadd.f32 %v286, %v2188
    %v2190 = vpop.f32.mrb[0].mxu0
    %v2191 = vpop.f32.mrb[0].mxu0
    %v2192 = vadd.f32 %v286, %v2191
    %v2193 = vpop.f32.mrb[0].mxu0
    %2194 = vmatprep.mubr.bf16.mxu0 0
    %2195 = vmatmul.mubr.bf16.gmra.mrb[0].mxu0 %v1252
    %v2196 = vpop.f32.mrb[0].mxu0
    %v2197 = vadd.f32 %v286, %v2196
    %v2198 = vpop.f32.mrb[0].mxu0
    %v2199 = vpop.f32.mrb[0].mxu0
    %v2200 = vadd.f32 %v286, %v2199
    %v2201 = vpop.f32.mrb[0].mxu0
    %2202 = vmatprep.mubr.bf16.mxu0 0
    %2203 = vmatmul.mubr.bf16.gmra.mrb[0].mxu0 %v1255
    %v2204 = vpop.f32.mrb[0].mxu0
    %v2205 = vadd.f32 %v286, %v2204
    %v2206 = vpop.f32.mrb[0].mxu0
    %v2207 = vpop.f32.mrb[0].mxu0
    %v2208 = vadd.f32 %v286, %v2207
    %v2209 = vpop.f32.mrb[0].mxu0
    %2210 = vmatprep.mubr.bf16.mxu0 0
    %2211 = vmatmul.mubr.bf16.gmra.mrb[0].mxu0 %v1258
    %v2212 = vpop.f32.mrb[0].mxu0
    %v2213 = vadd.f32 %v286, %v2212
    %v2214 = vpop.f32.mrb[0].mxu0
    %v2215 = vpop.f32.mrb[0].mxu0
    %v2216 = vadd.f32 %v286, %v2215
    %v2217 = vpop.f32.mrb[0].mxu0
    %2218 = vmatprep.mubr.bf16.mxu0 0
    %2219 = vmatmul.mubr.bf16.gmra.mrb[0].mxu0 %v1261
    %v2220 = vpop.f32.mrb[0].mxu0
    %v2221 = vadd.f32 %v286, %v2220
    %v2222 = vpop.f32.mrb[0].mxu0
    %v2223 = vpop.f32.mrb[0].mxu0
    %v2224 = vadd.f32 %v286, %v2223
    %v2225 = vpop.f32.mrb[0].mxu0
    %2226 = vmatprep.mubr.bf16.mxu0 0
    %2227 = vmatmul.mubr.bf16.gmra.mrb[0].mxu0 %v1264
    %v2228 = vpop.f32.mrb[0].mxu0
    %v2229 = vadd.f32 %v286, %v2228
    %v2230 = vpop.f32.mrb[0].mxu0
    %v2231 = vpop.f32.mrb[0].mxu0
    %v2232 = vadd.f32 %v286, %v2231
    %v2233 = vpop.f32.mrb[0].mxu0
    %2234 = vmatprep.mubr.bf16.mxu0 0
    %2235 = vmatmul.mubr.bf16.gmra.mrb[0].mxu0 %v1267
    %v2236 = vpop.f32.mrb[0].mxu0
    %v2237 = vadd.f32 %v286, %v2236
    %v2238 = vpop.f32.mrb[0].mxu0
    %v2239 = vpop.f32.mrb[0].mxu0
    %v2240 = vadd.f32 %v286, %v2239
    %v2241 = vpop.f32.mrb[0].mxu0
    %2242 = vmatprep.mubr.bf16.mxu0 0
    %2243 = vmatmul.mubr.bf16.gmra.mrb[0].mxu0 %v1270
    %v2244 = vpop.f32.mrb[0].mxu0
    %v2245 = vadd.f32 %v286, %v2244
    %v2246 = vpop.f32.mrb[0].mxu0
    %v2247 = vpop.f32.mrb[0].mxu0
    %v2248 = vadd.f32 %v286, %v2247
    %v2249 = vpop.f32.mrb[0].mxu0
    %2250 = vmatprep.mubr.bf16.mxu0 0
    %2251 = vmatmul.mubr.bf16.gmra.mrb[0].mxu0 %v1273
    %v2252 = vpop.f32.mrb[0].mxu0
    %v2253 = vadd.f32 %v286, %v2252
    %v2254 = vpop.f32.mrb[0].mxu0
    %v2255 = vpop.f32.mrb[0].mxu0
    %v2256 = vadd.f32 %v286, %v2255
    %v2257 = vpop.f32.mrb[0].mxu0
    %2258 = vmatprep.mubr.bf16.mxu0 0
    %2259 = vmatmul.mubr.bf16.gmra.mrb[0].mxu0 %v1276
    %v2260 = vpop.f32.mrb[0].mxu0
    %v2261 = vadd.f32 %v286, %v2260
    %v2262 = vpop.f32.mrb[0].mxu0
    %v2263 = vpop.f32.mrb[0].mxu0
    %v2264 = vadd.f32 %v286, %v2263
    %v2265 = vpop.f32.mrb[0].mxu0
    %2266 = vmatprep.mubr.bf16.mxu0 0
    %2267 = vmatmul.mubr.bf16.gmra.mrb[0].mxu0 %v1279
    %v2268 = vpop.f32.mrb[0].mxu0
    %v2269 = vadd.f32 %v286, %v2268
    %v2270 = vpop.f32.mrb[0].mxu0
    %v2271 = vpop.f32.mrb[0].mxu0
    %v2272 = vadd.f32 %v286, %v2271
    %v2273 = vpop.f32.mrb[0].mxu0
    %2274 = vmatprep.mubr.bf16.mxu0 0
    %2275 = vmatmul.mubr.bf16.gmra.mrb[0].mxu0 %v1282
    %v2276 = vpop.f32.mrb[0].mxu0
    %v2277 = vadd.f32 %v286, %v2276
    %v2278 = vpop.f32.mrb[0].mxu0
    %v2279 = vpop.f32.mrb[0].mxu0
    %v2280 = vadd.f32 %v286, %v2279
    %v2281 = vpop.f32.mrb[0].mxu0
    %2282 = vmatprep.mubr.bf16.mxu0 0
    %2283 = vmatmul.mubr.bf16.gmra.mrb[0].mxu0 %v1285
    %v2284 = vpop.f32.mrb[0].mxu0
    %v2285 = vadd.f32 %v286, %v2284
    %v2286 = vpop.f32.mrb[0].mxu0
    %v2287 = vpop.f32.mrb[0].mxu0
    %v2288 = vadd.f32 %v286, %v2287
    %v2289 = vpop.f32.mrb[0].mxu0
    %2290 = vmatprep.mubr.bf16.mxu0 0
    %2291 = vmatmul.mubr.bf16.gmra.mrb[0].mxu0 %v1288
    %v2292 = vpop.f32.mrb[0].mxu0
    %v2293 = vadd.f32 %v286, %v2292
    %v2294 = vpop.f32.mrb[0].mxu0
    %v2295 = vpop.f32.mrb[0].mxu0
    %v2296 = vadd.f32 %v286, %v2295
    %v2297 = vpop.f32.mrb[0].mxu0
    %2298 = vmatprep.mubr.bf16.mxu0 0
    %2299 = vmatmul.mubr.bf16.gmra.mrb[0].mxu0 %v1291
    %v2300 = vpop.f32.mrb[0].mxu0
    %v2301 = vadd.f32 %v286, %v2300
    %v2302 = vpop.f32.mrb[0].mxu0
    %v2303 = vpop.f32.mrb[0].mxu0
    %v2304 = vadd.f32 %v286, %v2303
    %v2305 = vpop.f32.mrb[0].mxu0
    %2306 = vmatprep.mubr.bf16.mxu0 0
    %2307 = vmatmul.mubr.bf16.gmra.mrb[0].mxu0 %v1294
    %v2308 = vpop.f32.mrb[0].mxu0
    %v2309 = vadd.f32 %v286, %v2308
    %v2310 = vpop.f32.mrb[0].mxu0
    %v2311 = vpop.f32.mrb[0].mxu0
    %v2312 = vadd.f32 %v286, %v2311
    %v2313 = vpop.f32.mrb[0].mxu0
    %2314 = vmatprep.mubr.bf16.mxu0 0
    %2315 = vmatmul.mubr.bf16.gmra.mrb[0].mxu0 %v1297
    %v2316 = vpop.f32.mrb[0].mxu0
    %v2317 = vadd.f32 %v286, %v2316
    %v2318 = vpop.f32.mrb[0].mxu0
    %v2319 = vpop.f32.mrb[0].mxu0
    %v2320 = vadd.f32 %v286, %v2319
    %v2321 = vpop.f32.mrb[0].mxu0
    %2322 = vmatprep.mubr.bf16.mxu0 0
    %2323 = vmatmul.mubr.bf16.gmra.mrb[0].mxu0 %v1300
    %v2324 = vpop.f32.mrb[0].mxu0
    %v2325 = vadd.f32 %v286, %v2324
    %v2326 = vpop.f32.mrb[0].mxu0
    %v2327 = vpop.f32.mrb[0].mxu0
    %v2328 = vadd.f32 %v286, %v2327
    %v2329 = vpop.f32.mrb[0].mxu0
    %2330 = vmatprep.mubr.bf16.mxu0 0
    %2331 = vmatmul.mubr.bf16.gmra.mrb[0].mxu0 %v1303
    %v2332 = vpop.f32.mrb[0].mxu0
    %v2333 = vadd.f32 %v286, %v2332
    %v2334 = vpop.f32.mrb[0].mxu0
    %v2335 = vpop.f32.mrb[0].mxu0
    %v2336 = vadd.f32 %v286, %v2335
    %v2337 = vpop.f32.mrb[0].mxu0
    %2338 = vmatprep.mubr.bf16.mxu0 0
    %2339 = vmatmul.mubr.bf16.gmra.mrb[0].mxu0 %v1306
    %v2340 = vpop.f32.mrb[0].mxu0
    %v2341 = vadd.f32 %v286, %v2340
    %v2342 = vpop.f32.mrb[0].mxu0
    %v2343 = vpop.f32.mrb[0].mxu0
    %v2344 = vadd.f32 %v286, %v2343
    %v2345 = vpop.f32.mrb[0].mxu0
    %2346 = vmatprep.mubr.bf16.mxu0 0
    %2347 = vmatmul.mubr.bf16.gmra.mrb[0].mxu0 %v1309
    %v2348 = vpop.f32.mrb[0].mxu0
    %v2349 = vadd.f32 %v286, %v2348
    %v2350 = vpop.f32.mrb[0].mxu0
    %v2351 = vpop.f32.mrb[0].mxu0
    %v2352 = vadd.f32 %v286, %v2351
    %v2353 = vpop.f32.mrb[0].mxu0
    %2354 = vmatprep.mubr.bf16.mxu0 0
    %2355 = vmatmul.mubr.bf16.gmra.mrb[0].mxu0 %v1312
    %v2356 = vpop.f32.mrb[0].mxu0
    %v2357 = vadd.f32 %v286, %v2356
    %v2358 = vpop.f32.mrb[0].mxu0
    %v2359 = vpop.f32.mrb[0].mxu0
    %v2360 = vadd.f32 %v286, %v2359
    %v2361 = vpop.f32.mrb[0].mxu0
    %2362 = vmatprep.mubr.bf16.mxu0 0
    %2363 = vmatmul.mubr.bf16.gmra.mrb[0].mxu0 %v1315
    %v2364 = vpop.f32.mrb[0].mxu0
    %v2365 = vadd.f32 %v286, %v2364
    %v2366 = vpop.f32.mrb[0].mxu0
    %v2367 = vpop.f32.mrb[0].mxu0
    %v2368 = vadd.f32 %v286, %v2367
    %v2369 = vpop.f32.mrb[0].mxu0
    %2370 = vmatprep.mubr.bf16.mxu0 0
    %2371 = vmatmul.mubr.bf16.gmra.mrb[0].mxu0 %v1318
    %v2372 = vpop.f32.mrb[0].mxu0
    %v2373 = vadd.f32 %v286, %v2372
    %v2374 = vpop.f32.mrb[0].mxu0
    %v2375 = vpop.f32.mrb[0].mxu0
    %v2376 = vadd.f32 %v286, %v2375
    %v2377 = vpop.f32.mrb[0].mxu0
    %2378 = vmatprep.mubr.bf16.mxu0 0
    %2379 = vmatmul.mubr.bf16.gmra.mrb[0].mxu0 %v1321
    %v2380 = vpop.f32.mrb[0].mxu0
    %v2381 = vadd.f32 %v286, %v2380
    %v2382 = vpop.f32.mrb[0].mxu0
    %v2383 = vpop.f32.mrb[0].mxu0
    %v2384 = vadd.f32 %v286, %v2383
    %v2385 = vpop.f32.mrb[0].mxu0
    %2386 = vdwg.mxu0
    %v2387 = vmax.f32 %v1365, 0.0
    %v2388 = vmax.f32 %v1368, 0.0
    %v2389 = vmax.f32 %v1373, 0.0
    %v2390 = vmax.f32 %v1376, 0.0
    %v2391 = vmax.f32 %v1381, 0.0
    %v2392 = vmax.f32 %v1384, 0.0
    %v2393 = vmax.f32 %v1389, 0.0
    %v2394 = vmax.f32 %v1392, 0.0
    %v2395 = vmax.f32 %v1397, 0.0
    %v2396 = vmax.f32 %v1400, 0.0
    %v2397 = vmax.f32 %v1405, 0.0
    %v2398 = vmax.f32 %v1408, 0.0
    %v2399 = vmax.f32 %v1413, 0.0
    %v2400 = vmax.f32 %v1416, 0.0
    %v2401 = vmax.f32 %v1421, 0.0
    %v2402 = vmax.f32 %v1424, 0.0
    %v2403 = vmax.f32 %v1429, 0.0
    %v2404 = vmax.f32 %v1432, 0.0
    %v2405 = vmax.f32 %v1437, 0.0
    %v2406 = vmax.f32 %v1440, 0.0
    %v2407 = vmax.f32 %v1445, 0.0
    %v2408 = vmax.f32 %v1448, 0.0
    %v2409 = vmax.f32 %v1453, 0.0
    %v2410 = vmax.f32 %v1456, 0.0
    %v2411 = vmax.f32 %v1461, 0.0
    %v2412 = vmax.f32 %v1464, 0.0
    %v2413 = vmax.f32 %v1469, 0.0
    %v2414 = vmax.f32 %v1472, 0.0
    %v2415 = vmax.f32 %v1477, 0.0
    %v2416 = vmax.f32 %v1480, 0.0
    %v2417 = vmax.f32 %v1485, 0.0
    %v2418 = vmax.f32 %v1488, 0.0
    %v2419 = vmax.f32 %v1493, 0.0
    %v2420 = vmax.f32 %v1496, 0.0
    %v2421 = vmax.f32 %v1501, 0.0
    %v2422 = vmax.f32 %v1504, 0.0
    %v2423 = vmax.f32 %v1509, 0.0
    %v2424 = vmax.f32 %v1512, 0.0
    %v2425 = vmax.f32 %v1517, 0.0
    %v2426 = vmax.f32 %v1520, 0.0
    %v2427 = vmax.f32 %v1525, 0.0
    %v2428 = vmax.f32 %v1528, 0.0
    %v2429 = vmax.f32 %v1533, 0.0
    %v2430 = vmax.f32 %v1536, 0.0
    %v2431 = vmax.f32 %v1541, 0.0
    %v2432 = vmax.f32 %v1544, 0.0
    %v2433 = vmax.f32 %v1549, 0.0
    %v2434 = vmax.f32 %v1552, 0.0
    %v2435 = vmax.f32 %v1557, 0.0
    %v2436 = vmax.f32 %v1560, 0.0
    %v2437 = vmax.f32 %v1565, 0.0
    %v2438 = vmax.f32 %v1568, 0.0
    %v2439 = vmax.f32 %v1573, 0.0
    %v2440 = vmax.f32 %v1576, 0.0
    %v2441 = vmax.f32 %v1581, 0.0
    %v2442 = vmax.f32 %v1584, 0.0
    %v2443 = vmax.f32 %v1589, 0.0
    %v2444 = vmax.f32 %v1592, 0.0
    %v2445 = vmax.f32 %v1597, 0.0
    %v2446 = vmax.f32 %v1600, 0.0
    %v2447 = vmax.f32 %v1605, 0.0
    %v2448 = vmax.f32 %v1608, 0.0
    %v2449 = vmax.f32 %v1613, 0.0
    %v2450 = vmax.f32 %v1616, 0.0
    %v2451 = vmax.f32 %v1621, 0.0
    %v2452 = vmax.f32 %v1624, 0.0
    %v2453 = vmax.f32 %v1629, 0.0
    %v2454 = vmax.f32 %v1632, 0.0
    %v2455 = vmax.f32 %v1637, 0.0
    %v2456 = vmax.f32 %v1640, 0.0
    %v2457 = vmax.f32 %v1645, 0.0
    %v2458 = vmax.f32 %v1648, 0.0
    %v2459 = vmax.f32 %v1653, 0.0
    %v2460 = vmax.f32 %v1656, 0.0
    %v2461 = vmax.f32 %v1661, 0.0
    %v2462 = vmax.f32 %v1664, 0.0
    %v2463 = vmax.f32 %v1669, 0.0
    %v2464 = vmax.f32 %v1672, 0.0
    %v2465 = vmax.f32 %v1677, 0.0
    %v2466 = vmax.f32 %v1680, 0.0
    %v2467 = vmax.f32 %v1685, 0.0
    %v2468 = vmax.f32 %v1688, 0.0
    %v2469 = vmax.f32 %v1693, 0.0
    %v2470 = vmax.f32 %v1696, 0.0
    %v2471 = vmax.f32 %v1701, 0.0
    %v2472 = vmax.f32 %v1704, 0.0
    %v2473 = vmax.f32 %v1709, 0.0
    %v2474 = vmax.f32 %v1712, 0.0
    %v2475 = vmax.f32 %v1717, 0.0
    %v2476 = vmax.f32 %v1720, 0.0
    %v2477 = vmax.f32 %v1725, 0.0
    %v2478 = vmax.f32 %v1728, 0.0
    %v2479 = vmax.f32 %v1733, 0.0
    %v2480 = vmax.f32 %v1736, 0.0
    %v2481 = vmax.f32 %v1741, 0.0
    %v2482 = vmax.f32 %v1744, 0.0
    %v2483 = vmax.f32 %v1749, 0.0
    %v2484 = vmax.f32 %v1752, 0.0
    %v2485 = vmax.f32 %v1757, 0.0
    %v2486 = vmax.f32 %v1760, 0.0
    %v2487 = vmax.f32 %v1765, 0.0
    %v2488 = vmax.f32 %v1768, 0.0
    %v2489 = vmax.f32 %v1773, 0.0
    %v2490 = vmax.f32 %v1776, 0.0
    %v2491 = vmax.f32 %v1781, 0.0
    %v2492 = vmax.f32 %v1784, 0.0
    %v2493 = vmax.f32 %v1789, 0.0
    %v2494 = vmax.f32 %v1792, 0.0
    %v2495 = vmax.f32 %v1797, 0.0
    %v2496 = vmax.f32 %v1800, 0.0
    %v2497 = vmax.f32 %v1805, 0.0
    %v2498 = vmax.f32 %v1808, 0.0
    %v2499 = vmax.f32 %v1813, 0.0
    %v2500 = vmax.f32 %v1816, 0.0
    %v2501 = vmax.f32 %v1821, 0.0
    %v2502 = vmax.f32 %v1824, 0.0
    %v2503 = vmax.f32 %v1829, 0.0
    %v2504 = vmax.f32 %v1832, 0.0
    %v2505 = vmax.f32 %v1837, 0.0
    %v2506 = vmax.f32 %v1840, 0.0
    %v2507 = vmax.f32 %v1845, 0.0
    %v2508 = vmax.f32 %v1848, 0.0
    %v2509 = vmax.f32 %v1853, 0.0
    %v2510 = vmax.f32 %v1856, 0.0
    %v2511 = vmax.f32 %v1861, 0.0
    %v2512 = vmax.f32 %v1864, 0.0
    %v2513 = vmax.f32 %v1869, 0.0
    %v2514 = vmax.f32 %v1872, 0.0
    %v2515 = vmax.f32 %v1877, 0.0
    %v2516 = vmax.f32 %v1880, 0.0
    %v2517 = vmax.f32 %v1885, 0.0
    %v2518 = vmax.f32 %v1888, 0.0
    %v2519 = vmax.f32 %v1893, 0.0
    %v2520 = vmax.f32 %v1896, 0.0
    %v2521 = vmax.f32 %v1901, 0.0
    %v2522 = vmax.f32 %v1904, 0.0
    %v2523 = vmax.f32 %v1909, 0.0
    %v2524 = vmax.f32 %v1912, 0.0
    %v2525 = vmax.f32 %v1917, 0.0
    %v2526 = vmax.f32 %v1920, 0.0
    %v2527 = vmax.f32 %v1925, 0.0
    %v2528 = vmax.f32 %v1928, 0.0
    %v2529 = vmax.f32 %v1933, 0.0
    %v2530 = vmax.f32 %v1936, 0.0
    %v2531 = vmax.f32 %v1941, 0.0
    %v2532 = vmax.f32 %v1944, 0.0
    %v2533 = vmax.f32 %v1949, 0.0
    %v2534 = vmax.f32 %v1952, 0.0
    %v2535 = vmax.f32 %v1957, 0.0
    %v2536 = vmax.f32 %v1960, 0.0
    %v2537 = vmax.f32 %v1965, 0.0
    %v2538 = vmax.f32 %v1968, 0.0
    %v2539 = vmax.f32 %v1973, 0.0
    %v2540 = vmax.f32 %v1976, 0.0
    %v2541 = vmax.f32 %v1981, 0.0
    %v2542 = vmax.f32 %v1984, 0.0
    %v2543 = vmax.f32 %v1989, 0.0
    %v2544 = vmax.f32 %v1992, 0.0
    %v2545 = vmax.f32 %v1997, 0.0
    %v2546 = vmax.f32 %v2000, 0.0
    %v2547 = vmax.f32 %v2005, 0.0
    %v2548 = vmax.f32 %v2008, 0.0
    %v2549 = vmax.f32 %v2013, 0.0
    %v2550 = vmax.f32 %v2016, 0.0
    %v2551 = vmax.f32 %v2021, 0.0
    %v2552 = vmax.f32 %v2024, 0.0
    %v2553 = vmax.f32 %v2029, 0.0
    %v2554 = vmax.f32 %v2032, 0.0
    %v2555 = vmax.f32 %v2037, 0.0
    %v2556 = vmax.f32 %v2040, 0.0
    %v2557 = vmax.f32 %v2045, 0.0
    %v2558 = vmax.f32 %v2048, 0.0
    %v2559 = vmax.f32 %v2053, 0.0
    %v2560 = vmax.f32 %v2056, 0.0
    %v2561 = vmax.f32 %v2061, 0.0
    %v2562 = vmax.f32 %v2064, 0.0
    %v2563 = vmax.f32 %v2069, 0.0
    %v2564 = vmax.f32 %v2072, 0.0
    %v2565 = vmax.f32 %v2077, 0.0
    %v2566 = vmax.f32 %v2080, 0.0
    %v2567 = vmax.f32 %v2085, 0.0
    %v2568 = vmax.f32 %v2088, 0.0
    %v2569 = vmax.f32 %v2093, 0.0
    %v2570 = vmax.f32 %v2096, 0.0
    %v2571 = vmax.f32 %v2101, 0.0
    %v2572 = vmax.f32 %v2104, 0.0
    %v2573 = vmax.f32 %v2109, 0.0
    %v2574 = vmax.f32 %v2112, 0.0
    %v2575 = vmax.f32 %v2117, 0.0
    %v2576 = vmax.f32 %v2120, 0.0
    %v2577 = vmax.f32 %v2125, 0.0
    %v2578 = vmax.f32 %v2128, 0.0
    %v2579 = vmax.f32 %v2133, 0.0
    %v2580 = vmax.f32 %v2136, 0.0
    %v2581 = vmax.f32 %v2141, 0.0
    %v2582 = vmax.f32 %v2144, 0.0
    %v2583 = vmax.f32 %v2149, 0.0
    %v2584 = vmax.f32 %v2152, 0.0
    %v2585 = vmax.f32 %v2157, 0.0
    %v2586 = vmax.f32 %v2160, 0.0
    %v2587 = vmax.f32 %v2165, 0.0
    %v2588 = vmax.f32 %v2168, 0.0
    %v2589 = vmax.f32 %v2173, 0.0
    %v2590 = vmax.f32 %v2176, 0.0
    %v2591 = vmax.f32 %v2181, 0.0
    %v2592 = vmax.f32 %v2184, 0.0
    %v2593 = vmax.f32 %v2189, 0.0
    %v2594 = vmax.f32 %v2192, 0.0
    %v2595 = vmax.f32 %v2197, 0.0
    %v2596 = vmax.f32 %v2200, 0.0
    %v2597 = vmax.f32 %v2205, 0.0
    %v2598 = vmax.f32 %v2208, 0.0
    %v2599 = vmax.f32 %v2213, 0.0
    %v2600 = vmax.f32 %v2216, 0.0
    %v2601 = vmax.f32 %v2221, 0.0
    %v2602 = vmax.f32 %v2224, 0.0
    %v2603 = vmax.f32 %v2229, 0.0
    %v2604 = vmax.f32 %v2232, 0.0
    %v2605 = vmax.f32 %v2237, 0.0
    %v2606 = vmax.f32 %v2240, 0.0
    %v2607 = vmax.f32 %v2245, 0.0
    %v2608 = vmax.f32 %v2248, 0.0
    %v2609 = vmax.f32 %v2253, 0.0
    %v2610 = vmax.f32 %v2256, 0.0
    %v2611 = vmax.f32 %v2261, 0.0
    %v2612 = vmax.f32 %v2264, 0.0
    %v2613 = vmax.f32 %v2269, 0.0
    %v2614 = vmax.f32 %v2272, 0.0
    %v2615 = vmax.f32 %v2277, 0.0
    %v2616 = vmax.f32 %v2280, 0.0
    %v2617 = vmax.f32 %v2285, 0.0
    %v2618 = vmax.f32 %v2288, 0.0
    %v2619 = vmax.f32 %v2293, 0.0
    %v2620 = vmax.f32 %v2296, 0.0
    %v2621 = vmax.f32 %v2301, 0.0
    %v2622 = vmax.f32 %v2304, 0.0
    %v2623 = vmax.f32 %v2309, 0.0
    %v2624 = vmax.f32 %v2312, 0.0
    %v2625 = vmax.f32 %v2317, 0.0
    %v2626 = vmax.f32 %v2320, 0.0
    %v2627 = vmax.f32 %v2325, 0.0
    %v2628 = vmax.f32 %v2328, 0.0
    %v2629 = vmax.f32 %v2333, 0.0
    %v2630 = vmax.f32 %v2336, 0.0
    %v2631 = vmax.f32 %v2341, 0.0
    %v2632 = vmax.f32 %v2344, 0.0
    %v2633 = vmax.f32 %v2349, 0.0
    %v2634 = vmax.f32 %v2352, 0.0
    %v2635 = vmax.f32 %v2357, 0.0
    %v2636 = vmax.f32 %v2360, 0.0
    %v2637 = vmax.f32 %v2365, 0.0
    %v2638 = vmax.f32 %v2368, 0.0
    %v2639 = vmax.f32 %v2373, 0.0
    %v2640 = vmax.f32 %v2376, 0.0
    %v2641 = vmax.f32 %v2381, 0.0
    %v2642 = vmax.f32 %v2384, 0.0
    %vm2643 = vcmask 130048
    %v2644 = vsel %vm2643, %v2387, 0.0
    %v2645 = vsel %vm2643, %v2388, 0.0
    %v2646 = vadd.f32 %v2644, %v2645
    %v2647 = vsel %vm2643, %v2389, 0.0
    %v2648 = vadd.f32 %v2646, %v2647
    %v2649 = vsel %vm2643, %v2390, 0.0
    %v2650 = vadd.f32 %v2648, %v2649
    %v2651 = vsel %vm2643, %v2391, 0.0
    %v2652 = vadd.f32 %v2650, %v2651
    %v2653 = vsel %vm2643, %v2392, 0.0
    %v2654 = vadd.f32 %v2652, %v2653
    %v2655 = vsel %vm2643, %v2393, 0.0
    %v2656 = vadd.f32 %v2654, %v2655
    %v2657 = vsel %vm2643, %v2394, 0.0
    %v2658 = vadd.f32 %v2656, %v2657
    %v2659 = vsel %vm2643, %v2395, 0.0
    %v2660 = vadd.f32 %v2658, %v2659
    %v2661 = vsel %vm2643, %v2396, 0.0
    %v2662 = vadd.f32 %v2660, %v2661
    %v2663 = vsel %vm2643, %v2397, 0.0
    %v2664 = vadd.f32 %v2662, %v2663
    %v2665 = vsel %vm2643, %v2398, 0.0
    %v2666 = vadd.f32 %v2664, %v2665
    %v2667 = vsel %vm2643, %v2399, 0.0
    %v2668 = vadd.f32 %v2666, %v2667
    %v2669 = vsel %vm2643, %v2400, 0.0
    %v2670 = vadd.f32 %v2668, %v2669
    %v2671 = vsel %vm2643, %v2401, 0.0
    %v2672 = vadd.f32 %v2670, %v2671
    %v2673 = vsel %vm2643, %v2402, 0.0
    %v2674 = vadd.f32 %v2672, %v2673
    %v2675 = vsel %vm2643, %v2403, 0.0
    %v2676 = vadd.f32 %v2674, %v2675
    %v2677 = vsel %vm2643, %v2404, 0.0
    %v2678 = vadd.f32 %v2676, %v2677
    %v2679 = vsel %vm2643, %v2405, 0.0
    %v2680 = vadd.f32 %v2678, %v2679
    %v2681 = vsel %vm2643, %v2406, 0.0
    %v2682 = vadd.f32 %v2680, %v2681
    %v2683 = vsel %vm2643, %v2407, 0.0
    %v2684 = vadd.f32 %v2682, %v2683
    %v2685 = vsel %vm2643, %v2408, 0.0
    %v2686 = vadd.f32 %v2684, %v2685
    %v2687 = vsel %vm2643, %v2409, 0.0
    %v2688 = vadd.f32 %v2686, %v2687
    %v2689 = vsel %vm2643, %v2410, 0.0
    %v2690 = vadd.f32 %v2688, %v2689
    %v2691 = vsel %vm2643, %v2411, 0.0
    %v2692 = vadd.f32 %v2690, %v2691
    %v2693 = vsel %vm2643, %v2412, 0.0
    %v2694 = vadd.f32 %v2692, %v2693
    %v2695 = vsel %vm2643, %v2413, 0.0
    %v2696 = vadd.f32 %v2694, %v2695
    %v2697 = vsel %vm2643, %v2414, 0.0
    %v2698 = vadd.f32 %v2696, %v2697
    %v2699 = vsel %vm2643, %v2415, 0.0
    %v2700 = vadd.f32 %v2698, %v2699
    %v2701 = vsel %vm2643, %v2416, 0.0
    %v2702 = vadd.f32 %v2700, %v2701
    %v2703 = vsel %vm2643, %v2417, 0.0
    %v2704 = vadd.f32 %v2702, %v2703
    %v2705 = vsel %vm2643, %v2418, 0.0
    %v2706 = vadd.f32 %v2704, %v2705
    %v2707 = vrot.slane %v2706, 4
    %v2708 = vadd.f32 %v2706, %v2707
    %v2709 = vrot.slane %v2708, 2
    %v2710 = vadd.f32 %v2708, %v2709
    %v2711 = vrot.slane %v2710, 1
    %v2712 = vadd.f32 %v2710, %v2711
    %v2713 = vsel %vm2643, %v2419, 0.0
    %v2714 = vsel %vm2643, %v2420, 0.0
    %v2715 = vadd.f32 %v2713, %v2714
    %v2716 = vsel %vm2643, %v2421, 0.0
    %v2717 = vadd.f32 %v2715, %v2716
    %v2718 = vsel %vm2643, %v2422, 0.0
    %v2719 = vadd.f32 %v2717, %v2718
    %v2720 = vsel %vm2643, %v2423, 0.0
    %v2721 = vadd.f32 %v2719, %v2720
    %v2722 = vsel %vm2643, %v2424, 0.0
    %v2723 = vadd.f32 %v2721, %v2722
    %v2724 = vsel %vm2643, %v2425, 0.0
    %v2725 = vadd.f32 %v2723, %v2724
    %v2726 = vsel %vm2643, %v2426, 0.0
    %v2727 = vadd.f32 %v2725, %v2726
    %v2728 = vsel %vm2643, %v2427, 0.0
    %v2729 = vadd.f32 %v2727, %v2728
    %v2730 = vsel %vm2643, %v2428, 0.0
    %v2731 = vadd.f32 %v2729, %v2730
    %v2732 = vsel %vm2643, %v2429, 0.0
    %v2733 = vadd.f32 %v2731, %v2732
    %v2734 = vsel %vm2643, %v2430, 0.0
    %v2735 = vadd.f32 %v2733, %v2734
    %v2736 = vsel %vm2643, %v2431, 0.0
    %v2737 = vadd.f32 %v2735, %v2736
    %v2738 = vsel %vm2643, %v2432, 0.0
    %v2739 = vadd.f32 %v2737, %v2738
    %v2740 = vsel %vm2643, %v2433, 0.0
    %v2741 = vadd.f32 %v2739, %v2740
    %v2742 = vsel %vm2643, %v2434, 0.0
    %v2743 = vadd.f32 %v2741, %v2742
    %v2744 = vsel %vm2643, %v2435, 0.0
    %v2745 = vadd.f32 %v2743, %v2744
    %v2746 = vsel %vm2643, %v2436, 0.0
    %v2747 = vadd.f32 %v2745, %v2746
    %v2748 = vsel %vm2643, %v2437, 0.0
    %v2749 = vadd.f32 %v2747, %v2748
    %v2750 = vsel %vm2643, %v2438, 0.0
    %v2751 = vadd.f32 %v2749, %v2750
    %v2752 = vsel %vm2643, %v2439, 0.0
    %v2753 = vadd.f32 %v2751, %v2752
    %v2754 = vsel %vm2643, %v2440, 0.0
    %v2755 = vadd.f32 %v2753, %v2754
    %v2756 = vsel %vm2643, %v2441, 0.0
    %v2757 = vadd.f32 %v2755, %v2756
    %v2758 = vsel %vm2643, %v2442, 0.0
    %v2759 = vadd.f32 %v2757, %v2758
    %v2760 = vsel %vm2643, %v2443, 0.0
    %v2761 = vadd.f32 %v2759, %v2760
    %v2762 = vsel %vm2643, %v2444, 0.0
    %v2763 = vadd.f32 %v2761, %v2762
    %v2764 = vsel %vm2643, %v2445, 0.0
    %v2765 = vadd.f32 %v2763, %v2764
    %v2766 = vsel %vm2643, %v2446, 0.0
    %v2767 = vadd.f32 %v2765, %v2766
    %v2768 = vsel %vm2643, %v2447, 0.0
    %v2769 = vadd.f32 %v2767, %v2768
    %v2770 = vsel %vm2643, %v2448, 0.0
    %v2771 = vadd.f32 %v2769, %v2770
    %v2772 = vsel %vm2643, %v2449, 0.0
    %v2773 = vadd.f32 %v2771, %v2772
    %v2774 = vsel %vm2643, %v2450, 0.0
    %v2775 = vadd.f32 %v2773, %v2774
    %v2776 = vrot.slane %v2775, 4
    %v2777 = vadd.f32 %v2775, %v2776
    %v2778 = vrot.slane %v2777, 2
    %v2779 = vadd.f32 %v2777, %v2778
    %v2780 = vrot.slane %v2779, 1
    %v2781 = vadd.f32 %v2779, %v2780
    %v2782 = vsel %vm2643, %v2451, 0.0
    %v2783 = vsel %vm2643, %v2452, 0.0
    %v2784 = vadd.f32 %v2782, %v2783
    %v2785 = vsel %vm2643, %v2453, 0.0
    %v2786 = vadd.f32 %v2784, %v2785
    %v2787 = vsel %vm2643, %v2454, 0.0
    %v2788 = vadd.f32 %v2786, %v2787
    %v2789 = vsel %vm2643, %v2455, 0.0
    %v2790 = vadd.f32 %v2788, %v2789
    %v2791 = vsel %vm2643, %v2456, 0.0
    %v2792 = vadd.f32 %v2790, %v2791
    %v2793 = vsel %vm2643, %v2457, 0.0
    %v2794 = vadd.f32 %v2792, %v2793
    %v2795 = vsel %vm2643, %v2458, 0.0
    %v2796 = vadd.f32 %v2794, %v2795
    %v2797 = vsel %vm2643, %v2459, 0.0
    %v2798 = vadd.f32 %v2796, %v2797
    %v2799 = vsel %vm2643, %v2460, 0.0
    %v2800 = vadd.f32 %v2798, %v2799
    %v2801 = vsel %vm2643, %v2461, 0.0
    %v2802 = vadd.f32 %v2800, %v2801
    %v2803 = vsel %vm2643, %v2462, 0.0
    %v2804 = vadd.f32 %v2802, %v2803
    %v2805 = vsel %vm2643, %v2463, 0.0
    %v2806 = vadd.f32 %v2804, %v2805
    %v2807 = vsel %vm2643, %v2464, 0.0
    %v2808 = vadd.f32 %v2806, %v2807
    %v2809 = vsel %vm2643, %v2465, 0.0
    %v2810 = vadd.f32 %v2808, %v2809
    %v2811 = vsel %vm2643, %v2466, 0.0
    %v2812 = vadd.f32 %v2810, %v2811
    %v2813 = vsel %vm2643, %v2467, 0.0
    %v2814 = vadd.f32 %v2812, %v2813
    %v2815 = vsel %vm2643, %v2468, 0.0
    %v2816 = vadd.f32 %v2814, %v2815
    %v2817 = vsel %vm2643, %v2469, 0.0
    %v2818 = vadd.f32 %v2816, %v2817
    %v2819 = vsel %vm2643, %v2470, 0.0
    %v2820 = vadd.f32 %v2818, %v2819
    %v2821 = vsel %vm2643, %v2471, 0.0
    %v2822 = vadd.f32 %v2820, %v2821
    %v2823 = vsel %vm2643, %v2472, 0.0
    %v2824 = vadd.f32 %v2822, %v2823
    %v2825 = vsel %vm2643, %v2473, 0.0
    %v2826 = vadd.f32 %v2824, %v2825
    %v2827 = vsel %vm2643, %v2474, 0.0
    %v2828 = vadd.f32 %v2826, %v2827
    %v2829 = vsel %vm2643, %v2475, 0.0
    %v2830 = vadd.f32 %v2828, %v2829
    %v2831 = vsel %vm2643, %v2476, 0.0
    %v2832 = vadd.f32 %v2830, %v2831
    %v2833 = vsel %vm2643, %v2477, 0.0
    %v2834 = vadd.f32 %v2832, %v2833
    %v2835 = vsel %vm2643, %v2478, 0.0
    %v2836 = vadd.f32 %v2834, %v2835
    %v2837 = vsel %vm2643, %v2479, 0.0
    %v2838 = vadd.f32 %v2836, %v2837
    %v2839 = vsel %vm2643, %v2480, 0.0
    %v2840 = vadd.f32 %v2838, %v2839
    %v2841 = vsel %vm2643, %v2481, 0.0
    %v2842 = vadd.f32 %v2840, %v2841
    %v2843 = vsel %vm2643, %v2482, 0.0
    %v2844 = vadd.f32 %v2842, %v2843
    %v2845 = vrot.slane %v2844, 4
    %v2846 = vadd.f32 %v2844, %v2845
    %v2847 = vrot.slane %v2846, 2
    %v2848 = vadd.f32 %v2846, %v2847
    %v2849 = vrot.slane %v2848, 1
    %v2850 = vadd.f32 %v2848, %v2849
    %v2851 = vsel %vm2643, %v2483, 0.0
    %v2852 = vsel %vm2643, %v2484, 0.0
    %v2853 = vadd.f32 %v2851, %v2852
    %v2854 = vsel %vm2643, %v2485, 0.0
    %v2855 = vadd.f32 %v2853, %v2854
    %v2856 = vsel %vm2643, %v2486, 0.0
    %v2857 = vadd.f32 %v2855, %v2856
    %v2858 = vsel %vm2643, %v2487, 0.0
    %v2859 = vadd.f32 %v2857, %v2858
    %v2860 = vsel %vm2643, %v2488, 0.0
    %v2861 = vadd.f32 %v2859, %v2860
    %v2862 = vsel %vm2643, %v2489, 0.0
    %v2863 = vadd.f32 %v2861, %v2862
    %v2864 = vsel %vm2643, %v2490, 0.0
    %v2865 = vadd.f32 %v2863, %v2864
    %v2866 = vsel %vm2643, %v2491, 0.0
    %v2867 = vadd.f32 %v2865, %v2866
    %v2868 = vsel %vm2643, %v2492, 0.0
    %v2869 = vadd.f32 %v2867, %v2868
    %v2870 = vsel %vm2643, %v2493, 0.0
    %v2871 = vadd.f32 %v2869, %v2870
    %v2872 = vsel %vm2643, %v2494, 0.0
    %v2873 = vadd.f32 %v2871, %v2872
    %v2874 = vsel %vm2643, %v2495, 0.0
    %v2875 = vadd.f32 %v2873, %v2874
    %v2876 = vsel %vm2643, %v2496, 0.0
    %v2877 = vadd.f32 %v2875, %v2876
    %v2878 = vsel %vm2643, %v2497, 0.0
    %v2879 = vadd.f32 %v2877, %v2878
    %v2880 = vsel %vm2643, %v2498, 0.0
    %v2881 = vadd.f32 %v2879, %v2880
    %v2882 = vsel %vm2643, %v2499, 0.0
    %v2883 = vadd.f32 %v2881, %v2882
    %v2884 = vsel %vm2643, %v2500, 0.0
    %v2885 = vadd.f32 %v2883, %v2884
    %v2886 = vsel %vm2643, %v2501, 0.0
    %v2887 = vadd.f32 %v2885, %v2886
    %v2888 = vsel %vm2643, %v2502, 0.0
    %v2889 = vadd.f32 %v2887, %v2888
    %v2890 = vsel %vm2643, %v2503, 0.0
    %v2891 = vadd.f32 %v2889, %v2890
    %v2892 = vsel %vm2643, %v2504, 0.0
    %v2893 = vadd.f32 %v2891, %v2892
    %v2894 = vsel %vm2643, %v2505, 0.0
    %v2895 = vadd.f32 %v2893, %v2894
    %v2896 = vsel %vm2643, %v2506, 0.0
    %v2897 = vadd.f32 %v2895, %v2896
    %v2898 = vsel %vm2643, %v2507, 0.0
    %v2899 = vadd.f32 %v2897, %v2898
    %v2900 = vsel %vm2643, %v2508, 0.0
    %v2901 = vadd.f32 %v2899, %v2900
    %v2902 = vsel %vm2643, %v2509, 0.0
    %v2903 = vadd.f32 %v2901, %v2902
    %v2904 = vsel %vm2643, %v2510, 0.0
    %v2905 = vadd.f32 %v2903, %v2904
    %v2906 = vsel %vm2643, %v2511, 0.0
    %v2907 = vadd.f32 %v2905, %v2906
    %v2908 = vsel %vm2643, %v2512, 0.0
    %v2909 = vadd.f32 %v2907, %v2908
    %v2910 = vsel %vm2643, %v2513, 0.0
    %v2911 = vadd.f32 %v2909, %v2910
    %v2912 = vsel %vm2643, %v2514, 0.0
    %v2913 = vadd.f32 %v2911, %v2912
    %v2914 = vrot.slane %v2913, 4
    %v2915 = vadd.f32 %v2913, %v2914
    %v2916 = vrot.slane %v2915, 2
    %v2917 = vadd.f32 %v2915, %v2916
    %v2918 = vrot.slane %v2917, 1
    %v2919 = vadd.f32 %v2917, %v2918
    %v2920 = vsel %vm2643, %v2515, 0.0
    %v2921 = vsel %vm2643, %v2516, 0.0
    %v2922 = vadd.f32 %v2920, %v2921
    %v2923 = vsel %vm2643, %v2517, 0.0
    %v2924 = vadd.f32 %v2922, %v2923
    %v2925 = vsel %vm2643, %v2518, 0.0
    %v2926 = vadd.f32 %v2924, %v2925
    %v2927 = vsel %vm2643, %v2519, 0.0
    %v2928 = vadd.f32 %v2926, %v2927
    %v2929 = vsel %vm2643, %v2520, 0.0
    %v2930 = vadd.f32 %v2928, %v2929
    %v2931 = vsel %vm2643, %v2521, 0.0
    %v2932 = vadd.f32 %v2930, %v2931
    %v2933 = vsel %vm2643, %v2522, 0.0
    %v2934 = vadd.f32 %v2932, %v2933
    %v2935 = vsel %vm2643, %v2523, 0.0
    %v2936 = vadd.f32 %v2934, %v2935
    %v2937 = vsel %vm2643, %v2524, 0.0
    %v2938 = vadd.f32 %v2936, %v2937
    %v2939 = vsel %vm2643, %v2525, 0.0
    %v2940 = vadd.f32 %v2938, %v2939
    %v2941 = vsel %vm2643, %v2526, 0.0
    %v2942 = vadd.f32 %v2940, %v2941
    %v2943 = vsel %vm2643, %v2527, 0.0
    %v2944 = vadd.f32 %v2942, %v2943
    %v2945 = vsel %vm2643, %v2528, 0.0
    %v2946 = vadd.f32 %v2944, %v2945
    %v2947 = vsel %vm2643, %v2529, 0.0
    %v2948 = vadd.f32 %v2946, %v2947
    %v2949 = vsel %vm2643, %v2530, 0.0
    %v2950 = vadd.f32 %v2948, %v2949
    %v2951 = vsel %vm2643, %v2531, 0.0
    %v2952 = vadd.f32 %v2950, %v2951
    %v2953 = vsel %vm2643, %v2532, 0.0
    %v2954 = vadd.f32 %v2952, %v2953
    %v2955 = vsel %vm2643, %v2533, 0.0
    %v2956 = vadd.f32 %v2954, %v2955
    %v2957 = vsel %vm2643, %v2534, 0.0
    %v2958 = vadd.f32 %v2956, %v2957
    %v2959 = vsel %vm2643, %v2535, 0.0
    %v2960 = vadd.f32 %v2958, %v2959
    %v2961 = vsel %vm2643, %v2536, 0.0
    %v2962 = vadd.f32 %v2960, %v2961
    %v2963 = vsel %vm2643, %v2537, 0.0
    %v2964 = vadd.f32 %v2962, %v2963
    %v2965 = vsel %vm2643, %v2538, 0.0
    %v2966 = vadd.f32 %v2964, %v2965
    %v2967 = vsel %vm2643, %v2539, 0.0
    %v2968 = vadd.f32 %v2966, %v2967
    %v2969 = vsel %vm2643, %v2540, 0.0
    %v2970 = vadd.f32 %v2968, %v2969
    %v2971 = vsel %vm2643, %v2541, 0.0
    %v2972 = vadd.f32 %v2970, %v2971
    %v2973 = vsel %vm2643, %v2542, 0.0
    %v2974 = vadd.f32 %v2972, %v2973
    %v2975 = vsel %vm2643, %v2543, 0.0
    %v2976 = vadd.f32 %v2974, %v2975
    %v2977 = vsel %vm2643, %v2544, 0.0
    %v2978 = vadd.f32 %v2976, %v2977
    %v2979 = vsel %vm2643, %v2545, 0.0
    %v2980 = vadd.f32 %v2978, %v2979
    %v2981 = vsel %vm2643, %v2546, 0.0
    %v2982 = vadd.f32 %v2980, %v2981
    %v2983 = vrot.slane %v2982, 4
    %v2984 = vadd.f32 %v2982, %v2983
    %v2985 = vrot.slane %v2984, 2
    %v2986 = vadd.f32 %v2984, %v2985
    %v2987 = vrot.slane %v2986, 1
    %v2988 = vadd.f32 %v2986, %v2987
    %v2989 = vsel %vm2643, %v2547, 0.0
    %v2990 = vsel %vm2643, %v2548, 0.0
    %v2991 = vadd.f32 %v2989, %v2990
    %v2992 = vsel %vm2643, %v2549, 0.0
    %v2993 = vadd.f32 %v2991, %v2992
    %v2994 = vsel %vm2643, %v2550, 0.0
    %v2995 = vadd.f32 %v2993, %v2994
    %v2996 = vsel %vm2643, %v2551, 0.0
    %v2997 = vadd.f32 %v2995, %v2996
    %v2998 = vsel %vm2643, %v2552, 0.0
    %v2999 = vadd.f32 %v2997, %v2998
    %v3000 = vsel %vm2643, %v2553, 0.0
    %v3001 = vadd.f32 %v2999, %v3000
    %v3002 = vsel %vm2643, %v2554, 0.0
    %v3003 = vadd.f32 %v3001, %v3002
    %v3004 = vsel %vm2643, %v2555, 0.0
    %v3005 = vadd.f32 %v3003, %v3004
    %v3006 = vsel %vm2643, %v2556, 0.0
    %v3007 = vadd.f32 %v3005, %v3006
    %v3008 = vsel %vm2643, %v2557, 0.0
    %v3009 = vadd.f32 %v3007, %v3008
    %v3010 = vsel %vm2643, %v2558, 0.0
    %v3011 = vadd.f32 %v3009, %v3010
    %v3012 = vsel %vm2643, %v2559, 0.0
    %v3013 = vadd.f32 %v3011, %v3012
    %v3014 = vsel %vm2643, %v2560, 0.0
    %v3015 = vadd.f32 %v3013, %v3014
    %v3016 = vsel %vm2643, %v2561, 0.0
    %v3017 = vadd.f32 %v3015, %v3016
    %v3018 = vsel %vm2643, %v2562, 0.0
    %v3019 = vadd.f32 %v3017, %v3018
    %v3020 = vsel %vm2643, %v2563, 0.0
    %v3021 = vadd.f32 %v3019, %v3020
    %v3022 = vsel %vm2643, %v2564, 0.0
    %v3023 = vadd.f32 %v3021, %v3022
    %v3024 = vsel %vm2643, %v2565, 0.0
    %v3025 = vadd.f32 %v3023, %v3024
    %v3026 = vsel %vm2643, %v2566, 0.0
    %v3027 = vadd.f32 %v3025, %v3026
    %v3028 = vsel %vm2643, %v2567, 0.0
    %v3029 = vadd.f32 %v3027, %v3028
    %v3030 = vsel %vm2643, %v2568, 0.0
    %v3031 = vadd.f32 %v3029, %v3030
    %v3032 = vsel %vm2643, %v2569, 0.0
    %v3033 = vadd.f32 %v3031, %v3032
    %v3034 = vsel %vm2643, %v2570, 0.0
    %v3035 = vadd.f32 %v3033, %v3034
    %v3036 = vsel %vm2643, %v2571, 0.0
    %v3037 = vadd.f32 %v3035, %v3036
    %v3038 = vsel %vm2643, %v2572, 0.0
    %v3039 = vadd.f32 %v3037, %v3038
    %v3040 = vsel %vm2643, %v2573, 0.0
    %v3041 = vadd.f32 %v3039, %v3040
    %v3042 = vsel %vm2643, %v2574, 0.0
    %v3043 = vadd.f32 %v3041, %v3042
    %v3044 = vsel %vm2643, %v2575, 0.0
    %v3045 = vadd.f32 %v3043, %v3044
    %v3046 = vsel %vm2643, %v2576, 0.0
    %v3047 = vadd.f32 %v3045, %v3046
    %v3048 = vsel %vm2643, %v2577, 0.0
    %v3049 = vadd.f32 %v3047, %v3048
    %v3050 = vsel %vm2643, %v2578, 0.0
    %v3051 = vadd.f32 %v3049, %v3050
    %v3052 = vrot.slane %v3051, 4
    %v3053 = vadd.f32 %v3051, %v3052
    %v3054 = vrot.slane %v3053, 2
    %v3055 = vadd.f32 %v3053, %v3054
    %v3056 = vrot.slane %v3055, 1
    %v3057 = vadd.f32 %v3055, %v3056
    %v3058 = vsel %vm2643, %v2579, 0.0
    %v3059 = vsel %vm2643, %v2580, 0.0
    %v3060 = vadd.f32 %v3058, %v3059
    %v3061 = vsel %vm2643, %v2581, 0.0
    %v3062 = vadd.f32 %v3060, %v3061
    %v3063 = vsel %vm2643, %v2582, 0.0
    %v3064 = vadd.f32 %v3062, %v3063
    %v3065 = vsel %vm2643, %v2583, 0.0
    %v3066 = vadd.f32 %v3064, %v3065
    %v3067 = vsel %vm2643, %v2584, 0.0
    %v3068 = vadd.f32 %v3066, %v3067
    %v3069 = vsel %vm2643, %v2585, 0.0
    %v3070 = vadd.f32 %v3068, %v3069
    %v3071 = vsel %vm2643, %v2586, 0.0
    %v3072 = vadd.f32 %v3070, %v3071
    %v3073 = vsel %vm2643, %v2587, 0.0
    %v3074 = vadd.f32 %v3072, %v3073
    %v3075 = vsel %vm2643, %v2588, 0.0
    %v3076 = vadd.f32 %v3074, %v3075
    %v3077 = vsel %vm2643, %v2589, 0.0
    %v3078 = vadd.f32 %v3076, %v3077
    %v3079 = vsel %vm2643, %v2590, 0.0
    %v3080 = vadd.f32 %v3078, %v3079
    %v3081 = vsel %vm2643, %v2591, 0.0
    %v3082 = vadd.f32 %v3080, %v3081
    %v3083 = vsel %vm2643, %v2592, 0.0
    %v3084 = vadd.f32 %v3082, %v3083
    %v3085 = vsel %vm2643, %v2593, 0.0
    %v3086 = vadd.f32 %v3084, %v3085
    %v3087 = vsel %vm2643, %v2594, 0.0
    %v3088 = vadd.f32 %v3086, %v3087
    %v3089 = vsel %vm2643, %v2595, 0.0
    %v3090 = vadd.f32 %v3088, %v3089
    %v3091 = vsel %vm2643, %v2596, 0.0
    %v3092 = vadd.f32 %v3090, %v3091
    %v3093 = vsel %vm2643, %v2597, 0.0
    %v3094 = vadd.f32 %v3092, %v3093
    %v3095 = vsel %vm2643, %v2598, 0.0
    %v3096 = vadd.f32 %v3094, %v3095
    %v3097 = vsel %vm2643, %v2599, 0.0
    %v3098 = vadd.f32 %v3096, %v3097
    %v3099 = vsel %vm2643, %v2600, 0.0
    %v3100 = vadd.f32 %v3098, %v3099
    %v3101 = vsel %vm2643, %v2601, 0.0
    %v3102 = vadd.f32 %v3100, %v3101
    %v3103 = vsel %vm2643, %v2602, 0.0
    %v3104 = vadd.f32 %v3102, %v3103
    %v3105 = vsel %vm2643, %v2603, 0.0
    %v3106 = vadd.f32 %v3104, %v3105
    %v3107 = vsel %vm2643, %v2604, 0.0
    %v3108 = vadd.f32 %v3106, %v3107
    %v3109 = vsel %vm2643, %v2605, 0.0
    %v3110 = vadd.f32 %v3108, %v3109
    %v3111 = vsel %vm2643, %v2606, 0.0
    %v3112 = vadd.f32 %v3110, %v3111
    %v3113 = vsel %vm2643, %v2607, 0.0
    %v3114 = vadd.f32 %v3112, %v3113
    %v3115 = vsel %vm2643, %v2608, 0.0
    %v3116 = vadd.f32 %v3114, %v3115
    %v3117 = vsel %vm2643, %v2609, 0.0
    %v3118 = vadd.f32 %v3116, %v3117
    %v3119 = vsel %vm2643, %v2610, 0.0
    %v3120 = vadd.f32 %v3118, %v3119
    %v3121 = vrot.slane %v3120, 4
    %v3122 = vadd.f32 %v3120, %v3121
    %v3123 = vrot.slane %v3122, 2
    %v3124 = vadd.f32 %v3122, %v3123
    %v3125 = vrot.slane %v3124, 1
    %v3126 = vadd.f32 %v3124, %v3125
    %v3127 = vsel %vm2643, %v2611, 0.0
    %v3128 = vsel %vm2643, %v2612, 0.0
    %v3129 = vadd.f32 %v3127, %v3128
    %v3130 = vsel %vm2643, %v2613, 0.0
    %v3131 = vadd.f32 %v3129, %v3130
    %v3132 = vsel %vm2643, %v2614, 0.0
    %v3133 = vadd.f32 %v3131, %v3132
    %v3134 = vsel %vm2643, %v2615, 0.0
    %v3135 = vadd.f32 %v3133, %v3134
    %v3136 = vsel %vm2643, %v2616, 0.0
    %v3137 = vadd.f32 %v3135, %v3136
    %v3138 = vsel %vm2643, %v2617, 0.0
    %v3139 = vadd.f32 %v3137, %v3138
    %v3140 = vsel %vm2643, %v2618, 0.0
    %v3141 = vadd.f32 %v3139, %v3140
    %v3142 = vsel %vm2643, %v2619, 0.0
    %v3143 = vadd.f32 %v3141, %v3142
    %v3144 = vsel %vm2643, %v2620, 0.0
    %v3145 = vadd.f32 %v3143, %v3144
    %v3146 = vsel %vm2643, %v2621, 0.0
    %v3147 = vadd.f32 %v3145, %v3146
    %v3148 = vsel %vm2643, %v2622, 0.0
    %v3149 = vadd.f32 %v3147, %v3148
    %v3150 = vsel %vm2643, %v2623, 0.0
    %v3151 = vadd.f32 %v3149, %v3150
    %v3152 = vsel %vm2643, %v2624, 0.0
    %v3153 = vadd.f32 %v3151, %v3152
    %v3154 = vsel %vm2643, %v2625, 0.0
    %v3155 = vadd.f32 %v3153, %v3154
    %v3156 = vsel %vm2643, %v2626, 0.0
    %v3157 = vadd.f32 %v3155, %v3156
    %v3158 = vsel %vm2643, %v2627, 0.0
    %v3159 = vadd.f32 %v3157, %v3158
    %v3160 = vsel %vm2643, %v2628, 0.0
    %v3161 = vadd.f32 %v3159, %v3160
    %v3162 = vsel %vm2643, %v2629, 0.0
    %v3163 = vadd.f32 %v3161, %v3162
    %v3164 = vsel %vm2643, %v2630, 0.0
    %v3165 = vadd.f32 %v3163, %v3164
    %v3166 = vsel %vm2643, %v2631, 0.0
    %v3167 = vadd.f32 %v3165, %v3166
    %v3168 = vsel %vm2643, %v2632, 0.0
    %v3169 = vadd.f32 %v3167, %v3168
    %v3170 = vsel %vm2643, %v2633, 0.0
    %v3171 = vadd.f32 %v3169, %v3170
    %v3172 = vsel %vm2643, %v2634, 0.0
    %v3173 = vadd.f32 %v3171, %v3172
    %v3174 = vsel %vm2643, %v2635, 0.0
    %v3175 = vadd.f32 %v3173, %v3174
    %v3176 = vsel %vm2643, %v2636, 0.0
    %v3177 = vadd.f32 %v3175, %v3176
    %v3178 = vsel %vm2643, %v2637, 0.0
    %v3179 = vadd.f32 %v3177, %v3178
    %v3180 = vsel %vm2643, %v2638, 0.0
    %v3181 = vadd.f32 %v3179, %v3180
    %v3182 = vsel %vm2643, %v2639, 0.0
    %v3183 = vadd.f32 %v3181, %v3182
    %v3184 = vsel %vm2643, %v2640, 0.0
    %v3185 = vadd.f32 %v3183, %v3184
    %v3186 = vsel %vm2643, %v2641, 0.0
    %v3187 = vadd.f32 %v3185, %v3186
    %v3188 = vsel %vm2643, %v2642, 0.0
    %v3189 = vadd.f32 %v3187, %v3188
    %v3190 = vrot.slane %v3189, 4
    %v3191 = vadd.f32 %v3189, %v3190
    %v3192 = vrot.slane %v3191, 2
    %v3193 = vadd.f32 %v3191, %v3192
    %v3194 = vrot.slane %v3193, 1
    %v3195 = vadd.f32 %v3193, %v3194
    %v3196 = vmul.f32 %v2712, 0.00390625
    %v3197 = vmul.f32 %v2781, 0.00390625
    %v3198 = vmul.f32 %v2850, 0.00390625
    %v3199 = vmul.f32 %v2919, 0.00390625
    %v3200 = vmul.f32 %v2988, 0.00390625
    %v3201 = vmul.f32 %v3057, 0.00390625
    %v3202 = vmul.f32 %v3126, 0.00390625
    %v3203 = vmul.f32 %v3195, 0.00390625
    %v3204 = vpack.c.bf16 %v3196, %v3196
    %v3205 = vpack.c.bf16 %v3197, %v3197
    %v3206 = vpack.c.bf16 %v3198, %v3198
    %v3207 = vpack.c.bf16 %v3199, %v3199
    %v3208 = vpack.c.bf16 %v3200, %v3200
    %v3209 = vpack.c.bf16 %v3201, %v3201
    %v3210 = vpack.c.bf16 %v3202, %v3202
    %v3211 = vpack.c.bf16 %v3203, %v3203
    %v3212 = vld [vmem:[%s3 + $0x10] sm:$0xf]
    %v3213 = vld [vmem:[%s3 + $0x14] sm:$0xf]
    %v3214 = vlaneseq
    %v3215 = vshrl.u32 %v3214, 7
    %v3216 = vsub.s32 1, %v3215
    %v3217 = vrot.slane %v21, %v3216
    %v3226 = vunpack.c.l.b16 %v3204
    %v3227 = vunpack.c.l.b16 %v3205
    %v3228 = vunpack.c.l.b16 %v3206
    %v3229 = vunpack.c.l.b16 %v3207
    %v3230 = vunpack.c.l.b16 %v3208
    %v3231 = vunpack.c.l.b16 %v3209
    %v3232 = vunpack.c.l.b16 %v3210
    %v3233 = vunpack.c.l.b16 %v3211
    %vm3234 = vcmask 1041409
    %v3235 = vsel %vm3234, %v3227, %v3226
    %vm3236 = vcmask 1042434
    %v3237 = vsel %vm3236, %v3228, %v3235
    %vm3238 = vcmask 1043459
    %v3239 = vsel %vm3238, %v3229, %v3237
    %vm3240 = vcmask 1044484
    %v3241 = vsel %vm3240, %v3230, %v3239
    %vm3242 = vcmask 1045509
    %v3243 = vsel %vm3242, %v3231, %v3241
    %vm3244 = vcmask 1046534
    %v3245 = vsel %vm3244, %v3232, %v3243
    %vm3246 = vcmask 1047559
    %v3247 = vsel %vm3246, %v3233, %v3245
    %v3248 = vpack.c.b16 %v3247, %v3247
    %v3251 = vunpack.c.l.b16 %v3212
    %v3252 = vunpack.c.l.b16 %v3213
    %v3253 = vpack.c.b16 %v3252, %v3251
    %v3256 = vsel %vm2643, %v3248, 0
    %3258 = vmatprep.subr.bf16.mxu0 0
    %3259 = vmatpush1.bf16.msra.mxu0 %v3253
    %3260 = vmatprep.subr.bf16.mxu0 0
    %3261 = vmatpush1.bf16.msra.mxu0 0
    %3262 = vmatprep.subr.bf16.mxu0 0
    %3263 = vmatpush1.bf16.msra.mxu0 0
    %3264 = vmatprep.subr.bf16.mxu0 0
    %3265 = vmatpush1.bf16.msra.mxu0 0
    %3266 = vmatprep.subr.bf16.mxu0 0
    %3267 = vmatpush1.bf16.msra.mxu0 0
    %3268 = vmatprep.subr.bf16.mxu0 0
    %3269 = vmatpush1.bf16.msra.mxu0 0
    %3270 = vmatprep.subr.bf16.mxu0 0
    %3271 = vmatpush1.bf16.msra.mxu0 0
    %3272 = vmatprep.subr.bf16.mxu0 0
    %3273 = vmatpush1.bf16.msra.mxu0 0
    %3274 = vmatprep.subr.bf16.mxu0 0
    %3275 = vmatpush1.bf16.msra.mxu0 0
    %3276 = vmatprep.subr.bf16.mxu0 0
    %3277 = vmatpush1.bf16.msra.mxu0 0
    %3278 = vmatprep.subr.bf16.mxu0 0
    %3279 = vmatpush1.bf16.msra.mxu0 0
    %3280 = vmatprep.subr.bf16.mxu0 0
    %3281 = vmatpush1.bf16.msra.mxu0 0
    %3282 = vmatprep.subr.bf16.mxu0 0
    %3283 = vmatpush1.bf16.msra.mxu0 0
    %3284 = vmatprep.subr.bf16.mxu0 0
    %3285 = vmatpush1.bf16.msra.mxu0 0
    %3286 = vmatprep.subr.bf16.mxu0 0
    %3287 = vmatpush1.bf16.msra.mxu0 0
    %3288 = vmatprep.subr.bf16.mxu0 0
    %3289 = vmatpush1.bf16.msra.mxu0 0
    %3290 = vmatprep.mubr.bf16.mxu0 0
    %3291 = vmatmul.mubr.bf16.gmra.mrb[0].mxu0 %v3256
    %v3292 = vpop.f32.mrb[0].mxu0
    %v3293 = vadd.f32 %v3217, %v3292
    %v3294 = vpop.f32.mrb[0].mxu0
    %v3295 = vpop.f32.mrb[0].mxu0
    %v3296 = vpop.f32.mrb[0].mxu0
    %3297 = vdwg.mxu0
    %v3298 = vld [vmem:[%s2] sm:$0xff]
    %v3299 = vld [vmem:[%s2 + $0x8] sm:$0xff]
    %v3300 = vld [vmem:[%s2 + $0x10] sm:$0xff]
    %v3301 = vld [vmem:[%s2 + $0x18] sm:$0xff]
    %v3302 = vld [vmem:[%s2 + $0x20] sm:$0xff]
    %v3303 = vpack.c.bf16 %v3293, %v3293
    %v3304 = vld [vmem:[%s1] sm:$0xf]
    %v3306 = vunpack.c.l.b16 %v3302
    %v3307 = vunpack.c.h.b16 %v3302
    %v3308 = vpack.c.b16 %v3306, %v3306
    %v3309 = vpack.c.b16 %v3307, %v3307
    %vm3310 = vcmask 64512
    %v3312 = vsel %vm3310, %v3304, 0
    %vm3314 = vcmask 1043456
    %v3316 = vsel %vm3314, %v3308, 0
    %v3319 = vsel %vm3314, %v3309, 0
    %3321 = vmatprep.subr.bf16.mxu0 %v3319
    %3322 = vmatpush1.bf16.msra.mxu0 %v3316
    %3323 = vmatprep.subr.bf16.mxu0 0
    %3324 = vmatpush1.bf16.msra.mxu0 0
    %3325 = vmatprep.subr.bf16.mxu0 0
    %3326 = vmatpush1.bf16.msra.mxu0 0
    %3327 = vmatprep.subr.bf16.mxu0 0
    %3328 = vmatpush1.bf16.msra.mxu0 0
    %3329 = vmatprep.subr.bf16.mxu0 0
    %3330 = vmatpush1.bf16.msra.mxu0 0
    %3331 = vmatprep.subr.bf16.mxu0 0
    %3332 = vmatpush1.bf16.msra.mxu0 0
    %3333 = vmatprep.subr.bf16.mxu0 0
    %3334 = vmatpush1.bf16.msra.mxu0 0
    %3335 = vmatprep.subr.bf16.mxu0 0
    %3336 = vmatpush1.bf16.msra.mxu0 0
    %3337 = vmatprep.subr.bf16.mxu0 0
    %3338 = vmatpush1.bf16.msra.mxu0 0
    %3339 = vmatprep.subr.bf16.mxu0 0
    %3340 = vmatpush1.bf16.msra.mxu0 0
    %3341 = vmatprep.subr.bf16.mxu0 0
    %3342 = vmatpush1.bf16.msra.mxu0 0
    %3343 = vmatprep.subr.bf16.mxu0 0
    %3344 = vmatpush1.bf16.msra.mxu0 0
    %3345 = vmatprep.subr.bf16.mxu0 0
    %3346 = vmatpush1.bf16.msra.mxu0 0
    %3347 = vmatprep.subr.bf16.mxu0 0
    %3348 = vmatpush1.bf16.msra.mxu0 0
    %3349 = vmatprep.subr.bf16.mxu0 0
    %3350 = vmatpush1.bf16.msra.mxu0 0
    %3351 = vmatprep.subr.bf16.mxu0 0
    %3352 = vmatpush1.bf16.msra.mxu0 0
    %3353 = vmatprep.mubr.bf16.mxu0 0
    %3354 = vmatmul.mubr.bf16.gmra.mrb[0].mxu0 %v3312
    %v3355 = vpop.f32.mrb[0].mxu0
    %v3356 = vadd.f32 0.0, %v3355
    %v3357 = vpop.f32.mrb[0].mxu0
    %v3358 = vadd.f32 0.0, %v3357
    %v3359 = vpop.f32.mrb[0].mxu0
    %v3360 = vpop.f32.mrb[0].mxu0
    %3361 = vdwg.mxu0
    %v3366 = vunpack.c.l.b16 %v3298
    %v3367 = vunpack.c.h.b16 %v3298
    %v3368 = vunpack.c.l.b16 %v3299
    %v3369 = vunpack.c.h.b16 %v3299
    %v3370 = vunpack.c.l.b16 %v3300
    %v3371 = vunpack.c.h.b16 %v3300
    %v3372 = vunpack.c.l.b16 %v3301
    %v3373 = vunpack.c.h.b16 %v3301
    %v3374 = vpack.c.b16 %v3368, %v3366
    %v3375 = vpack.c.b16 %v3369, %v3367
    %v3376 = vpack.c.b16 %v3372, %v3370
    %v3377 = vpack.c.b16 %v3373, %v3371
    %vm3382 = vcmask 261120
    %v3384 = vsel %vm3382, %v3303, 0
    %3386 = vmatprep.subr.bf16.mxu0 %v3375
    %3387 = vmatpush1.bf16.msra.mxu0 %v3374
    %3388 = vmatprep.subr.bf16.mxu0 %v3377
    %3389 = vmatpush1.bf16.msra.mxu0 %v3376
    %3390 = vmatprep.subr.bf16.mxu0 0
    %3391 = vmatpush1.bf16.msra.mxu0 0
    %3392 = vmatprep.subr.bf16.mxu0 0
    %3393 = vmatpush1.bf16.msra.mxu0 0
    %3394 = vmatprep.subr.bf16.mxu0 0
    %3395 = vmatpush1.bf16.msra.mxu0 0
    %3396 = vmatprep.subr.bf16.mxu0 0
    %3397 = vmatpush1.bf16.msra.mxu0 0
    %3398 = vmatprep.subr.bf16.mxu0 0
    %3399 = vmatpush1.bf16.msra.mxu0 0
    %3400 = vmatprep.subr.bf16.mxu0 0
    %3401 = vmatpush1.bf16.msra.mxu0 0
    %3402 = vmatprep.subr.bf16.mxu0 0
    %3403 = vmatpush1.bf16.msra.mxu0 0
    %3404 = vmatprep.subr.bf16.mxu0 0
    %3405 = vmatpush1.bf16.msra.mxu0 0
    %3406 = vmatprep.subr.bf16.mxu0 0
    %3407 = vmatpush1.bf16.msra.mxu0 0
    %3408 = vmatprep.subr.bf16.mxu0 0
    %3409 = vmatpush1.bf16.msra.mxu0 0
    %3410 = vmatprep.subr.bf16.mxu0 0
    %3411 = vmatpush1.bf16.msra.mxu0 0
    %3412 = vmatprep.subr.bf16.mxu0 0
    %3413 = vmatpush1.bf16.msra.mxu0 0
    %3414 = vmatprep.subr.bf16.mxu0 0
    %3415 = vmatpush1.bf16.msra.mxu0 0
    %3416 = vmatprep.subr.bf16.mxu0 0
    %3417 = vmatpush1.bf16.msra.mxu0 0
    %3418 = vmatprep.mubr.bf16.mxu0 0
    %3419 = vmatmul.mubr.bf16.gmra.mrb[0].mxu0 %v3384
    %v3420 = vpop.f32.mrb[0].mxu0
    %v3421 = vadd.f32 %v3356, %v3420
    %v3422 = vpop.f32.mrb[0].mxu0
    %v3423 = vadd.f32 %v3358, %v3422
    %v3424 = vpop.f32.mrb[0].mxu0
    %v3425 = vpop.f32.mrb[0].mxu0
    %3426 = vdwg.mxu0
    %v3427 = vld [vmem:[%s2 + $0x68] sm:$0x11]
    %v3428 = vunpack.c.l.bf16 %v3427
    %v3429 = vunpack.c.h.bf16 %v3427
    %v3430 = vlaneseq
    %v3431 = vshrl.u32 %v3430, 7
    %v3432 = vsub.s32 0, %v3431
    %v3433 = vrot.slane %v3428, %v3432
    %v3434 = vlaneseq
    %v3435 = vshrl.u32 %v3434, 7
    %v3436 = vsub.s32 0, %v3435
    %v3437 = vrot.slane %v3429, %v3436
    %v3438 = vadd.f32 %v3421, %v3433
    %v3439 = vadd.f32 %v3423, %v3437
    %v3440 = vld [vmem:[%s2 + $0x28] sm:$0xff]
    %v3441 = vld [vmem:[%s2 + $0x30] sm:$0xff]
    %v3442 = vld [vmem:[%s2 + $0x38] sm:$0xff]
    %v3443 = vld [vmem:[%s2 + $0x40] sm:$0xff]
    %v3444 = vld [vmem:[%s2 + $0x48] sm:$0xff]
    %v3445 = vld [vmem:[%s2 + $0x50] sm:$0xff]
    %v3446 = vld [vmem:[%s2 + $0x58] sm:$0xff]
    %v3447 = vld [vmem:[%s2 + $0x60] sm:$0xff]
    %v3456 = vunpack.c.l.b16 %v3440
    %v3457 = vunpack.c.h.b16 %v3440
    %v3458 = vunpack.c.l.b16 %v3441
    %v3459 = vunpack.c.h.b16 %v3441
    %v3460 = vunpack.c.l.b16 %v3442
    %v3461 = vunpack.c.h.b16 %v3442
    %v3462 = vunpack.c.l.b16 %v3443
    %v3463 = vunpack.c.h.b16 %v3443
    %v3464 = vunpack.c.l.b16 %v3444
    %v3465 = vunpack.c.h.b16 %v3444
    %v3466 = vunpack.c.l.b16 %v3445
    %v3467 = vunpack.c.h.b16 %v3445
    %v3468 = vunpack.c.l.b16 %v3446
    %v3469 = vunpack.c.h.b16 %v3446
    %v3470 = vunpack.c.l.b16 %v3447
    %v3471 = vunpack.c.h.b16 %v3447
    %v3472 = vpack.c.b16 %v3458, %v3456
    %v3473 = vpack.c.b16 %v3459, %v3457
    %v3474 = vpack.c.b16 %v3462, %v3460
    %v3475 = vpack.c.b16 %v3463, %v3461
    %v3476 = vpack.c.b16 %v3466, %v3464
    %v3477 = vpack.c.b16 %v3467, %v3465
    %v3478 = vpack.c.b16 %v3470, %v3468
    %v3479 = vpack.c.b16 %v3471, %v3469
    %vm3488 = vcmask 523264
    %v3490 = vsel %vm3488, 0, 0
    %3492 = vmatprep.subr.bf16.mxu0 %v3473
    %3493 = vmatpush1.bf16.msra.mxu0 %v3472
    %3494 = vmatprep.subr.bf16.mxu0 %v3475
    %3495 = vmatpush1.bf16.msra.mxu0 %v3474
    %3496 = vmatprep.subr.bf16.mxu0 %v3477
    %3497 = vmatpush1.bf16.msra.mxu0 %v3476
    %3498 = vmatprep.subr.bf16.mxu0 %v3479
    %3499 = vmatpush1.bf16.msra.mxu0 %v3478
    %3500 = vmatprep.subr.bf16.mxu0 0
    %3501 = vmatpush1.bf16.msra.mxu0 0
    %3502 = vmatprep.subr.bf16.mxu0 0
    %3503 = vmatpush1.bf16.msra.mxu0 0
    %3504 = vmatprep.subr.bf16.mxu0 0
    %3505 = vmatpush1.bf16.msra.mxu0 0
    %3506 = vmatprep.subr.bf16.mxu0 0
    %3507 = vmatpush1.bf16.msra.mxu0 0
    %3508 = vmatprep.subr.bf16.mxu0 0
    %3509 = vmatpush1.bf16.msra.mxu0 0
    %3510 = vmatprep.subr.bf16.mxu0 0
    %3511 = vmatpush1.bf16.msra.mxu0 0
    %3512 = vmatprep.subr.bf16.mxu0 0
    %3513 = vmatpush1.bf16.msra.mxu0 0
    %3514 = vmatprep.subr.bf16.mxu0 0
    %3515 = vmatpush1.bf16.msra.mxu0 0
    %3516 = vmatprep.subr.bf16.mxu0 0
    %3517 = vmatpush1.bf16.msra.mxu0 0
    %3518 = vmatprep.subr.bf16.mxu0 0
    %3519 = vmatpush1.bf16.msra.mxu0 0
    %3520 = vmatprep.subr.bf16.mxu0 0
    %3521 = vmatpush1.bf16.msra.mxu0 0
    %3522 = vmatprep.subr.bf16.mxu0 0
    %3523 = vmatpush1.bf16.msra.mxu0 0
    %3524 = vmatprep.mubr.bf16.mxu0 0
    %3525 = vmatmul.mubr.bf16.gmra.mrb[0].mxu0 %v3490
    %v3526 = vpop.f32.mrb[0].mxu0
    %v3527 = vadd.f32 0.0, %v3526
    %v3528 = vpop.f32.mrb[0].mxu0
    %v3529 = vadd.f32 0.0, %v3528
    %v3530 = vpop.f32.mrb[0].mxu0
    %v3531 = vpop.f32.mrb[0].mxu0
    %3532 = vdwg.mxu0
    %v3533 = vadd.f32 %v3438, %v3527
    %v3534 = vadd.f32 %v3439, %v3529
    %v3535 = vxor.u32 %v3533, 2147483648
    %v3536 = vmul.f32 %v3535, 1.442695
    %v3537 = vpow.pop %v3536
    %v3538 = vadd.f32 %v3537, 1.0
    %v3539 = vrcp.pop %v3538
    %v3540 = vmul.f32 1.0, %v3539
    %v3541 = vtanh.pop %v3534
    %v3542 = vxor.u32 %v3534, 2147483648
    %v3543 = vmul.f32 %v3542, 1.442695
    %v3544 = vpow.pop %v3543
    %v3545 = vadd.f32 %v3544, 1.0
    %v3546 = vrcp.pop %v3545
    %v3547 = vmul.f32 1.0, %v3546
    %v3548 = vmul.f32 %v3540, 0.0
    %v3549 = vmul.f32 %v3540, %v3541
    %3551 = vrot.lane.b32.xlu0 %v3549, 64
    %v3552 = vpop.permute.xlu0 %3551
    %v3554 = vadd.f32 %v3548, %v3552
    %v3555 = vtanh.pop %v3554
    %v3556 = vmul.f32 %v3547, %v3555
    %v3557 = vpack.c.bf16 %v3556, %v3556
    %3559 = vrot.lane.b32.xlu0 %v3557, 64
    %v3560 = vpop.permute.xlu0 %3559
    %v3562 = vsel %vm3488, %v3560, 0
    %3564 = vmatprep.subr.bf16.mxu0 %v3473
    %3565 = vmatpush1.bf16.msra.mxu0 %v3472
    %3566 = vmatprep.subr.bf16.mxu0 %v3475
    %3567 = vmatpush1.bf16.msra.mxu0 %v3474
    %3568 = vmatprep.subr.bf16.mxu0 %v3477
    %3569 = vmatpush1.bf16.msra.mxu0 %v3476
    %3570 = vmatprep.subr.bf16.mxu0 %v3479
    %3571 = vmatpush1.bf16.msra.mxu0 %v3478
    %3572 = vmatprep.subr.bf16.mxu0 0
    %3573 = vmatpush1.bf16.msra.mxu0 0
    %3574 = vmatprep.subr.bf16.mxu0 0
    %3575 = vmatpush1.bf16.msra.mxu0 0
    %3576 = vmatprep.subr.bf16.mxu0 0
    %3577 = vmatpush1.bf16.msra.mxu0 0
    %3578 = vmatprep.subr.bf16.mxu0 0
    %3579 = vmatpush1.bf16.msra.mxu0 0
    %3580 = vmatprep.subr.bf16.mxu0 0
    %3581 = vmatpush1.bf16.msra.mxu0 0
    %3582 = vmatprep.subr.bf16.mxu0 0
    %3583 = vmatpush1.bf16.msra.mxu0 0
    %3584 = vmatprep.subr.bf16.mxu0 0
    %3585 = vmatpush1.bf16.msra.mxu0 0
    %3586 = vmatprep.subr.bf16.mxu0 0
    %3587 = vmatpush1.bf16.msra.mxu0 0
    %3588 = vmatprep.subr.bf16.mxu0 0
    %3589 = vmatpush1.bf16.msra.mxu0 0
    %3590 = vmatprep.subr.bf16.mxu0 0
    %3591 = vmatpush1.bf16.msra.mxu0 0
    %3592 = vmatprep.subr.bf16.mxu0 0
    %3593 = vmatpush1.bf16.msra.mxu0 0
    %3594 = vmatprep.subr.bf16.mxu0 0
    %3595 = vmatpush1.bf16.msra.mxu0 0
    %3596 = vmatprep.mubr.bf16.mxu0 0
    %3597 = vmatmul.mubr.bf16.gmra.mrb[0].mxu0 %v3562
    %v3598 = vpop.f32.mrb[0].mxu0
    %v3599 = vadd.f32 0.0, %v3598
    %v3600 = vpop.f32.mrb[0].mxu0
    %v3601 = vadd.f32 0.0, %v3600
    %v3602 = vpop.f32.mrb[0].mxu0
    %v3603 = vpop.f32.mrb[0].mxu0
    %3604 = vdwg.mxu0
    %v3607 = vrot.slane %v3599, 6
    %v3608 = vrot.slane %v3601, 6
    %v3611 = vadd.f32 %v3438, %v3607
    %v3612 = vadd.f32 %v3439, %v3608
    %v3613 = vxor.u32 %v3611, 2147483648
    %v3614 = vmul.f32 %v3613, 1.442695
    %v3615 = vpow.pop %v3614
    %v3616 = vadd.f32 %v3615, 1.0
    %v3617 = vrcp.pop %v3616
    %v3618 = vmul.f32 1.0, %v3617
    %v3619 = vtanh.pop %v3612
    %v3620 = vxor.u32 %v3612, 2147483648
    %v3621 = vmul.f32 %v3620, 1.442695
    %v3622 = vpow.pop %v3621
    %v3623 = vadd.f32 %v3622, 1.0
    %v3624 = vrcp.pop %v3623
    %v3625 = vmul.f32 1.0, %v3624
    %v3627 = vrot.slane %v3554, 6
    %v3629 = vmul.f32 %v3618, %v3627
    %v3630 = vmul.f32 %v3618, %v3619
    %3632 = vrot.lane.b32.xlu0 %v3630, 64
    %v3633 = vpop.permute.xlu0 %3632
    %v3635 = vadd.f32 %v3629, %v3633
    %v3636 = vtanh.pop %v3635
    %v3637 = vmul.f32 %v3625, %v3636
    %v3638 = vpack.c.bf16 %v3637, %v3637
    %v3640 = vrot.slane %v3638, 1
    %3641 = vrot.lane.b32.xlu0 %v3640, 64
    %v3642 = vpop.permute.xlu0 %3641
    %v3644 = vsel %vm3488, %v3642, 0
    %3646 = vmatprep.subr.bf16.mxu0 %v3473
    %3647 = vmatpush1.bf16.msra.mxu0 %v3472
    %3648 = vmatprep.subr.bf16.mxu0 %v3475
    %3649 = vmatpush1.bf16.msra.mxu0 %v3474
    %3650 = vmatprep.subr.bf16.mxu0 %v3477
    %3651 = vmatpush1.bf16.msra.mxu0 %v3476
    %3652 = vmatprep.subr.bf16.mxu0 %v3479
    %3653 = vmatpush1.bf16.msra.mxu0 %v3478
    %3654 = vmatprep.subr.bf16.mxu0 0
    %3655 = vmatpush1.bf16.msra.mxu0 0
    %3656 = vmatprep.subr.bf16.mxu0 0
    %3657 = vmatpush1.bf16.msra.mxu0 0
    %3658 = vmatprep.subr.bf16.mxu0 0
    %3659 = vmatpush1.bf16.msra.mxu0 0
    %3660 = vmatprep.subr.bf16.mxu0 0
    %3661 = vmatpush1.bf16.msra.mxu0 0
    %3662 = vmatprep.subr.bf16.mxu0 0
    %3663 = vmatpush1.bf16.msra.mxu0 0
    %3664 = vmatprep.subr.bf16.mxu0 0
    %3665 = vmatpush1.bf16.msra.mxu0 0
    %3666 = vmatprep.subr.bf16.mxu0 0
    %3667 = vmatpush1.bf16.msra.mxu0 0
    %3668 = vmatprep.subr.bf16.mxu0 0
    %3669 = vmatpush1.bf16.msra.mxu0 0
    %3670 = vmatprep.subr.bf16.mxu0 0
    %3671 = vmatpush1.bf16.msra.mxu0 0
    %3672 = vmatprep.subr.bf16.mxu0 0
    %3673 = vmatpush1.bf16.msra.mxu0 0
    %3674 = vmatprep.subr.bf16.mxu0 0
    %3675 = vmatpush1.bf16.msra.mxu0 0
    %3676 = vmatprep.subr.bf16.mxu0 0
    %3677 = vmatpush1.bf16.msra.mxu0 0
    %3678 = vmatprep.mubr.bf16.mxu0 0
    %3679 = vmatmul.mubr.bf16.gmra.mrb[0].mxu0 %v3644
    %v3680 = vpop.f32.mrb[0].mxu0
    %v3681 = vadd.f32 0.0, %v3680
    %v3682 = vpop.f32.mrb[0].mxu0
    %v3683 = vadd.f32 0.0, %v3682
    %v3684 = vpop.f32.mrb[0].mxu0
    %v3685 = vpop.f32.mrb[0].mxu0
    %3686 = vdwg.mxu0
    %v3689 = vrot.slane %v3681, 4
    %v3690 = vrot.slane %v3683, 4
    %v3693 = vadd.f32 %v3438, %v3689
    %v3694 = vadd.f32 %v3439, %v3690
    %v3695 = vxor.u32 %v3693, 2147483648
    %v3696 = vmul.f32 %v3695, 1.442695
    %v3697 = vpow.pop %v3696
    %v3698 = vadd.f32 %v3697, 1.0
    %v3699 = vrcp.pop %v3698
    %v3700 = vmul.f32 1.0, %v3699
    %v3701 = vtanh.pop %v3694
    %v3702 = vxor.u32 %v3694, 2147483648
    %v3703 = vmul.f32 %v3702, 1.442695
    %v3704 = vpow.pop %v3703
    %v3705 = vadd.f32 %v3704, 1.0
    %v3706 = vrcp.pop %v3705
    %v3707 = vmul.f32 1.0, %v3706
    %v3709 = vrot.slane %v3635, 6
    %v3711 = vmul.f32 %v3700, %v3709
    %v3712 = vmul.f32 %v3700, %v3701
    %3714 = vrot.lane.b32.xlu0 %v3712, 64
    %v3715 = vpop.permute.xlu0 %3714
    %v3717 = vadd.f32 %v3711, %v3715
    %v3718 = vtanh.pop %v3717
    %v3719 = vmul.f32 %v3707, %v3718
    %v3720 = vpack.c.bf16 %v3719, %v3719
    %v3722 = vrot.slane %v3720, 2
    %3723 = vrot.lane.b32.xlu0 %v3722, 64
    %v3724 = vpop.permute.xlu0 %3723
    %v3726 = vsel %vm3488, %v3724, 0
    %3728 = vmatprep.subr.bf16.mxu0 %v3473
    %3729 = vmatpush1.bf16.msra.mxu0 %v3472
    %3730 = vmatprep.subr.bf16.mxu0 %v3475
    %3731 = vmatpush1.bf16.msra.mxu0 %v3474
    %3732 = vmatprep.subr.bf16.mxu0 %v3477
    %3733 = vmatpush1.bf16.msra.mxu0 %v3476
    %3734 = vmatprep.subr.bf16.mxu0 %v3479
    %3735 = vmatpush1.bf16.msra.mxu0 %v3478
    %3736 = vmatprep.subr.bf16.mxu0 0
    %3737 = vmatpush1.bf16.msra.mxu0 0
    %3738 = vmatprep.subr.bf16.mxu0 0
    %3739 = vmatpush1.bf16.msra.mxu0 0
    %3740 = vmatprep.subr.bf16.mxu0 0
    %3741 = vmatpush1.bf16.msra.mxu0 0
    %3742 = vmatprep.subr.bf16.mxu0 0
    %3743 = vmatpush1.bf16.msra.mxu0 0
    %3744 = vmatprep.subr.bf16.mxu0 0
    %3745 = vmatpush1.bf16.msra.mxu0 0
    %3746 = vmatprep.subr.bf16.mxu0 0
    %3747 = vmatpush1.bf16.msra.mxu0 0
    %3748 = vmatprep.subr.bf16.mxu0 0
    %3749 = vmatpush1.bf16.msra.mxu0 0
    %3750 = vmatprep.subr.bf16.mxu0 0
    %3751 = vmatpush1.bf16.msra.mxu0 0
    %3752 = vmatprep.subr.bf16.mxu0 0
    %3753 = vmatpush1.bf16.msra.mxu0 0
    %3754 = vmatprep.subr.bf16.mxu0 0
    %3755 = vmatpush1.bf16.msra.mxu0 0
    %3756 = vmatprep.subr.bf16.mxu0 0
    %3757 = vmatpush1.bf16.msra.mxu0 0
    %3758 = vmatprep.subr.bf16.mxu0 0
    %3759 = vmatpush1.bf16.msra.mxu0 0
    %3760 = vmatprep.mubr.bf16.mxu0 0
    %3761 = vmatmul.mubr.bf16.gmra.mrb[0].mxu0 %v3726
    %v3762 = vpop.f32.mrb[0].mxu0
    %v3763 = vadd.f32 0.0, %v3762
    %v3764 = vpop.f32.mrb[0].mxu0
    %v3765 = vadd.f32 0.0, %v3764
    %v3766 = vpop.f32.mrb[0].mxu0
    %v3767 = vpop.f32.mrb[0].mxu0
    %3768 = vdwg.mxu0
    %v3771 = vrot.slane %v3763, 2
    %v3772 = vrot.slane %v3765, 2
    %v3775 = vadd.f32 %v3438, %v3771
    %v3776 = vadd.f32 %v3439, %v3772
    %v3777 = vxor.u32 %v3775, 2147483648
    %v3778 = vmul.f32 %v3777, 1.442695
    %v3779 = vpow.pop %v3778
    %v3780 = vadd.f32 %v3779, 1.0
    %v3781 = vrcp.pop %v3780
    %v3782 = vmul.f32 1.0, %v3781
    %v3783 = vtanh.pop %v3776
    %v3784 = vxor.u32 %v3776, 2147483648
    %v3785 = vmul.f32 %v3784, 1.442695
    %v3786 = vpow.pop %v3785
    %v3787 = vadd.f32 %v3786, 1.0
    %v3788 = vrcp.pop %v3787
    %v3789 = vmul.f32 1.0, %v3788
    %v3791 = vrot.slane %v3717, 6
    %v3793 = vmul.f32 %v3782, %v3791
    %v3794 = vmul.f32 %v3782, %v3783
    %3796 = vrot.lane.b32.xlu0 %v3794, 64
    %v3797 = vpop.permute.xlu0 %3796
    %v3799 = vadd.f32 %v3793, %v3797
    %v3800 = vtanh.pop %v3799
    %v3801 = vmul.f32 %v3789, %v3800
    %v3802 = vld [vmem:[%s3 + $0x28] sm:$0xf]
    %v3803 = vld [vmem:[%s3 + $0x2c] sm:$0xf]
    %v3804 = vld [vmem:[%s3 + $0x30] sm:$0xf]
    %v3805 = vld [vmem:[%s3 + $0x34] sm:$0xf]
    %v3806 = vld [vmem:[%s3 + $0x38] sm:$0xf]
    %v3807 = vld [vmem:[%s3 + $0x3c] sm:$0xf]
    %v3808 = vld [vmem:[%s3 + $0x40] sm:$0xf]
    %v3809 = vld [vmem:[%s3 + $0x44] sm:$0xf]
    %v3810 = vpack.c.bf16 %v3801, %v3801
    %v3811 = vld [vmem:[%s3 + $0x18] sm:$0xf]
    %v3812 = vld [vmem:[%s3 + $0x1c] sm:$0xf]
    %v3813 = vld [vmem:[%s3 + $0x20] sm:$0xf]
    %v3814 = vld [vmem:[%s3 + $0x24] sm:$0xf]
    %v3815 = vlaneseq
    %v3816 = vshrl.u32 %v3815, 7
    %v3817 = vsub.s32 2, %v3816
    %v3818 = vrot.slane %v21, %v3817
    %v3820 = vrot.slane %v3810, 3
    %3821 = vrot.lane.b32.xlu0 %v3820, 64
    %v3822 = vpop.permute.xlu0 %3821
    %v3827 = vunpack.c.l.b16 %v3811
    %v3828 = vunpack.c.l.b16 %v3812
    %v3829 = vunpack.c.l.b16 %v3813
    %v3830 = vunpack.c.l.b16 %v3814
    %v3831 = vpack.c.b16 %v3828, %v3827
    %v3832 = vpack.c.b16 %v3830, %v3829
    %v3836 = vsel %vm3382, %v3822, 0
    %3838 = vmatprep.subr.bf16.mxu0 0
    %3839 = vmatpush1.bf16.msra.mxu0 %v3831
    %3840 = vmatprep.subr.bf16.mxu0 0
    %3841 = vmatpush1.bf16.msra.mxu0 %v3832
    %3842 = vmatprep.subr.bf16.mxu0 0
    %3843 = vmatpush1.bf16.msra.mxu0 0
    %3844 = vmatprep.subr.bf16.mxu0 0
    %3845 = vmatpush1.bf16.msra.mxu0 0
    %3846 = vmatprep.subr.bf16.mxu0 0
    %3847 = vmatpush1.bf16.msra.mxu0 0
    %3848 = vmatprep.subr.bf16.mxu0 0
    %3849 = vmatpush1.bf16.msra.mxu0 0
    %3850 = vmatprep.subr.bf16.mxu0 0
    %3851 = vmatpush1.bf16.msra.mxu0 0
    %3852 = vmatprep.subr.bf16.mxu0 0
    %3853 = vmatpush1.bf16.msra.mxu0 0
    %3854 = vmatprep.subr.bf16.mxu0 0
    %3855 = vmatpush1.bf16.msra.mxu0 0
    %3856 = vmatprep.subr.bf16.mxu0 0
    %3857 = vmatpush1.bf16.msra.mxu0 0
    %3858 = vmatprep.subr.bf16.mxu0 0
    %3859 = vmatpush1.bf16.msra.mxu0 0
    %3860 = vmatprep.subr.bf16.mxu0 0
    %3861 = vmatpush1.bf16.msra.mxu0 0
    %3862 = vmatprep.subr.bf16.mxu0 0
    %3863 = vmatpush1.bf16.msra.mxu0 0
    %3864 = vmatprep.subr.bf16.mxu0 0
    %3865 = vmatpush1.bf16.msra.mxu0 0
    %3866 = vmatprep.subr.bf16.mxu0 0
    %3867 = vmatpush1.bf16.msra.mxu0 0
    %3868 = vmatprep.subr.bf16.mxu0 0
    %3869 = vmatpush1.bf16.msra.mxu0 0
    %3870 = vmatprep.mubr.bf16.mxu0 0
    %3871 = vmatmul.mubr.bf16.gmra.mrb[0].mxu0 %v3836
    %v3872 = vpop.f32.mrb[0].mxu0
    %v3873 = vadd.f32 %v3818, %v3872
    %v3874 = vpop.f32.mrb[0].mxu0
    %v3875 = vpop.f32.mrb[0].mxu0
    %v3876 = vpop.f32.mrb[0].mxu0
    %3877 = vdwg.mxu0
    %v3878 = vlaneseq
    %v3879 = vshrl.u32 %v3878, 7
    %v3880 = vsub.s32 3, %v3879
    %v3881 = vrot.slane %v21, %v3880
    %v3886 = vunpack.c.l.b16 %v3802
    %v3887 = vunpack.c.l.b16 %v3803
    %v3888 = vunpack.c.l.b16 %v3804
    %v3889 = vunpack.c.l.b16 %v3805
    %v3890 = vpack.c.b16 %v3887, %v3886
    %v3891 = vpack.c.b16 %v3889, %v3888
    %3894 = vmatprep.subr.bf16.mxu0 0
    %3895 = vmatpush1.bf16.msra.mxu0 %v3890
    %3896 = vmatprep.subr.bf16.mxu0 0
    %3897 = vmatpush1.bf16.msra.mxu0 %v3891
    %3898 = vmatprep.subr.bf16.mxu0 0
    %3899 = vmatpush1.bf16.msra.mxu0 0
    %3900 = vmatprep.subr.bf16.mxu0 0
    %3901 = vmatpush1.bf16.msra.mxu0 0
    %3902 = vmatprep.subr.bf16.mxu0 0
    %3903 = vmatpush1.bf16.msra.mxu0 0
    %3904 = vmatprep.subr.bf16.mxu0 0
    %3905 = vmatpush1.bf16.msra.mxu0 0
    %3906 = vmatprep.subr.bf16.mxu0 0
    %3907 = vmatpush1.bf16.msra.mxu0 0
    %3908 = vmatprep.subr.bf16.mxu0 0
    %3909 = vmatpush1.bf16.msra.mxu0 0
    %3910 = vmatprep.subr.bf16.mxu0 0
    %3911 = vmatpush1.bf16.msra.mxu0 0
    %3912 = vmatprep.subr.bf16.mxu0 0
    %3913 = vmatpush1.bf16.msra.mxu0 0
    %3914 = vmatprep.subr.bf16.mxu0 0
    %3915 = vmatpush1.bf16.msra.mxu0 0
    %3916 = vmatprep.subr.bf16.mxu0 0
    %3917 = vmatpush1.bf16.msra.mxu0 0
    %3918 = vmatprep.subr.bf16.mxu0 0
    %3919 = vmatpush1.bf16.msra.mxu0 0
    %3920 = vmatprep.subr.bf16.mxu0 0
    %3921 = vmatpush1.bf16.msra.mxu0 0
    %3922 = vmatprep.subr.bf16.mxu0 0
    %3923 = vmatpush1.bf16.msra.mxu0 0
    %3924 = vmatprep.subr.bf16.mxu0 0
    %3925 = vmatpush1.bf16.msra.mxu0 0
    %3926 = vmatprep.mubr.bf16.mxu0 0
    %3927 = vmatmul.mubr.bf16.gmra.mrb[0].mxu0 %v3836
    %v3928 = vpop.f32.mrb[0].mxu0
    %v3929 = vadd.f32 %v3881, %v3928
    %v3930 = vpop.f32.mrb[0].mxu0
    %v3931 = vpop.f32.mrb[0].mxu0
    %v3932 = vpop.f32.mrb[0].mxu0
    %3933 = vdwg.mxu0
    %3934 = vrot.lane.b32.xlu0 %v3820, 32
    %v3935 = vpop.permute.xlu0 %3934
    %v3937 = vsel %vm3382, %v3935, 0
    %3939 = vmatprep.subr.bf16.mxu0 0
    %3940 = vmatpush1.bf16.msra.mxu0 %v3890
    %3941 = vmatprep.subr.bf16.mxu0 0
    %3942 = vmatpush1.bf16.msra.mxu0 %v3891
    %3943 = vmatprep.subr.bf16.mxu0 0
    %3944 = vmatpush1.bf16.msra.mxu0 0
    %3945 = vmatprep.subr.bf16.mxu0 0
    %3946 = vmatpush1.bf16.msra.mxu0 0
    %3947 = vmatprep.subr.bf16.mxu0 0
    %3948 = vmatpush1.bf16.msra.mxu0 0
    %3949 = vmatprep.subr.bf16.mxu0 0
    %3950 = vmatpush1.bf16.msra.mxu0 0
    %3951 = vmatprep.subr.bf16.mxu0 0
    %3952 = vmatpush1.bf16.msra.mxu0 0
    %3953 = vmatprep.subr.bf16.mxu0 0
    %3954 = vmatpush1.bf16.msra.mxu0 0
    %3955 = vmatprep.subr.bf16.mxu0 0
    %3956 = vmatpush1.bf16.msra.mxu0 0
    %3957 = vmatprep.subr.bf16.mxu0 0
    %3958 = vmatpush1.bf16.msra.mxu0 0
    %3959 = vmatprep.subr.bf16.mxu0 0
    %3960 = vmatpush1.bf16.msra.mxu0 0
    %3961 = vmatprep.subr.bf16.mxu0 0
    %3962 = vmatpush1.bf16.msra.mxu0 0
    %3963 = vmatprep.subr.bf16.mxu0 0
    %3964 = vmatpush1.bf16.msra.mxu0 0
    %3965 = vmatprep.subr.bf16.mxu0 0
    %3966 = vmatpush1.bf16.msra.mxu0 0
    %3967 = vmatprep.subr.bf16.mxu0 0
    %3968 = vmatpush1.bf16.msra.mxu0 0
    %3969 = vmatprep.subr.bf16.mxu0 0
    %3970 = vmatpush1.bf16.msra.mxu0 0
    %3971 = vmatprep.mubr.bf16.mxu0 0
    %3972 = vmatmul.mubr.bf16.gmra.mrb[0].mxu0 %v3937
    %v3973 = vpop.f32.mrb[0].mxu0
    %v3974 = vadd.f32 %v3881, %v3973
    %v3975 = vpop.f32.mrb[0].mxu0
    %v3976 = vpop.f32.mrb[0].mxu0
    %v3977 = vpop.f32.mrb[0].mxu0
    %3978 = vdwg.mxu0
    %v3979 = vpack.c.bf16 %v3799, %v3799
    %v3980 = vlaneseq
    %v3981 = vshrl.u32 %v3980, 7
    %v3982 = vsub.s32 4, %v3981
    %v3983 = vrot.slane %v21, %v3982
    %v3985 = vrot.slane %v3979, 3
    %3986 = vrot.lane.b32.xlu0 %v3985, 64
    %v3987 = vpop.permute.xlu0 %3986
    %v3992 = vunpack.c.l.b16 %v3806
    %v3993 = vunpack.c.l.b16 %v3807
    %v3994 = vunpack.c.l.b16 %v3808
    %v3995 = vunpack.c.l.b16 %v3809
    %v3996 = vpack.c.b16 %v3993, %v3992
    %v3997 = vpack.c.b16 %v3995, %v3994
    %v4001 = vsel %vm3382, %v3987, 0
    %4003 = vmatprep.subr.bf16.mxu0 0
    %4004 = vmatpush1.bf16.msra.mxu0 %v3996
    %4005 = vmatprep.subr.bf16.mxu0 0
    %4006 = vmatpush1.bf16.msra.mxu0 %v3997
    %4007 = vmatprep.subr.bf16.mxu0 0
    %4008 = vmatpush1.bf16.msra.mxu0 0
    %4009 = vmatprep.subr.bf16.mxu0 0
    %4010 = vmatpush1.bf16.msra.mxu0 0
    %4011 = vmatprep.subr.bf16.mxu0 0
    %4012 = vmatpush1.bf16.msra.mxu0 0
    %4013 = vmatprep.subr.bf16.mxu0 0
    %4014 = vmatpush1.bf16.msra.mxu0 0
    %4015 = vmatprep.subr.bf16.mxu0 0
    %4016 = vmatpush1.bf16.msra.mxu0 0
    %4017 = vmatprep.subr.bf16.mxu0 0
    %4018 = vmatpush1.bf16.msra.mxu0 0
    %4019 = vmatprep.subr.bf16.mxu0 0
    %4020 = vmatpush1.bf16.msra.mxu0 0
    %4021 = vmatprep.subr.bf16.mxu0 0
    %4022 = vmatpush1.bf16.msra.mxu0 0
    %4023 = vmatprep.subr.bf16.mxu0 0
    %4024 = vmatpush1.bf16.msra.mxu0 0
    %4025 = vmatprep.subr.bf16.mxu0 0
    %4026 = vmatpush1.bf16.msra.mxu0 0
    %4027 = vmatprep.subr.bf16.mxu0 0
    %4028 = vmatpush1.bf16.msra.mxu0 0
    %4029 = vmatprep.subr.bf16.mxu0 0
    %4030 = vmatpush1.bf16.msra.mxu0 0
    %4031 = vmatprep.subr.bf16.mxu0 0
    %4032 = vmatpush1.bf16.msra.mxu0 0
    %4033 = vmatprep.subr.bf16.mxu0 0
    %4034 = vmatpush1.bf16.msra.mxu0 0
    %4035 = vmatprep.mubr.bf16.mxu0 0
    %4036 = vmatmul.mubr.bf16.gmra.mrb[0].mxu0 %v4001
    %v4037 = vpop.f32.mrb[0].mxu0
    %v4038 = vadd.f32 %v3983, %v4037
    %v4039 = vpop.f32.mrb[0].mxu0
    %v4040 = vpop.f32.mrb[0].mxu0
    %v4041 = vpop.f32.mrb[0].mxu0
    %4042 = vdwg.mxu0
    %4043 = vrot.lane.b32.xlu0 %v3985, 32
    %v4044 = vpop.permute.xlu0 %4043
    %v4046 = vsel %vm3382, %v4044, 0
    %4048 = vmatprep.subr.bf16.mxu0 0
    %4049 = vmatpush1.bf16.msra.mxu0 %v3996
    %4050 = vmatprep.subr.bf16.mxu0 0
    %4051 = vmatpush1.bf16.msra.mxu0 %v3997
    %4052 = vmatprep.subr.bf16.mxu0 0
    %4053 = vmatpush1.bf16.msra.mxu0 0
    %4054 = vmatprep.subr.bf16.mxu0 0
    %4055 = vmatpush1.bf16.msra.mxu0 0
    %4056 = vmatprep.subr.bf16.mxu0 0
    %4057 = vmatpush1.bf16.msra.mxu0 0
    %4058 = vmatprep.subr.bf16.mxu0 0
    %4059 = vmatpush1.bf16.msra.mxu0 0
    %4060 = vmatprep.subr.bf16.mxu0 0
    %4061 = vmatpush1.bf16.msra.mxu0 0
    %4062 = vmatprep.subr.bf16.mxu0 0
    %4063 = vmatpush1.bf16.msra.mxu0 0
    %4064 = vmatprep.subr.bf16.mxu0 0
    %4065 = vmatpush1.bf16.msra.mxu0 0
    %4066 = vmatprep.subr.bf16.mxu0 0
    %4067 = vmatpush1.bf16.msra.mxu0 0
    %4068 = vmatprep.subr.bf16.mxu0 0
    %4069 = vmatpush1.bf16.msra.mxu0 0
    %4070 = vmatprep.subr.bf16.mxu0 0
    %4071 = vmatpush1.bf16.msra.mxu0 0
    %4072 = vmatprep.subr.bf16.mxu0 0
    %4073 = vmatpush1.bf16.msra.mxu0 0
    %4074 = vmatprep.subr.bf16.mxu0 0
    %4075 = vmatpush1.bf16.msra.mxu0 0
    %4076 = vmatprep.subr.bf16.mxu0 0
    %4077 = vmatpush1.bf16.msra.mxu0 0
    %4078 = vmatprep.subr.bf16.mxu0 0
    %4079 = vmatpush1.bf16.msra.mxu0 0
    %4080 = vmatprep.mubr.bf16.mxu0 0
    %4081 = vmatmul.mubr.bf16.gmra.mrb[0].mxu0 %v4046
    %v4082 = vpop.f32.mrb[0].mxu0
    %v4083 = vadd.f32 %v3983, %v4082
    %v4084 = vpop.f32.mrb[0].mxu0
    %v4085 = vpop.f32.mrb[0].mxu0
    %v4086 = vpop.f32.mrb[0].mxu0
    %4087 = vdwg.mxu0
    %v4088 = vmul.f32 %v3873, %v3929
    %vm4089 = vcmask 254976
    %v4090 = vsel %vm4089, %v4088, 0.0
    %4091 = vadd.xlane.f32.xlu0 %v4090
    %v4092 = vpop.xlane.xlu0 %4091
    %v4093 = vmul.f32 %v4092, 0.17677669
    %v4094 = vmul.f32 %v3873, %v3974
    %v4095 = vsel %vm4089, %v4094, 0.0
    %4096 = vadd.xlane.f32.xlu0 %v4095
    %v4097 = vpop.xlane.xlu0 %4096
    %v4098 = vmul.f32 %v4097, 0.17677669
    %v4099 = vmax.f32 %v4093, %v4098
    %v4100 = vsub.f32 %v4093, %v4099
    %v4101 = vmul.f32 %v4100, 1.442695
    %v4102 = vpow.pop %v4101
    %v4103 = vsub.f32 %v4098, %v4099
    %v4104 = vmul.f32 %v4103, 1.442695
    %v4105 = vpow.pop %v4104
    %v4106 = vadd.f32 %v4102, %v4105
    %v4107 = vrcp.pop %v4106
    %v4108 = vmul.f32 1.0, %v4107
    %v4109 = vmul.f32 %v4102, %v4108
    %v4110 = vmul.f32 %v4109, %v4038
    %v4111 = vmul.f32 %v4105, %v4108
    %v4112 = vmul.f32 %v4111, %v4083
    %v4113 = vadd.f32 %v4110, %v4112
    %v4114 = vpack.c.bf16 %v4113, %v4113
    %v4115 = vld [vmem:[%s3 + $0x48] sm:$0xf]
    %v4116 = vld [vmem:[%s3 + $0x4c] sm:$0xf]
    %v4117 = vld [vmem:[%s3 + $0x50] sm:$0xf]
    %v4118 = vld [vmem:[%s3 + $0x54] sm:$0xf]
    %v4119 = vlaneseq
    %v4120 = vshrl.u32 %v4119, 7
    %v4121 = vsub.s32 5, %v4120
    %v4122 = vrot.slane %v21, %v4121
    %v4127 = vunpack.c.l.b16 %v4115
    %v4128 = vunpack.c.l.b16 %v4116
    %v4129 = vunpack.c.l.b16 %v4117
    %v4130 = vunpack.c.l.b16 %v4118
    %v4131 = vpack.c.b16 %v4128, %v4127
    %v4132 = vpack.c.b16 %v4130, %v4129
    %v4136 = vsel %vm3382, %v4114, 0
    %4138 = vmatprep.subr.bf16.mxu0 0
    %4139 = vmatpush1.bf16.msra.mxu0 %v4131
    %4140 = vmatprep.subr.bf16.mxu0 0
    %4141 = vmatpush1.bf16.msra.mxu0 %v4132
    %4142 = vmatprep.subr.bf16.mxu0 0
    %4143 = vmatpush1.bf16.msra.mxu0 0
    %4144 = vmatprep.subr.bf16.mxu0 0
    %4145 = vmatpush1.bf16.msra.mxu0 0
    %4146 = vmatprep.subr.bf16.mxu0 0
    %4147 = vmatpush1.bf16.msra.mxu0 0
    %4148 = vmatprep.subr.bf16.mxu0 0
    %4149 = vmatpush1.bf16.msra.mxu0 0
    %4150 = vmatprep.subr.bf16.mxu0 0
    %4151 = vmatpush1.bf16.msra.mxu0 0
    %4152 = vmatprep.subr.bf16.mxu0 0
    %4153 = vmatpush1.bf16.msra.mxu0 0
    %4154 = vmatprep.subr.bf16.mxu0 0
    %4155 = vmatpush1.bf16.msra.mxu0 0
    %4156 = vmatprep.subr.bf16.mxu0 0
    %4157 = vmatpush1.bf16.msra.mxu0 0
    %4158 = vmatprep.subr.bf16.mxu0 0
    %4159 = vmatpush1.bf16.msra.mxu0 0
    %4160 = vmatprep.subr.bf16.mxu0 0
    %4161 = vmatpush1.bf16.msra.mxu0 0
    %4162 = vmatprep.subr.bf16.mxu0 0
    %4163 = vmatpush1.bf16.msra.mxu0 0
    %4164 = vmatprep.subr.bf16.mxu0 0
    %4165 = vmatpush1.bf16.msra.mxu0 0
    %4166 = vmatprep.subr.bf16.mxu0 0
    %4167 = vmatpush1.bf16.msra.mxu0 0
    %4168 = vmatprep.subr.bf16.mxu0 0
    %4169 = vmatpush1.bf16.msra.mxu0 0
    %4170 = vmatprep.mubr.bf16.mxu0 0
    %4171 = vmatmul.mubr.bf16.gmra.mrb[0].mxu0 %v4136
    %v4172 = vpop.f32.mrb[0].mxu0
    %v4173 = vadd.f32 %v4122, %v4172
    %v4174 = vpop.f32.mrb[0].mxu0
    %v4175 = vpop.f32.mrb[0].mxu0
    %v4176 = vpop.f32.mrb[0].mxu0
    %4177 = vdwg.mxu0
    %v4178 = vpack.c.bf16 %v4173, %v4173
    %v4179 = vld [vmem:[%s3 + $0x58] sm:$0xf]
    %v4180 = vld [vmem:[%s3 + $0x5c] sm:$0xf]
    %v4181 = vld [vmem:[%s3 + $0x60] sm:$0xf]
    %v4182 = vld [vmem:[%s3 + $0x64] sm:$0xf]
    %v4183 = vlaneseq
    %v4184 = vshrl.u32 %v4183, 7
    %v4185 = vsub.s32 6, %v4184
    %v4186 = vrot.slane %v21, %v4185
    %v4191 = vunpack.c.l.b16 %v4179
    %v4192 = vunpack.c.l.b16 %v4180
    %v4193 = vunpack.c.l.b16 %v4181
    %v4194 = vunpack.c.l.b16 %v4182
    %v4195 = vpack.c.b16 %v4192, %v4191
    %v4196 = vpack.c.b16 %v4194, %v4193
    %v4200 = vsel %vm3382, %v4178, 0
    %4202 = vmatprep.subr.bf16.mxu0 0
    %4203 = vmatpush1.bf16.msra.mxu0 %v4195
    %4204 = vmatprep.subr.bf16.mxu0 0
    %4205 = vmatpush1.bf16.msra.mxu0 %v4196
    %4206 = vmatprep.subr.bf16.mxu0 0
    %4207 = vmatpush1.bf16.msra.mxu0 0
    %4208 = vmatprep.subr.bf16.mxu0 0
    %4209 = vmatpush1.bf16.msra.mxu0 0
    %4210 = vmatprep.subr.bf16.mxu0 0
    %4211 = vmatpush1.bf16.msra.mxu0 0
    %4212 = vmatprep.subr.bf16.mxu0 0
    %4213 = vmatpush1.bf16.msra.mxu0 0
    %4214 = vmatprep.subr.bf16.mxu0 0
    %4215 = vmatpush1.bf16.msra.mxu0 0
    %4216 = vmatprep.subr.bf16.mxu0 0
    %4217 = vmatpush1.bf16.msra.mxu0 0
    %4218 = vmatprep.subr.bf16.mxu0 0
    %4219 = vmatpush1.bf16.msra.mxu0 0
    %4220 = vmatprep.subr.bf16.mxu0 0
    %4221 = vmatpush1.bf16.msra.mxu0 0
    %4222 = vmatprep.subr.bf16.mxu0 0
    %4223 = vmatpush1.bf16.msra.mxu0 0
    %4224 = vmatprep.subr.bf16.mxu0 0
    %4225 = vmatpush1.bf16.msra.mxu0 0
    %4226 = vmatprep.subr.bf16.mxu0 0
    %4227 = vmatpush1.bf16.msra.mxu0 0
    %4228 = vmatprep.subr.bf16.mxu0 0
    %4229 = vmatpush1.bf16.msra.mxu0 0
    %4230 = vmatprep.subr.bf16.mxu0 0
    %4231 = vmatpush1.bf16.msra.mxu0 0
    %4232 = vmatprep.subr.bf16.mxu0 0
    %4233 = vmatpush1.bf16.msra.mxu0 0
    %4234 = vmatprep.mubr.bf16.mxu0 0
    %4235 = vmatmul.mubr.bf16.gmra.mrb[0].mxu0 %v4200
    %v4236 = vpop.f32.mrb[0].mxu0
    %v4237 = vadd.f32 %v4186, %v4236
    %v4238 = vpop.f32.mrb[0].mxu0
    %v4239 = vpop.f32.mrb[0].mxu0
    %v4240 = vpop.f32.mrb[0].mxu0
    %4241 = vdwg.mxu0
    %vm4242 = vcmp.gt.f32.partialorder %v4237, 0.0
    %v4243 = vmul.f32 %v4237, 0.01
    %v4244 = vsel %vm4242, %v4237, %v4243
    %v4245 = vpack.c.bf16 %v4244, %v4244
    %v4246 = vld [vmem:[%s3 + $0x68] sm:$0xf]
    %v4247 = vld [vmem:[%s3 + $0x6c] sm:$0xf]
    %v4248 = vlaneseq
    %v4249 = vshrl.u32 %v4248, 7
    %v4250 = vsub.s32 7, %v4249
    %v4251 = vrot.slane %v21, %v4250
    %v4254 = vunpack.c.l.b16 %v4246
    %v4255 = vunpack.c.l.b16 %v4247
    %v4256 = vpack.c.b16 %v4255, %v4254
    %v4259 = vsel %vm2643, %v4245, 0
    %4261 = vmatprep.subr.bf16.mxu0 0
    %4262 = vmatpush1.bf16.msra.mxu0 %v4256
    %4263 = vmatprep.subr.bf16.mxu0 0
    %4264 = vmatpush1.bf16.msra.mxu0 0
    %4265 = vmatprep.subr.bf16.mxu0 0
    %4266 = vmatpush1.bf16.msra.mxu0 0
    %4267 = vmatprep.subr.bf16.mxu0 0
    %4268 = vmatpush1.bf16.msra.mxu0 0
    %4269 = vmatprep.subr.bf16.mxu0 0
    %4270 = vmatpush1.bf16.msra.mxu0 0
    %4271 = vmatprep.subr.bf16.mxu0 0
    %4272 = vmatpush1.bf16.msra.mxu0 0
    %4273 = vmatprep.subr.bf16.mxu0 0
    %4274 = vmatpush1.bf16.msra.mxu0 0
    %4275 = vmatprep.subr.bf16.mxu0 0
    %4276 = vmatpush1.bf16.msra.mxu0 0
    %4277 = vmatprep.subr.bf16.mxu0 0
    %4278 = vmatpush1.bf16.msra.mxu0 0
    %4279 = vmatprep.subr.bf16.mxu0 0
    %4280 = vmatpush1.bf16.msra.mxu0 0
    %4281 = vmatprep.subr.bf16.mxu0 0
    %4282 = vmatpush1.bf16.msra.mxu0 0
    %4283 = vmatprep.subr.bf16.mxu0 0
    %4284 = vmatpush1.bf16.msra.mxu0 0
    %4285 = vmatprep.subr.bf16.mxu0 0
    %4286 = vmatpush1.bf16.msra.mxu0 0
    %4287 = vmatprep.subr.bf16.mxu0 0
    %4288 = vmatpush1.bf16.msra.mxu0 0
    %4289 = vmatprep.subr.bf16.mxu0 0
    %4290 = vmatpush1.bf16.msra.mxu0 0
    %4291 = vmatprep.subr.bf16.mxu0 0
    %4292 = vmatpush1.bf16.msra.mxu0 0
    %4293 = vmatprep.mubr.bf16.mxu0 0
    %4294 = vmatmul.mubr.bf16.gmra.mrb[0].mxu0 %v4259
    %v4295 = vpop.f32.mrb[0].mxu0
    %v4296 = vadd.f32 %v4251, %v4295
    %v4297 = vpop.f32.mrb[0].mxu0
    %v4298 = vpop.f32.mrb[0].mxu0
    %v4299 = vpop.f32.mrb[0].mxu0
    %4300 = vdwg.mxu0
    %vm4301 = vcmp.gt.f32.partialorder %v4296, 0.0
    %v4302 = vmul.f32 %v4296, 0.01
    %v4303 = vsel %vm4301, %v4296, %v4302
    %v4304 = vpack.c.bf16 %v4303, %v4303
    %v4305 = vld [vmem:[%s3 + $0x70] sm:$0xf]
    %v4306 = vld [vmem:[%s3 + $0x74] sm:$0xf]
    %v4307 = vlaneseq
    %v4308 = vshrl.u32 %v4307, 7
    %v4309 = vsub.s32 0, %v4308
    %v4310 = vrot.slane %v22, %v4309
    %v4313 = vunpack.c.l.b16 %v4305
    %v4314 = vunpack.c.l.b16 %v4306
    %v4315 = vpack.c.b16 %v4314, %v4313
    %v4318 = vsel %vm2643, %v4304, 0
    %4320 = vmatprep.subr.bf16.mxu0 0
    %4321 = vmatpush1.bf16.msra.mxu0 %v4315
    %4322 = vmatprep.subr.bf16.mxu0 0
    %4323 = vmatpush1.bf16.msra.mxu0 0
    %4324 = vmatprep.subr.bf16.mxu0 0
    %4325 = vmatpush1.bf16.msra.mxu0 0
    %4326 = vmatprep.subr.bf16.mxu0 0
    %4327 = vmatpush1.bf16.msra.mxu0 0
    %4328 = vmatprep.subr.bf16.mxu0 0
    %4329 = vmatpush1.bf16.msra.mxu0 0
    %4330 = vmatprep.subr.bf16.mxu0 0
    %4331 = vmatpush1.bf16.msra.mxu0 0
    %4332 = vmatprep.subr.bf16.mxu0 0
    %4333 = vmatpush1.bf16.msra.mxu0 0
    %4334 = vmatprep.subr.bf16.mxu0 0
    %4335 = vmatpush1.bf16.msra.mxu0 0
    %4336 = vmatprep.subr.bf16.mxu0 0
    %4337 = vmatpush1.bf16.msra.mxu0 0
    %4338 = vmatprep.subr.bf16.mxu0 0
    %4339 = vmatpush1.bf16.msra.mxu0 0
    %4340 = vmatprep.subr.bf16.mxu0 0
    %4341 = vmatpush1.bf16.msra.mxu0 0
    %4342 = vmatprep.subr.bf16.mxu0 0
    %4343 = vmatpush1.bf16.msra.mxu0 0
    %4344 = vmatprep.subr.bf16.mxu0 0
    %4345 = vmatpush1.bf16.msra.mxu0 0
    %4346 = vmatprep.subr.bf16.mxu0 0
    %4347 = vmatpush1.bf16.msra.mxu0 0
    %4348 = vmatprep.subr.bf16.mxu0 0
    %4349 = vmatpush1.bf16.msra.mxu0 0
    %4350 = vmatprep.subr.bf16.mxu0 0
    %4351 = vmatpush1.bf16.msra.mxu0 0
    %4352 = vmatprep.mubr.bf16.mxu0 0
    %4353 = vmatmul.mubr.bf16.gmra.mrb[0].mxu0 %v4318
    %v4354 = vpop.f32.mrb[0].mxu0
    %v4355 = vadd.f32 %v4310, %v4354
    %v4356 = vpop.f32.mrb[0].mxu0
    %v4357 = vpop.f32.mrb[0].mxu0
    %v4358 = vpop.f32.mrb[0].mxu0
    %4359 = vdwg.mxu0
    %vm4360 = vcmask 17408
    %v4361 = vsel %vm4360, %v4355, -inf
    %v4362 = vrot.slane %v4361, 4
    %v4363 = vmax.f32 %v4361, %v4362
    %v4364 = vrot.slane %v4363, 2
    %v4365 = vmax.f32 %v4363, %v4364
    %v4366 = vrot.slane %v4365, 1
    %v4367 = vmax.f32 %v4365, %v4366
    %v4368 = vsub.f32 %v4355, %v4367
    %v4369 = vmul.f32 %v4368, 1.442695
    %v4370 = vpow.pop %v4369
    %v4371 = vsel %vm4360, %v4370, 0.0
    %v4372 = vrot.slane %v4371, 4
    %v4373 = vadd.f32 %v4371, %v4372
    %v4374 = vrot.slane %v4373, 2
    %v4375 = vadd.f32 %v4373, %v4374
    %v4376 = vrot.slane %v4375, 1
    %v4377 = vadd.f32 %v4375, %v4376
    %v4378 = vrcp.pop %v4377
    %v4379 = vmul.f32 %v4370, %v4378
    %4380 = vst.msk [vmem:[#allocation2] sm:$0x3] %vm4360, %v4379
    // Predicated region
    $region18: #{model_forward.1} parent=1 // pred_check
      _
    $region19: #{model_forward.1} parent=1 // pred_check_branch
      %4382 = sbr.rel (0) target = $region21
    $region20: #{model_forward.1} parent=1 // pred_region
      %s4384 = ssub.s32 32, 32
      %4385 = vsyncadd [#allocation3], %s4384
      %s4387 = sshll.u32 [#allocation2], 4
      %s4388 = int_to_ptr.vmem [resolvable:$true] %s4387
      %4390 = dma.vmem_to_hbm [thread:$0]  %s4388, 32, %s4, [#allocation3]
    $region21: #{model_forward.1} parent=1 // pred_fallthru
      _
    // Predicated region
    $region22: #{model_forward.1} parent=1 // pred_check
      _
    $region23: #{model_forward.1} parent=1 // pred_check_branch
      %4392 = sbr.rel (0) target = $region25
    $region24: #{model_forward.1} parent=1 // pred_region
      %4393 = dma.done [#allocation3], 32
    $region25: #{model_forward.1} parent=1 // pred_fallthru
      _
    %4394 = vsyncpa [#allocation3], 1

</llo_original>
